<compile_context>
chip_gen: v6e
topology: v6e:2x2x1
jax: 0.10.0
libtpu: 0.0.40
codegen_flags: <defaults>
</compile_context>

<pallas_src>
import functools

import jax
import jax.numpy as jnp
from jax.experimental import pallas as pl
from jax.experimental.pallas import tpu as pltpu


def _round_up(x, m):
    return (x + m - 1) // m * m


def conv_bn_relu(x_nchw, weight_oihw, gamma, beta, *, stride=1, padding=0, eps=1e-5):
    """x_nchw: [N, C, H, W]; weight_oihw: [OC, C, KH, KW]; gamma/beta: [OC]."""
    N, C, H, W = x_nchw.shape
    OC, _, KH, KW = weight_oihw.shape
    OH = (H + 2 * padding - KH) // stride + 1
    OW = (W + 2 * padding - KW) // stride + 1
    M = OH * OW                      # conv-output rows per image
    OC_pad = _round_up(OC, 128)      # lane-dense output channels
    Hp, Wp = H + 2 * padding, W + 2 * padding

    # ---- glue: NCHW -> NHWC bf16 + spatial zero-pad (single ~1x-input XLA pass) -------------
    x_nhwc = jnp.transpose(x_nchw, (0, 2, 3, 1)).astype(jnp.bfloat16)
    x_pad = jnp.pad(x_nhwc, ((0, 0), (padding, padding), (padding, padding), (0, 0)))

    # weight [OC, C, KH, KW] -> [KH*KW, C, OC_pad] bf16 so w_ref[tap] is a (C, OC_pad) slab.
    w_taps = jnp.transpose(weight_oihw, (2, 3, 1, 0)).reshape(KH * KW, C, OC)
    w_taps = jnp.pad(w_taps, ((0, 0), (0, 0), (0, OC_pad - OC))).astype(jnp.bfloat16)

    cparams = pltpu.CompilerParams(
        dimension_semantics=("parallel",),
        # v7x note: physical VMEM is 64 MiB/TC -> keep the scoped limit well under it.
        vmem_limit_bytes=32 * 1024 * 1024,
    )

    # ---- pass 1: fused im2col (VMEM slices) + MXU matmul (bf16 in / f32 acc) + BN stats ------
    def conv_stats_kernel(x_ref, w_ref, conv_ref, stats_ref):
        xv = x_ref[...]                                           # (Hp, Wp, C) bf16
        acc = jnp.zeros((M, OC_pad), jnp.float32)
        for kh in range(KH):                                      # KH*KW static taps
            for kw in range(KW):
                slab = jax.lax.slice(
                    xv,
                    (kh, kw, 0),
                    (kh + (OH - 1) * stride + 1, kw + (OW - 1) * stride + 1, C),
                    (stride, stride, 1))                          # (OH, OW, C)
                a = slab.reshape(M, C)                            # merge leading dims only
                acc = acc + jnp.dot(a, w_ref[kh * KW + kw],
                                    preferred_element_type=jnp.float32)
        # bf16 intermediate; statistics come from the f32 accumulator so they stay exact.
        conv_ref[...] = acc.astype(conv_ref.dtype)
        mean_t = jnp.sum(acc, axis=0, keepdims=True) * (1.0 / M)          # (1, OC_pad)
        m2_t = jnp.sum((acc - mean_t) ** 2, axis=0, keepdims=True)        # centered -> stable
        stats_ref[0:1, :] = mean_t
        stats_ref[1:2, :] = m2_t
        # rows 2..7 of the stats tile are never read (kept only for (8,128) alignment).

    conv_bf16, stats = pl.pallas_call(
        conv_stats_kernel,
        out_shape=(
            jax.ShapeDtypeStruct((N, M, OC_pad), jnp.bfloat16),
            jax.ShapeDtypeStruct((N, 8, OC_pad), jnp.float32),
        ),
        grid_spec=pltpu.PrefetchScalarGridSpec(
            num_scalar_prefetch=0,
            grid=(N,),
            in_specs=[
                pl.BlockSpec((None, Hp, Wp, C), lambda n: (n, 0, 0, 0)),
                pl.BlockSpec((KH * KW, C, OC_pad), lambda n: (0, 0, 0)),   # grid-invariant
            ],
            out_specs=[
                pl.BlockSpec((None, M, OC_pad), lambda n: (n, 0, 0)),
                pl.BlockSpec((None, 8, OC_pad), lambda n: (n, 0, 0)),
            ],
        ),
        compiler_params=cparams,
    )(x_pad, w_taps)

    # ---- tiny stats combine (Chan's parallel variance) + fold BN into scale/shift ------------
    mean_t = stats[:, 0, :]                                       # (N, OC_pad)
    m2_t = stats[:, 1, :]                                         # (N, OC_pad)
    mean = jnp.mean(mean_t, axis=0)                               # equal per-image counts
    m2 = jnp.sum(m2_t, axis=0) + float(M) * jnp.sum((mean_t - mean) ** 2, axis=0)
    var = m2 / float(N * M)                                       # biased var (BN train-mode)
    inv = jax.lax.rsqrt(var + eps)
    gamma_p = jnp.pad(gamma.astype(jnp.float32), (0, OC_pad - OC))
    beta_p = jnp.pad(beta.astype(jnp.float32), (0, OC_pad - OC))
    scale = (gamma_p * inv).reshape(1, OC_pad)
    shift = (beta_p - mean * gamma_p * inv).reshape(1, OC_pad)

    # ---- pass 2: fused folded-BN affine + ReLU, written in place over the conv buffer --------
    def bn_relu_kernel(conv_ref, scale_ref, shift_ref, o_ref):
        y = conv_ref[...].astype(jnp.float32) * scale_ref[...] + shift_ref[...]
        o_ref[...] = jnp.maximum(y, 0.0).astype(o_ref.dtype)

    out = pl.pallas_call(
        bn_relu_kernel,
        out_shape=jax.ShapeDtypeStruct((N, M, OC_pad), jnp.bfloat16),
        grid_spec=pltpu.PrefetchScalarGridSpec(
            num_scalar_prefetch=0,
            grid=(N,),
            in_specs=[
                pl.BlockSpec((None, M, OC_pad), lambda n: (n, 0, 0)),
                pl.BlockSpec((1, OC_pad), lambda n: (0, 0)),       # grid-invariant
                pl.BlockSpec((1, OC_pad), lambda n: (0, 0)),       # grid-invariant
            ],
            out_specs=pl.BlockSpec((None, M, OC_pad), lambda n: (n, 0, 0)),
        ),
        compiler_params=cparams,
        input_output_aliases={0: 0},   # reuse the conv intermediate's HBM buffer in place
    )(conv_bf16, scale, shift)

    # ---- glue: de-pad channels, back to NCHW f32 (module's output layout/dtype) --------------
    # TODO(synk): return NHWC bf16 directly when the consumer allows, to skip this round-trip.
    out = out[:, :, :OC].astype(jnp.float32).reshape(N, OH, OW, OC)
    return jnp.transpose(out, (0, 3, 1, 2))


def _reference(x, w, gamma, beta, *, stride, padding, eps=1e-5):
    """Pure-JAX reference: Conv2d(bias=False) + BatchNorm2d(train forward) + ReLU."""
    conv = jax.lax.conv_general_dilated(
        x, w, window_strides=(stride, stride),
        padding=[(padding, padding), (padding, padding)],
        dimension_numbers=("NCHW", "OIHW", "NCHW"))
    mean = jnp.mean(conv, axis=(0, 2, 3), keepdims=True)
    var = jnp.mean((conv - mean) ** 2, axis=(0, 2, 3), keepdims=True)  # biased
    y = (conv - mean) * jax.lax.rsqrt(var + eps)
    y = y * gamma.reshape(1, -1, 1, 1) + beta.reshape(1, -1, 1, 1)
    return jnp.maximum(y, 0.0)


if __name__ == "__main__":
    # Small shapes consistent with the module: in_planes=4, out_planes=8,
    # kernel_size=3, stride=1, padding=1, input [2, 4, 16, 16].
    N, C, H, W = 2, 4, 16, 16
    OC, K = 8, 3

    key = jax.random.PRNGKey(0)
    k_x, k_w, k_g, k_b = jax.random.split(key, 4)

    x = jax.random.normal(k_x, (N, C, H, W), dtype=jnp.float32)
    weight = jax.random.normal(k_w, (OC, C, K, K), dtype=jnp.float32) * 0.1
    gamma = 1.0 + 0.5 * jax.random.normal(k_g, (OC,), dtype=jnp.float32)
    beta = 0.1 * jax.random.normal(k_b, (OC,), dtype=jnp.float32)

    run = jax.jit(functools.partial(conv_bn_relu, stride=1, padding=1))
    y = run(x, weight, gamma, beta)
    jax.block_until_ready(y)

    assert y.shape == (N, OC, H, W), y.shape

    # Loose tolerance: MXU inputs and the conv intermediate are bf16 (f32 accumulation),
    # reference is full f32.
    y_ref = _reference(x, weight, gamma, beta, stride=1, padding=1)
    max_err = float(jnp.max(jnp.abs(y - y_ref)))
    assert max_err < 1e-1, f"max abs err {max_err}"

    print("KERNEL_OK")
</pallas_src>

<mosaic_0001>
module attributes {stable_mosaic.version = 11 : i64} {
  func.func @conv_stats_kernel(%arg0: i32, %arg1: memref<1x18x18x4xbf16, #tpu.memory_space<vmem>>, %arg2: memref<9x4x128xbf16, #tpu.memory_space<vmem>>, %arg3: memref<1x256x128xbf16, #tpu.memory_space<vmem>>, %arg4: memref<1x8x128xf32, #tpu.memory_space<vmem>>) attributes {dimension_semantics = [#tpu.dimension_semantics<parallel>], iteration_bounds = array<i64: 2>, scalar_prefetch = 0 : i64, scratch_operands = 0 : i64, tpu.core_type = #tpu.core_type<tc>, window_params = [{transform_indices = @transform_0, window_bounds = array<i64: 1, 18, 18, 4>}, {pipeline_mode = #tpu.pipeline_mode<synchronous>, transform_indices = @transform_1, window_bounds = array<i64: 9, 4, 128>}, {transform_indices = @transform_2, window_bounds = array<i64: 1, 256, 128>}, {transform_indices = @transform_3, window_bounds = array<i64: 1, 8, 128>}]} {
    %c0 = arith.constant 0 : index
    %c0_0 = arith.constant 0 : index
    %c0_1 = arith.constant 0 : index
    %c0_2 = arith.constant 0 : index
    %0 = vector.load %arg1[%c0, %c0_0, %c0_1, %c0_2] : memref<1x18x18x4xbf16, #tpu.memory_space<vmem>>, vector<1x18x18x4xbf16>
    %1 = vector.shape_cast %0 : vector<1x18x18x4xbf16> to vector<18x18x4xbf16>
    %cst = arith.constant 0.000000e+00 : f32
    %2 = vector.broadcast %cst : f32 to vector<256x128xf32>
    %3 = vector.extract_strided_slice %1 {offsets = [0, 0, 0], sizes = [16, 16, 4], strides = [1, 1, 1]} : vector<18x18x4xbf16> to vector<16x16x4xbf16>
    %4 = vector.shape_cast %3 : vector<16x16x4xbf16> to vector<256x4xbf16>
    %c0_3 = arith.constant 0 : index
    %c0_4 = arith.constant 0 : index
    %c0_5 = arith.constant 0 : index
    %5 = vector.load %arg2[%c0_3, %c0_4, %c0_5] : memref<9x4x128xbf16, #tpu.memory_space<vmem>>, vector<1x4x128xbf16>
    %6 = vector.shape_cast %5 : vector<1x4x128xbf16> to vector<4x128xbf16>
    %cst_6 = arith.constant dense<0.000000e+00> : vector<256x128xf32>
    %7 = tpu.matmul %4, %6, %cst_6 {dimension_numbers = #tpu.dot_dimension_numbers<[1], [0], [0], [1], [0, 0, 1, 1], [], []>} : vector<256x4xbf16>, vector<4x128xbf16>, vector<256x128xf32> -> vector<256x128xf32>
    %8 = arith.addf %2, %7 : vector<256x128xf32>
    %9 = vector.extract_strided_slice %1 {offsets = [0, 1, 0], sizes = [16, 16, 4], strides = [1, 1, 1]} : vector<18x18x4xbf16> to vector<16x16x4xbf16>
    %10 = vector.shape_cast %9 : vector<16x16x4xbf16> to vector<256x4xbf16>
    %c1 = arith.constant 1 : index
    %c0_7 = arith.constant 0 : index
    %c0_8 = arith.constant 0 : index
    %11 = vector.load %arg2[%c1, %c0_7, %c0_8] : memref<9x4x128xbf16, #tpu.memory_space<vmem>>, vector<1x4x128xbf16>
    %12 = vector.shape_cast %11 : vector<1x4x128xbf16> to vector<4x128xbf16>
    %cst_9 = arith.constant dense<0.000000e+00> : vector<256x128xf32>
    %13 = tpu.matmul %10, %12, %cst_9 {dimension_numbers = #tpu.dot_dimension_numbers<[1], [0], [0], [1], [0, 0, 1, 1], [], []>} : vector<256x4xbf16>, vector<4x128xbf16>, vector<256x128xf32> -> vector<256x128xf32>
    %14 = arith.addf %8, %13 : vector<256x128xf32>
    %15 = vector.extract_strided_slice %1 {offsets = [0, 2, 0], sizes = [16, 16, 4], strides = [1, 1, 1]} : vector<18x18x4xbf16> to vector<16x16x4xbf16>
    %16 = vector.shape_cast %15 : vector<16x16x4xbf16> to vector<256x4xbf16>
    %c2 = arith.constant 2 : index
    %c0_10 = arith.constant 0 : index
    %c0_11 = arith.constant 0 : index
    %17 = vector.load %arg2[%c2, %c0_10, %c0_11] : memref<9x4x128xbf16, #tpu.memory_space<vmem>>, vector<1x4x128xbf16>
    %18 = vector.shape_cast %17 : vector<1x4x128xbf16> to vector<4x128xbf16>
    %cst_12 = arith.constant dense<0.000000e+00> : vector<256x128xf32>
    %19 = tpu.matmul %16, %18, %cst_12 {dimension_numbers = #tpu.dot_dimension_numbers<[1], [0], [0], [1], [0, 0, 1, 1], [], []>} : vector<256x4xbf16>, vector<4x128xbf16>, vector<256x128xf32> -> vector<256x128xf32>
    %20 = arith.addf %14, %19 : vector<256x128xf32>
    %21 = vector.extract_strided_slice %1 {offsets = [1, 0, 0], sizes = [16, 16, 4], strides = [1, 1, 1]} : vector<18x18x4xbf16> to vector<16x16x4xbf16>
    %22 = vector.shape_cast %21 : vector<16x16x4xbf16> to vector<256x4xbf16>
    %c3 = arith.constant 3 : index
    %c0_13 = arith.constant 0 : index
    %c0_14 = arith.constant 0 : index
    %23 = vector.load %arg2[%c3, %c0_13, %c0_14] : memref<9x4x128xbf16, #tpu.memory_space<vmem>>, vector<1x4x128xbf16>
    %24 = vector.shape_cast %23 : vector<1x4x128xbf16> to vector<4x128xbf16>
    %cst_15 = arith.constant dense<0.000000e+00> : vector<256x128xf32>
    %25 = tpu.matmul %22, %24, %cst_15 {dimension_numbers = #tpu.dot_dimension_numbers<[1], [0], [0], [1], [0, 0, 1, 1], [], []>} : vector<256x4xbf16>, vector<4x128xbf16>, vector<256x128xf32> -> vector<256x128xf32>
    %26 = arith.addf %20, %25 : vector<256x128xf32>
    %27 = vector.extract_strided_slice %1 {offsets = [1, 1, 0], sizes = [16, 16, 4], strides = [1, 1, 1]} : vector<18x18x4xbf16> to vector<16x16x4xbf16>
    %28 = vector.shape_cast %27 : vector<16x16x4xbf16> to vector<256x4xbf16>
    %c4 = arith.constant 4 : index
    %c0_16 = arith.constant 0 : index
    %c0_17 = arith.constant 0 : index
    %29 = vector.load %arg2[%c4, %c0_16, %c0_17] : memref<9x4x128xbf16, #tpu.memory_space<vmem>>, vector<1x4x128xbf16>
    %30 = vector.shape_cast %29 : vector<1x4x128xbf16> to vector<4x128xbf16>
    %cst_18 = arith.constant dense<0.000000e+00> : vector<256x128xf32>
    %31 = tpu.matmul %28, %30, %cst_18 {dimension_numbers = #tpu.dot_dimension_numbers<[1], [0], [0], [1], [0, 0, 1, 1], [], []>} : vector<256x4xbf16>, vector<4x128xbf16>, vector<256x128xf32> -> vector<256x128xf32>
    %32 = arith.addf %26, %31 : vector<256x128xf32>
    %33 = vector.extract_strided_slice %1 {offsets = [1, 2, 0], sizes = [16, 16, 4], strides = [1, 1, 1]} : vector<18x18x4xbf16> to vector<16x16x4xbf16>
    %34 = vector.shape_cast %33 : vector<16x16x4xbf16> to vector<256x4xbf16>
    %c5 = arith.constant 5 : index
    %c0_19 = arith.constant 0 : index
    %c0_20 = arith.constant 0 : index
    %35 = vector.load %arg2[%c5, %c0_19, %c0_20] : memref<9x4x128xbf16, #tpu.memory_space<vmem>>, vector<1x4x128xbf16>
    %36 = vector.shape_cast %35 : vector<1x4x128xbf16> to vector<4x128xbf16>
    %cst_21 = arith.constant dense<0.000000e+00> : vector<256x128xf32>
    %37 = tpu.matmul %34, %36, %cst_21 {dimension_numbers = #tpu.dot_dimension_numbers<[1], [0], [0], [1], [0, 0, 1, 1], [], []>} : vector<256x4xbf16>, vector<4x128xbf16>, vector<256x128xf32> -> vector<256x128xf32>
    %38 = arith.addf %32, %37 : vector<256x128xf32>
    %39 = vector.extract_strided_slice %1 {offsets = [2, 0, 0], sizes = [16, 16, 4], strides = [1, 1, 1]} : vector<18x18x4xbf16> to vector<16x16x4xbf16>
    %40 = vector.shape_cast %39 : vector<16x16x4xbf16> to vector<256x4xbf16>
    %c6 = arith.constant 6 : index
    %c0_22 = arith.constant 0 : index
    %c0_23 = arith.constant 0 : index
    %41 = vector.load %arg2[%c6, %c0_22, %c0_23] : memref<9x4x128xbf16, #tpu.memory_space<vmem>>, vector<1x4x128xbf16>
    %42 = vector.shape_cast %41 : vector<1x4x128xbf16> to vector<4x128xbf16>
    %cst_24 = arith.constant dense<0.000000e+00> : vector<256x128xf32>
    %43 = tpu.matmul %40, %42, %cst_24 {dimension_numbers = #tpu.dot_dimension_numbers<[1], [0], [0], [1], [0, 0, 1, 1], [], []>} : vector<256x4xbf16>, vector<4x128xbf16>, vector<256x128xf32> -> vector<256x128xf32>
    %44 = arith.addf %38, %43 : vector<256x128xf32>
    %45 = vector.extract_strided_slice %1 {offsets = [2, 1, 0], sizes = [16, 16, 4], strides = [1, 1, 1]} : vector<18x18x4xbf16> to vector<16x16x4xbf16>
    %46 = vector.shape_cast %45 : vector<16x16x4xbf16> to vector<256x4xbf16>
    %c7 = arith.constant 7 : index
    %c0_25 = arith.constant 0 : index
    %c0_26 = arith.constant 0 : index
    %47 = vector.load %arg2[%c7, %c0_25, %c0_26] : memref<9x4x128xbf16, #tpu.memory_space<vmem>>, vector<1x4x128xbf16>
    %48 = vector.shape_cast %47 : vector<1x4x128xbf16> to vector<4x128xbf16>
    %cst_27 = arith.constant dense<0.000000e+00> : vector<256x128xf32>
    %49 = tpu.matmul %46, %48, %cst_27 {dimension_numbers = #tpu.dot_dimension_numbers<[1], [0], [0], [1], [0, 0, 1, 1], [], []>} : vector<256x4xbf16>, vector<4x128xbf16>, vector<256x128xf32> -> vector<256x128xf32>
    %50 = arith.addf %44, %49 : vector<256x128xf32>
    %51 = vector.extract_strided_slice %1 {offsets = [2, 2, 0], sizes = [16, 16, 4], strides = [1, 1, 1]} : vector<18x18x4xbf16> to vector<16x16x4xbf16>
    %52 = vector.shape_cast %51 : vector<16x16x4xbf16> to vector<256x4xbf16>
    %c8 = arith.constant 8 : index
    %c0_28 = arith.constant 0 : index
    %c0_29 = arith.constant 0 : index
    %53 = vector.load %arg2[%c8, %c0_28, %c0_29] : memref<9x4x128xbf16, #tpu.memory_space<vmem>>, vector<1x4x128xbf16>
    %54 = vector.shape_cast %53 : vector<1x4x128xbf16> to vector<4x128xbf16>
    %cst_30 = arith.constant dense<0.000000e+00> : vector<256x128xf32>
    %55 = tpu.matmul %52, %54, %cst_30 {dimension_numbers = #tpu.dot_dimension_numbers<[1], [0], [0], [1], [0, 0, 1, 1], [], []>} : vector<256x4xbf16>, vector<4x128xbf16>, vector<256x128xf32> -> vector<256x128xf32>
    %56 = arith.addf %50, %55 : vector<256x128xf32>
    %57 = arith.truncf %56 : vector<256x128xf32> to vector<256x128xbf16>
    %c0_31 = arith.constant 0 : index
    %c0_32 = arith.constant 0 : index
    %c0_33 = arith.constant 0 : index
    %58 = vector.load %arg3[%c0_31, %c0_32, %c0_33] : memref<1x256x128xbf16, #tpu.memory_space<vmem>>, vector<1x256x128xbf16>
    %59 = vector.shape_cast %58 : vector<1x256x128xbf16> to vector<256x128xbf16>
    %60 = vector.shape_cast %57 : vector<256x128xbf16> to vector<1x256x128xbf16>
    tpu.vector_store %arg3[%c0_31, %c0_32, %c0_33], %60 {strides = array<i32>} : memref<1x256x128xbf16, #tpu.memory_space<vmem>>, vector<1x256x128xbf16>,
    %cst_34 = arith.constant dense<0.000000e+00> : vector<128xf32>
    %61 = vector.multi_reduction <add>, %56, %cst_34 [0] : vector<256x128xf32> to vector<128xf32>
    %62 = vector.shape_cast %61 : vector<128xf32> to vector<1x128xf32>
    %cst_35 = arith.constant 3.906250e-03 : f32
    %63 = vector.broadcast %cst_35 : f32 to vector<1x128xf32>
    %64 = arith.mulf %62, %63 : vector<1x128xf32>
    %65 = vector.broadcast %64 : vector<1x128xf32> to vector<256x128xf32>
    %66 = arith.subf %56, %65 : vector<256x128xf32>
    %67 = arith.mulf %66, %66 : vector<256x128xf32>
    %cst_36 = arith.constant dense<0.000000e+00> : vector<128xf32>
    %68 = vector.multi_reduction <add>, %67, %cst_36 [0] : vector<256x128xf32> to vector<128xf32>
    %69 = vector.shape_cast %68 : vector<128xf32> to vector<1x128xf32>
    %c0_37 = arith.constant 0 : index
    %c0_38 = arith.constant 0 : index
    %c0_39 = arith.constant 0 : index
    %70 = vector.load %arg4[%c0_37, %c0_38, %c0_39] : memref<1x8x128xf32, #tpu.memory_space<vmem>>, vector<1x1x128xf32>
    %71 = vector.shape_cast %70 : vector<1x1x128xf32> to vector<1x128xf32>
    %72 = vector.shape_cast %64 : vector<1x128xf32> to vector<1x1x128xf32>
    tpu.vector_store %arg4[%c0_37, %c0_38, %c0_39], %72 {strides = array<i32>} : memref<1x8x128xf32, #tpu.memory_space<vmem>>, vector<1x1x128xf32>,
    %c0_40 = arith.constant 0 : index
    %c1_41 = arith.constant 1 : index
    %c0_42 = arith.constant 0 : index
    %73 = vector.load %arg4[%c0_40, %c1_41, %c0_42] : memref<1x8x128xf32, #tpu.memory_space<vmem>>, vector<1x1x128xf32>
    %74 = vector.shape_cast %73 : vector<1x1x128xf32> to vector<1x128xf32>
    %75 = vector.shape_cast %69 : vector<1x128xf32> to vector<1x1x128xf32>
    tpu.vector_store %arg4[%c0_40, %c1_41, %c0_42], %75 {strides = array<i32>} : memref<1x8x128xf32, #tpu.memory_space<vmem>>, vector<1x1x128xf32>,
    return
  }
  func.func @transform_0(%arg0: i32) -> (i32, i32, i32, i32) {
    %c0_i32 = arith.constant 0 : i32
    %c0_i32_0 = arith.constant 0 : i32
    %c0_i32_1 = arith.constant 0 : i32
    %c0_i32_2 = arith.constant 0 : i32
    return %arg0, %c0_i32, %c0_i32_0, %c0_i32_1 : i32, i32, i32, i32
  }
  func.func @transform_1(%arg0: i32) -> (i32, i32, i32) {
    %c0_i32 = arith.constant 0 : i32
    %c0_i32_0 = arith.constant 0 : i32
    %c0_i32_1 = arith.constant 0 : i32
    %c0_i32_2 = arith.constant 0 : i32
    return %c0_i32, %c0_i32_0, %c0_i32_1 : i32, i32, i32
  }
  func.func @transform_2(%arg0: i32) -> (i32, i32, i32) {
    %c0_i32 = arith.constant 0 : i32
    %c0_i32_0 = arith.constant 0 : i32
    %c0_i32_1 = arith.constant 0 : i32
    return %arg0, %c0_i32, %c0_i32_0 : i32, i32, i32
  }
  func.func @transform_3(%arg0: i32) -> (i32, i32, i32) {
    %c0_i32 = arith.constant 0 : i32
    %c0_i32_0 = arith.constant 0 : i32
    %c0_i32_1 = arith.constant 0 : i32
    return %arg0, %c0_i32, %c0_i32_0 : i32, i32, i32
  }
}

module attributes {stable_mosaic.version = 11 : i64} {
  func.func @bn_relu_kernel(%arg0: i32, %arg1: memref<1x256x128xbf16, #tpu.memory_space<vmem>>, %arg2: memref<1x128xf32, #tpu.memory_space<vmem>>, %arg3: memref<1x128xf32, #tpu.memory_space<vmem>>, %arg4: memref<1x256x128xbf16, #tpu.memory_space<vmem>>) attributes {dimension_semantics = [#tpu.dimension_semantics<parallel>], iteration_bounds = array<i64: 2>, scalar_prefetch = 0 : i64, scratch_operands = 0 : i64, tpu.core_type = #tpu.core_type<tc>, window_params = [{transform_indices = @transform_0, window_bounds = array<i64: 1, 256, 128>}, {pipeline_mode = #tpu.pipeline_mode<synchronous>, transform_indices = @transform_1, window_bounds = array<i64: 1, 128>}, {pipeline_mode = #tpu.pipeline_mode<synchronous>, transform_indices = @transform_2, window_bounds = array<i64: 1, 128>}, {transform_indices = @transform_3, window_bounds = array<i64: 1, 256, 128>}]} {
    %c0 = arith.constant 0 : index
    %c0_0 = arith.constant 0 : index
    %c0_1 = arith.constant 0 : index
    %0 = vector.load %arg1[%c0, %c0_0, %c0_1] : memref<1x256x128xbf16, #tpu.memory_space<vmem>>, vector<1x256x128xbf16>
    %1 = vector.shape_cast %0 : vector<1x256x128xbf16> to vector<256x128xbf16>
    %2 = arith.extf %1 : vector<256x128xbf16> to vector<256x128xf32>
    %c0_2 = arith.constant 0 : index
    %c0_3 = arith.constant 0 : index
    %3 = vector.load %arg2[%c0_2, %c0_3] : memref<1x128xf32, #tpu.memory_space<vmem>>, vector<1x128xf32>
    %4 = vector.broadcast %3 : vector<1x128xf32> to vector<256x128xf32>
    %5 = arith.mulf %2, %4 : vector<256x128xf32>
    %c0_4 = arith.constant 0 : index
    %c0_5 = arith.constant 0 : index
    %6 = vector.load %arg3[%c0_4, %c0_5] : memref<1x128xf32, #tpu.memory_space<vmem>>, vector<1x128xf32>
    %7 = vector.broadcast %6 : vector<1x128xf32> to vector<256x128xf32>
    %8 = arith.addf %5, %7 : vector<256x128xf32>
    %cst = arith.constant 0.000000e+00 : f32
    %9 = vector.broadcast %cst : f32 to vector<256x128xf32>
    %10 = arith.maximumf %8, %9 : vector<256x128xf32>
    %11 = arith.truncf %10 : vector<256x128xf32> to vector<256x128xbf16>
    %c0_6 = arith.constant 0 : index
    %c0_7 = arith.constant 0 : index
    %c0_8 = arith.constant 0 : index
    %12 = vector.load %arg4[%c0_6, %c0_7, %c0_8] : memref<1x256x128xbf16, #tpu.memory_space<vmem>>, vector<1x256x128xbf16>
    %13 = vector.shape_cast %12 : vector<1x256x128xbf16> to vector<256x128xbf16>
    %14 = vector.shape_cast %11 : vector<256x128xbf16> to vector<1x256x128xbf16>
    tpu.vector_store %arg4[%c0_6, %c0_7, %c0_8], %14 {strides = array<i32>} : memref<1x256x128xbf16, #tpu.memory_space<vmem>>, vector<1x256x128xbf16>,
    return
  }
  func.func @transform_0(%arg0: i32) -> (i32, i32, i32) {
    %c0_i32 = arith.constant 0 : i32
    %c0_i32_0 = arith.constant 0 : i32
    %c0_i32_1 = arith.constant 0 : i32
    return %arg0, %c0_i32, %c0_i32_0 : i32, i32, i32
  }
  func.func @transform_1(%arg0: i32) -> (i32, i32) {
    %c0_i32 = arith.constant 0 : i32
    %c0_i32_0 = arith.constant 0 : i32
    %c0_i32_1 = arith.constant 0 : i32
    return %c0_i32, %c0_i32_0 : i32, i32
  }
  func.func @transform_2(%arg0: i32) -> (i32, i32) {
    %c0_i32 = arith.constant 0 : i32
    %c0_i32_0 = arith.constant 0 : i32
    %c0_i32_1 = arith.constant 0 : i32
    return %c0_i32, %c0_i32_0 : i32, i32
  }
  func.func @transform_3(%arg0: i32) -> (i32, i32, i32) {
    %c0_i32 = arith.constant 0 : i32
    %c0_i32_0 = arith.constant 0 : i32
    %c0_i32_1 = arith.constant 0 : i32
    return %arg0, %c0_i32, %c0_i32_0 : i32, i32, i32
  }
}

</mosaic_0001>

<llo_original>
// kernel: conv_bn_relu.3
$region0: #{conv_bn_relu.3}
  #allocation0 [shape = 'u32[]', space=smem, size = 0x4, offset = 0x4, fixed_abs, tag = 'smem constant byte address 0x4 - core index']
  #allocation1 [shape = 'u32[144,128]{1,0:T(1,128)}', space=vmem, size = 0x12000, scoped, tag = 'internal scratch']
  %s0 = inlined_call_operand.vmem [shape: bf16[2,256,128], index: 0, kind: input, shape index: {}, may-alias: {0,3}]
  %s1 = inlined_call_operand.vmem [shape: f32[1,128], index: 1, kind: input, shape index: {}]
  %s2 = inlined_call_operand.vmem [shape: f32[1,128], index: 2, kind: input, shape index: {}]
  %s3 = inlined_call_operand.vmem [shape: bf16[2,256,128], index: 3, kind: output, shape index: {}, may-alias: {0,3}]
  %s4 = sld [smem:[#allocation0]]
  $region45: #{conv_bn_relu.3} parent=0
    _
  %s6 = ssub.s32 1, %s4
  %s7 = scalar_select 0, %s6, %s4
  loop: start=0, step=1, limit=4
  $region2: #{conv_bn_relu.3} parent=0 // loop_pre_header
    _
  $region3: #{conv_bn_relu.3} parent=0 // loop_header
    %s9 = sphi 0, %s13
    %p10 = scmp.ge.s32.totalorder %s9, 4
    %s19 = sphi 0, %s21
    %s22 = sphi 0, %s19
    %s23 = sphi 0, %s22
    %s39 = sphi 0, %s23
    %s43 = sphi 0, %s43
    %s45 = sphi 0, %s43
    %s46 = sphi 0, %s45
    %s60 = sphi 0, %s46
    %s64 = sphi 0, %s64
    %s66 = sphi 0, %s64
    %s67 = sphi 0, %s66
    %s81 = sphi 0, %s67
    %s87 = sphi 0, %s89
    %s90 = sphi 0, %s87
    %s91 = sphi 0, %s90
    %s107 = sphi 0, %s91
  $region4: #{conv_bn_relu.3} parent=0 // loop_header_branch
    %12 = sbr.rel (%p10) target = $region8
  $region5: #{conv_bn_relu.3} parent=0 // loop_body
    %s14 = ssub.s32 %s9, 1
    %s15 = ssub.s32 %s9, 2
    %s16 = sadd.s32 %s9, 1
    %s17 = ssub.s32 %s9, %s16
    %p18 = scmp.eq.s32.totalorder %s17, 0
    %s20 = sadd.s32 %s19, 1
    %s21 = scalar_select %p18, %s19, %s20
    %p24 = pneg %p18
    %p25 = scmp.eq.s32.totalorder %s9, 1
    %p26 = por %p24, %p25
    %p27 = scmp.ne.s32.totalorder %s19, %s22
    %p28 = scmp.eq.s32.totalorder %s9, 0
    %p29 = por %p27, %p28
    %p30 = scmp.ne.s32.totalorder %s19, %s22
    %p31 = scmp.eq.s32.totalorder %s14, 1
    %p32 = por %p30, %p31
    %p33 = scmp.ne.s32.totalorder %s22, %s23
    %p34 = scmp.eq.s32.totalorder %s14, 0
    %p35 = por %p33, %p34
    %p36 = scmp.ne.s32.totalorder %s22, %s23
    %p37 = scmp.eq.s32.totalorder %s15, 1
    %p38 = por %p36, %p37
    %p40 = scmp.ne.s32.totalorder %s23, %s39
    %p41 = scmp.eq.s32.totalorder %s15, 0
    %p42 = por %p40, %p41
    %s44 = sadd.s32 %s43, 1
    %p47 = scmp.eq.s32.totalorder %s9, 1
    %p48 = scmp.ne.s32.totalorder %s43, %s45
    %p49 = scmp.eq.s32.totalorder %s9, 0
    %p50 = por %p48, %p49
    %p51 = scmp.ne.s32.totalorder %s43, %s45
    %p52 = scmp.eq.s32.totalorder %s14, 1
    %p53 = por %p51, %p52
    %p54 = scmp.ne.s32.totalorder %s45, %s46
    %p55 = scmp.eq.s32.totalorder %s14, 0
    %p56 = por %p54, %p55
    %p57 = scmp.ne.s32.totalorder %s45, %s46
    %p58 = scmp.eq.s32.totalorder %s15, 1
    %p59 = por %p57, %p58
    %p61 = scmp.ne.s32.totalorder %s46, %s60
    %p62 = scmp.eq.s32.totalorder %s15, 0
    %p63 = por %p61, %p62
    %s65 = sadd.s32 %s64, 1
    %p68 = scmp.eq.s32.totalorder %s9, 1
    %p69 = scmp.ne.s32.totalorder %s64, %s66
    %p70 = scmp.eq.s32.totalorder %s9, 0
    %p71 = por %p69, %p70
    %p72 = scmp.ne.s32.totalorder %s64, %s66
    %p73 = scmp.eq.s32.totalorder %s14, 1
    %p74 = por %p72, %p73
    %p75 = scmp.ne.s32.totalorder %s66, %s67
    %p76 = scmp.eq.s32.totalorder %s14, 0
    %p77 = por %p75, %p76
    %p78 = scmp.ne.s32.totalorder %s66, %s67
    %p79 = scmp.eq.s32.totalorder %s15, 1
    %p80 = por %p78, %p79
    %p82 = scmp.ne.s32.totalorder %s67, %s81
    %p83 = scmp.eq.s32.totalorder %s15, 0
    %p84 = por %p82, %p83
    %s85 = ssub.s32 %s9, %s16
    %p86 = scmp.eq.s32.totalorder %s85, 0
    %s88 = sadd.s32 %s87, 1
    %s89 = scalar_select %p86, %s87, %s88
    %p92 = pneg %p86
    %p93 = scmp.eq.s32.totalorder %s9, 1
    %p94 = por %p92, %p93
    %p95 = scmp.ne.s32.totalorder %s87, %s90
    %p96 = scmp.eq.s32.totalorder %s9, 0
    %p97 = por %p95, %p96
    %p98 = scmp.ne.s32.totalorder %s87, %s90
    %p99 = scmp.eq.s32.totalorder %s14, 1
    %p100 = por %p98, %p99
    %p101 = scmp.ne.s32.totalorder %s90, %s91
    %p102 = scmp.eq.s32.totalorder %s14, 0
    %p103 = por %p101, %p102
    %p104 = scmp.ne.s32.totalorder %s90, %s91
    %p105 = scmp.eq.s32.totalorder %s15, 1
    %p106 = por %p104, %p105
    %p108 = scmp.ne.s32.totalorder %s91, %s107
    %p109 = scmp.eq.s32.totalorder %s15, 0
    %p110 = por %p108, %p109
    %p111 = scmp.le.s32.totalorder 1, %s9
    %p112 = scmp.lt.s32.totalorder %s9, 3
    %p113 = pnand %p111, %p112
    %p114 = pneg %p113
    // Predicated region
    $region9: #{conv_bn_relu.3} parent=5 // pred_check
      _
    $region10: #{conv_bn_relu.3} parent=5 // pred_check_branch
      %116 = sbr.rel (%p113) target = $region12
    $region11: #{conv_bn_relu.3} parent=5 // pred_region
      %s117 = ssub.s32 %s9, 1
      // Predicated region
      $region13: #{conv_bn_relu.3} parent=11 // pred_check
        %p118 = pneg %p56
      $region14: #{conv_bn_relu.3} parent=11 // pred_check_branch
        %120 = sbr.rel (%p118) target = $region16
      $region15: #{conv_bn_relu.3} parent=11 // pred_region
        _
      $region16: #{conv_bn_relu.3} parent=11 // pred_fallthru
        _
      // Predicated region
      $region17: #{conv_bn_relu.3} parent=11 // pred_check
        %p121 = pneg %p77
      $region18: #{conv_bn_relu.3} parent=11 // pred_check_branch
        %123 = sbr.rel (%p121) target = $region20
      $region19: #{conv_bn_relu.3} parent=11 // pred_region
        _
      $region20: #{conv_bn_relu.3} parent=11 // pred_fallthru
        _
    $region12: #{conv_bn_relu.3} parent=5 // pred_fallthru
      _
    %p124 = scmp.lt.s32.totalorder %s9, 2
    // Predicated region
    $region21: #{conv_bn_relu.3} parent=5 // pred_check
      %p125 = pneg %p124
    $region22: #{conv_bn_relu.3} parent=5 // pred_check_branch
      %127 = sbr.rel (%p125) target = $region24
    $region23: #{conv_bn_relu.3} parent=5 // pred_region
      // Predicated region
      $region25: #{conv_bn_relu.3} parent=23 // pred_check
        %p128 = pneg %p29
      $region26: #{conv_bn_relu.3} parent=23 // pred_check_branch
        %130 = sbr.rel (%p128) target = $region28
      $region27: #{conv_bn_relu.3} parent=23 // pred_region
        %p131 = scmp.lt.s32.totalorder %s9, 1
        %s132 = scalar_select %p131, %s9, 1
        %s133 = smul.addr %s132, 32
        %s134 = smul.addr %s133, 4
        %s135 = scalar_lea.vmem %s0, %s134
      $region28: #{conv_bn_relu.3} parent=23 // pred_fallthru
        _
    $region24: #{conv_bn_relu.3} parent=5 // pred_fallthru
      _
    %p136 = scmp.le.s32.totalorder 1, %s9
    %p137 = scmp.lt.s32.totalorder %s9, 3
    %p138 = pnand %p136, %p137
    %p139 = pneg %p138
    // Predicated region
    $region29: #{conv_bn_relu.3} parent=5 // pred_check
      _
    $region30: #{conv_bn_relu.3} parent=5 // pred_check_branch
      %141 = sbr.rel (%p138) target = $region32
    $region31: #{conv_bn_relu.3} parent=5 // pred_region
      %s142 = ssub.s32 %s9, 1
      %p143 = scmp.lt.s32.totalorder %s14, 1
      %s144 = scalar_select %p143, %s14, 1
      %s145 = smul.addr %s144, 32
      %s146 = smul.addr %s145, 4
      %s147 = scalar_lea.vmem %s0, %s146
      %p148 = pneg %p35
      %p149 = pneg %p32
      %p150 = pneg %p56
      %p151 = pneg %p53
      %p152 = pneg %p77
      %p153 = pneg %p74
      %p154 = pneg %p103
      %p155 = pneg %p100
      %p156 = scmp.lt.s32.totalorder %s14, 1
      %s157 = scalar_select %p156, %s14, 1
      %s158 = smul.addr %s157, 32
      %s159 = smul.addr %s158, 4
      %s160 = scalar_lea.vmem %s3, %s159
      %p161 = scmp.lt.s32.totalorder %s14, 1
      %s162 = scalar_select %p161, %s14, 1
      %s163 = smul.addr %s162, 32
      %s164 = smul.addr %s163, 4
      %s165 = scalar_lea.vmem %s0, %s164
      %p166 = scmp.lt.s32.totalorder %s14, 1
      %s167 = scalar_select %p166, %s14, 1
      %s168 = smul.addr %s167, 32
      %s169 = smul.addr %s168, 4
      %s170 = scalar_lea.vmem %s3, %s169
      %v171 = vld [vmem:[%s165] sm:$0xf]
      %v172 = vld [vmem:[%s165 + $0x4] sm:$0xf]
      %v173 = vld [vmem:[%s165 + $0x8] sm:$0xf]
      %v174 = vld [vmem:[%s165 + $0xc] sm:$0xf]
      %v175 = vld [vmem:[%s165 + $0x10] sm:$0xf]
      %v176 = vld [vmem:[%s165 + $0x14] sm:$0xf]
      %v177 = vld [vmem:[%s165 + $0x18] sm:$0xf]
      %v178 = vld [vmem:[%s165 + $0x1c] sm:$0xf]
      %v179 = vld [vmem:[%s165 + $0x20] sm:$0xf]
      %v180 = vld [vmem:[%s165 + $0x24] sm:$0xf]
      %v181 = vld [vmem:[%s165 + $0x28] sm:$0xf]
      %v182 = vld [vmem:[%s165 + $0x2c] sm:$0xf]
      %v183 = vld [vmem:[%s165 + $0x30] sm:$0xf]
      %v184 = vld [vmem:[%s165 + $0x34] sm:$0xf]
      %v185 = vld [vmem:[%s165 + $0x38] sm:$0xf]
      %v186 = vld [vmem:[%s165 + $0x3c] sm:$0xf]
      %v187 = vld [vmem:[%s165 + $0x40] sm:$0xf]
      %v188 = vld [vmem:[%s165 + $0x44] sm:$0xf]
      %v189 = vld [vmem:[%s165 + $0x48] sm:$0xf]
      %v190 = vld [vmem:[%s165 + $0x4c] sm:$0xf]
      %v191 = vld [vmem:[%s165 + $0x50] sm:$0xf]
      %v192 = vld [vmem:[%s165 + $0x54] sm:$0xf]
      %v193 = vld [vmem:[%s165 + $0x58] sm:$0xf]
      %v194 = vld [vmem:[%s165 + $0x5c] sm:$0xf]
      %v195 = vld [vmem:[%s165 + $0x60] sm:$0xf]
      %v196 = vld [vmem:[%s165 + $0x64] sm:$0xf]
      %v197 = vld [vmem:[%s165 + $0x68] sm:$0xf]
      %v198 = vld [vmem:[%s165 + $0x6c] sm:$0xf]
      %v199 = vld [vmem:[%s165 + $0x70] sm:$0xf]
      %v200 = vld [vmem:[%s165 + $0x74] sm:$0xf]
      %v201 = vld [vmem:[%s165 + $0x78] sm:$0xf]
      %v202 = vld [vmem:[%s165 + $0x7c] sm:$0xf]
      %v203 = vunpack.c.l.bf16 %v171
      %v204 = vunpack.c.l.bf16 %v172
      %v205 = vunpack.c.l.bf16 %v173
      %v206 = vunpack.c.l.bf16 %v174
      %v207 = vunpack.c.l.bf16 %v175
      %v208 = vunpack.c.l.bf16 %v176
      %v209 = vunpack.c.l.bf16 %v177
      %v210 = vunpack.c.l.bf16 %v178
      %v211 = vunpack.c.l.bf16 %v179
      %v212 = vunpack.c.l.bf16 %v180
      %v213 = vunpack.c.l.bf16 %v181
      %v214 = vunpack.c.l.bf16 %v182
      %v215 = vunpack.c.l.bf16 %v183
      %v216 = vunpack.c.l.bf16 %v184
      %v217 = vunpack.c.l.bf16 %v185
      %v218 = vunpack.c.l.bf16 %v186
      %v219 = vunpack.c.l.bf16 %v187
      %v220 = vunpack.c.l.bf16 %v188
      %v221 = vunpack.c.l.bf16 %v189
      %v222 = vunpack.c.l.bf16 %v190
      %v223 = vunpack.c.l.bf16 %v191
      %v224 = vunpack.c.l.bf16 %v192
      %v225 = vunpack.c.l.bf16 %v193
      %v226 = vunpack.c.l.bf16 %v194
      %v227 = vunpack.c.l.bf16 %v195
      %v228 = vunpack.c.l.bf16 %v196
      %v229 = vunpack.c.l.bf16 %v197
      %v230 = vunpack.c.l.bf16 %v198
      %v231 = vunpack.c.l.bf16 %v199
      %v232 = vunpack.c.l.bf16 %v200
      %v233 = vunpack.c.l.bf16 %v201
      %v234 = vunpack.c.l.bf16 %v202
      %v235 = vld [vmem:[%s1] sm:$0x1]
      %v237 = vlaneseq
      %v238 = vshrl.u32 %v237, 7
      %v239 = vsub.s32 0, %v238
      %v240 = vrot.slane %v235, %v239
      %v242 = vmul.f32 %v203, %v240
      %v243 = vmul.f32 %v204, %v240
      %v244 = vmul.f32 %v205, %v240
      %v245 = vmul.f32 %v206, %v240
      %v246 = vmul.f32 %v207, %v240
      %v247 = vmul.f32 %v208, %v240
      %v248 = vmul.f32 %v209, %v240
      %v249 = vmul.f32 %v210, %v240
      %v250 = vmul.f32 %v211, %v240
      %v251 = vmul.f32 %v212, %v240
      %v252 = vmul.f32 %v213, %v240
      %v253 = vmul.f32 %v214, %v240
      %v254 = vmul.f32 %v215, %v240
      %v255 = vmul.f32 %v216, %v240
      %v256 = vmul.f32 %v217, %v240
      %v257 = vmul.f32 %v218, %v240
      %v258 = vmul.f32 %v219, %v240
      %v259 = vmul.f32 %v220, %v240
      %v260 = vmul.f32 %v221, %v240
      %v261 = vmul.f32 %v222, %v240
      %v262 = vmul.f32 %v223, %v240
      %v263 = vmul.f32 %v224, %v240
      %v264 = vmul.f32 %v225, %v240
      %v265 = vmul.f32 %v226, %v240
      %v266 = vmul.f32 %v227, %v240
      %v267 = vmul.f32 %v228, %v240
      %v268 = vmul.f32 %v229, %v240
      %v269 = vmul.f32 %v230, %v240
      %v270 = vmul.f32 %v231, %v240
      %v271 = vmul.f32 %v232, %v240
      %v272 = vmul.f32 %v233, %v240
      %v273 = vmul.f32 %v234, %v240
      %v274 = vld [vmem:[%s2] sm:$0x1]
      %v276 = vlaneseq
      %v277 = vshrl.u32 %v276, 7
      %v278 = vsub.s32 0, %v277
      %v279 = vrot.slane %v274, %v278
      %v281 = vadd.f32 %v242, %v279
      %v282 = vadd.f32 %v243, %v279
      %v283 = vadd.f32 %v244, %v279
      %v284 = vadd.f32 %v245, %v279
      %v285 = vadd.f32 %v246, %v279
      %v286 = vadd.f32 %v247, %v279
      %v287 = vadd.f32 %v248, %v279
      %v288 = vadd.f32 %v249, %v279
      %v289 = vadd.f32 %v250, %v279
      %v290 = vadd.f32 %v251, %v279
      %v291 = vadd.f32 %v252, %v279
      %v292 = vadd.f32 %v253, %v279
      %v293 = vadd.f32 %v254, %v279
      %v294 = vadd.f32 %v255, %v279
      %v295 = vadd.f32 %v256, %v279
      %v296 = vadd.f32 %v257, %v279
      %v297 = vadd.f32 %v258, %v279
      %v298 = vadd.f32 %v259, %v279
      %v299 = vadd.f32 %v260, %v279
      %v300 = vadd.f32 %v261, %v279
      %v301 = vadd.f32 %v262, %v279
      %v302 = vadd.f32 %v263, %v279
      %v303 = vadd.f32 %v264, %v279
      %v304 = vadd.f32 %v265, %v279
      %v305 = vadd.f32 %v266, %v279
      %v306 = vadd.f32 %v267, %v279
      %v307 = vadd.f32 %v268, %v279
      %v308 = vadd.f32 %v269, %v279
      %v309 = vadd.f32 %v270, %v279
      %v310 = vadd.f32 %v271, %v279
      %v311 = vadd.f32 %v272, %v279
      %v312 = vadd.f32 %v273, %v279
      %v313 = vmax.f32 %v281, 0.0
      %v314 = vmax.f32 %v282, 0.0
      %v315 = vmax.f32 %v283, 0.0
      %v316 = vmax.f32 %v284, 0.0
      %v317 = vmax.f32 %v285, 0.0
      %v318 = vmax.f32 %v286, 0.0
      %v319 = vmax.f32 %v287, 0.0
      %v320 = vmax.f32 %v288, 0.0
      %v321 = vmax.f32 %v289, 0.0
      %v322 = vmax.f32 %v290, 0.0
      %v323 = vmax.f32 %v291, 0.0
      %v324 = vmax.f32 %v292, 0.0
      %v325 = vmax.f32 %v293, 0.0
      %v326 = vmax.f32 %v294, 0.0
      %v327 = vmax.f32 %v295, 0.0
      %v328 = vmax.f32 %v296, 0.0
      %v329 = vmax.f32 %v297, 0.0
      %v330 = vmax.f32 %v298, 0.0
      %v331 = vmax.f32 %v299, 0.0
      %v332 = vmax.f32 %v300, 0.0
      %v333 = vmax.f32 %v301, 0.0
      %v334 = vmax.f32 %v302, 0.0
      %v335 = vmax.f32 %v303, 0.0
      %v336 = vmax.f32 %v304, 0.0
      %v337 = vmax.f32 %v305, 0.0
      %v338 = vmax.f32 %v306, 0.0
      %v339 = vmax.f32 %v307, 0.0
      %v340 = vmax.f32 %v308, 0.0
      %v341 = vmax.f32 %v309, 0.0
      %v342 = vmax.f32 %v310, 0.0
      %v343 = vmax.f32 %v311, 0.0
      %v344 = vmax.f32 %v312, 0.0
      %v345 = vpack.c.bf16 %v314, %v313
      %v346 = vpack.c.bf16 %v316, %v315
      %v347 = vpack.c.bf16 %v318, %v317
      %v348 = vpack.c.bf16 %v320, %v319
      %v349 = vpack.c.bf16 %v322, %v321
      %v350 = vpack.c.bf16 %v324, %v323
      %v351 = vpack.c.bf16 %v326, %v325
      %v352 = vpack.c.bf16 %v328, %v327
      %v353 = vpack.c.bf16 %v330, %v329
      %v354 = vpack.c.bf16 %v332, %v331
      %v355 = vpack.c.bf16 %v334, %v333
      %v356 = vpack.c.bf16 %v336, %v335
      %v357 = vpack.c.bf16 %v338, %v337
      %v358 = vpack.c.bf16 %v340, %v339
      %v359 = vpack.c.bf16 %v342, %v341
      %v360 = vpack.c.bf16 %v344, %v343
      %v377 = vunpack.c.l.b16 %v345
      %v378 = vunpack.c.h.b16 %v345
      %v379 = vunpack.c.l.b16 %v346
      %v380 = vunpack.c.h.b16 %v346
      %v381 = vunpack.c.l.b16 %v347
      %v382 = vunpack.c.h.b16 %v347
      %v383 = vunpack.c.l.b16 %v348
      %v384 = vunpack.c.h.b16 %v348
      %v385 = vunpack.c.l.b16 %v349
      %v386 = vunpack.c.h.b16 %v349
      %v387 = vunpack.c.l.b16 %v350
      %v388 = vunpack.c.h.b16 %v350
      %v389 = vunpack.c.l.b16 %v351
      %v390 = vunpack.c.h.b16 %v351
      %v391 = vunpack.c.l.b16 %v352
      %v392 = vunpack.c.h.b16 %v352
      %v393 = vunpack.c.l.b16 %v353
      %v394 = vunpack.c.h.b16 %v353
      %v395 = vunpack.c.l.b16 %v354
      %v396 = vunpack.c.h.b16 %v354
      %v397 = vunpack.c.l.b16 %v355
      %v398 = vunpack.c.h.b16 %v355
      %v399 = vunpack.c.l.b16 %v356
      %v400 = vunpack.c.h.b16 %v356
      %v401 = vunpack.c.l.b16 %v357
      %v402 = vunpack.c.h.b16 %v357
      %v403 = vunpack.c.l.b16 %v358
      %v404 = vunpack.c.h.b16 %v358
      %v405 = vunpack.c.l.b16 %v359
      %v406 = vunpack.c.h.b16 %v359
      %v407 = vunpack.c.l.b16 %v360
      %v408 = vunpack.c.h.b16 %v360
      %v409 = vpack.c.b16 %v377, %v377
      %v410 = vpack.c.b16 %v378, %v378
      %v411 = vpack.c.b16 %v379, %v379
      %v412 = vpack.c.b16 %v380, %v380
      %v413 = vpack.c.b16 %v381, %v381
      %v414 = vpack.c.b16 %v382, %v382
      %v415 = vpack.c.b16 %v383, %v383
      %v416 = vpack.c.b16 %v384, %v384
      %v417 = vpack.c.b16 %v385, %v385
      %v418 = vpack.c.b16 %v386, %v386
      %v419 = vpack.c.b16 %v387, %v387
      %v420 = vpack.c.b16 %v388, %v388
      %v421 = vpack.c.b16 %v389, %v389
      %v422 = vpack.c.b16 %v390, %v390
      %v423 = vpack.c.b16 %v391, %v391
      %v424 = vpack.c.b16 %v392, %v392
      %v425 = vpack.c.b16 %v393, %v393
      %v426 = vpack.c.b16 %v394, %v394
      %v427 = vpack.c.b16 %v395, %v395
      %v428 = vpack.c.b16 %v396, %v396
      %v429 = vpack.c.b16 %v397, %v397
      %v430 = vpack.c.b16 %v398, %v398
      %v431 = vpack.c.b16 %v399, %v399
      %v432 = vpack.c.b16 %v400, %v400
      %v433 = vpack.c.b16 %v401, %v401
      %v434 = vpack.c.b16 %v402, %v402
      %v435 = vpack.c.b16 %v403, %v403
      %v436 = vpack.c.b16 %v404, %v404
      %v437 = vpack.c.b16 %v405, %v405
      %v438 = vpack.c.b16 %v406, %v406
      %v439 = vpack.c.b16 %v407, %v407
      %v440 = vpack.c.b16 %v408, %v408
      %473 = vst [vmem:[%s170] sm:$0xf] %v409
      %474 = vst [vmem:[%s170 + $0x4] sm:$0xf] %v410
      %475 = vst [vmem:[%s170 + $0x8] sm:$0xf] %v411
      %476 = vst [vmem:[%s170 + $0xc] sm:$0xf] %v412
      %477 = vst [vmem:[%s170 + $0x10] sm:$0xf] %v413
      %478 = vst [vmem:[%s170 + $0x14] sm:$0xf] %v414
      %479 = vst [vmem:[%s170 + $0x18] sm:$0xf] %v415
      %480 = vst [vmem:[%s170 + $0x1c] sm:$0xf] %v416
      %481 = vst [vmem:[%s170 + $0x20] sm:$0xf] %v417
      %482 = vst [vmem:[%s170 + $0x24] sm:$0xf] %v418
      %483 = vst [vmem:[%s170 + $0x28] sm:$0xf] %v419
      %484 = vst [vmem:[%s170 + $0x2c] sm:$0xf] %v420
      %485 = vst [vmem:[%s170 + $0x30] sm:$0xf] %v421
      %486 = vst [vmem:[%s170 + $0x34] sm:$0xf] %v422
      %487 = vst [vmem:[%s170 + $0x38] sm:$0xf] %v423
      %488 = vst [vmem:[%s170 + $0x3c] sm:$0xf] %v424
      %489 = vst [vmem:[%s170 + $0x40] sm:$0xf] %v425
      %490 = vst [vmem:[%s170 + $0x44] sm:$0xf] %v426
      %491 = vst [vmem:[%s170 + $0x48] sm:$0xf] %v427
      %492 = vst [vmem:[%s170 + $0x4c] sm:$0xf] %v428
      %493 = vst [vmem:[%s170 + $0x50] sm:$0xf] %v429
      %494 = vst [vmem:[%s170 + $0x54] sm:$0xf] %v430
      %495 = vst [vmem:[%s170 + $0x58] sm:$0xf] %v431
      %496 = vst [vmem:[%s170 + $0x5c] sm:$0xf] %v432
      %497 = vst [vmem:[%s170 + $0x60] sm:$0xf] %v433
      %498 = vst [vmem:[%s170 + $0x64] sm:$0xf] %v434
      %499 = vst [vmem:[%s170 + $0x68] sm:$0xf] %v435
      %500 = vst [vmem:[%s170 + $0x6c] sm:$0xf] %v436
      %501 = vst [vmem:[%s170 + $0x70] sm:$0xf] %v437
      %502 = vst [vmem:[%s170 + $0x74] sm:$0xf] %v438
      %503 = vst [vmem:[%s170 + $0x78] sm:$0xf] %v439
      %504 = vst [vmem:[%s170 + $0x7c] sm:$0xf] %v440
      %p505 = scmp.lt.s32.totalorder %s14, 1
      %s506 = scalar_select %p505, %s14, 1
      %s507 = smul.addr %s506, 32
      %s508 = smul.addr %s507, 4
      %s509 = scalar_lea.vmem %s3, %s508
      // Predicated region
      $region33: #{conv_bn_relu.3} parent=31 // pred_check
        %p510 = pneg %p100
      $region34: #{conv_bn_relu.3} parent=31 // pred_check_branch
        %512 = sbr.rel (%p510) target = $region36
      $region35: #{conv_bn_relu.3} parent=31 // pred_region
        _
      $region36: #{conv_bn_relu.3} parent=31 // pred_fallthru
        _
    $region32: #{conv_bn_relu.3} parent=5 // pred_fallthru
      _
    %p513 = scmp.le.s32.totalorder 2, %s9
    // Predicated region
    $region37: #{conv_bn_relu.3} parent=5 // pred_check
      %p514 = pneg %p513
    $region38: #{conv_bn_relu.3} parent=5 // pred_check_branch
      %516 = sbr.rel (%p514) target = $region40
    $region39: #{conv_bn_relu.3} parent=5 // pred_region
      %s517 = ssub.s32 %s9, 2
      // Predicated region
      $region41: #{conv_bn_relu.3} parent=39 // pred_check
        %p518 = pneg %p106
      $region42: #{conv_bn_relu.3} parent=39 // pred_check_branch
        %520 = sbr.rel (%p518) target = $region44
      $region43: #{conv_bn_relu.3} parent=39 // pred_region
        %p521 = scmp.lt.s32.totalorder %s15, 1
        %s522 = scalar_select %p521, %s15, 1
        %s523 = smul.addr %s522, 32
        %s524 = smul.addr %s523, 4
        %s525 = scalar_lea.vmem %s3, %s524
      $region44: #{conv_bn_relu.3} parent=39 // pred_fallthru
        _
    $region40: #{conv_bn_relu.3} parent=5 // pred_fallthru
      _
  $region6: #{conv_bn_relu.3} parent=0 // loop_footer
    %s13 = sadd.s32 1, %s9
  $region7: #{conv_bn_relu.3} parent=0 // loop_footer_branch
    %8 = sbr.rel target = $region3
  $region8: #{conv_bn_relu.3} parent=0 // loop_exit
    _

// kernel: conv_bn_relu.2
$region0: #{conv_bn_relu.2}
  #allocation0 [shape = 'u32[]', space=smem, size = 0x4, offset = 0x4, fixed_abs, tag = 'smem constant byte address 0x4 - core index']
  #allocation1 [shape = 'u32[144,128]{1,0:T(1,128)}', space=vmem, size = 0x12000, scoped, tag = 'internal scratch']
  %s0 = inlined_call_operand.vmem [shape: bf16[2,18,18,4], index: 0, kind: input, shape index: {}]
  %s1 = inlined_call_operand.vmem [shape: bf16[9,4,128], index: 1, kind: input, shape index: {}]
  %s2 = inlined_call_operand.vmem [shape: bf16[2,256,128], index: 2, kind: output, shape index: {0}]
  %s3 = inlined_call_operand.vmem [shape: f32[2,8,128], index: 3, kind: output, shape index: {1}]
  %4 = xla_tuple %s2, %s3
  %s5 = sld [smem:[#allocation0]]
  $region49: #{conv_bn_relu.2} parent=0
    _
  %s7 = ssub.s32 1, %s5
  %s8 = scalar_select 0, %s7, %s5
  loop: start=0, step=1, limit=4
  $region2: #{conv_bn_relu.2} parent=0 // loop_pre_header
    _
  $region3: #{conv_bn_relu.2} parent=0 // loop_header
    %s10 = sphi 0, %s14
    %p11 = scmp.ge.s32.totalorder %s10, 4
    %s20 = sphi 0, %s22
    %s23 = sphi 0, %s20
    %s24 = sphi 0, %s23
    %s40 = sphi 0, %s24
    %s44 = sphi 0, %s44
    %s46 = sphi 0, %s44
    %s47 = sphi 0, %s46
    %s61 = sphi 0, %s47
    %s67 = sphi 0, %s69
    %s70 = sphi 0, %s67
    %s71 = sphi 0, %s70
    %s87 = sphi 0, %s71
    %s93 = sphi 0, %s95
    %s96 = sphi 0, %s93
    %s97 = sphi 0, %s96
    %s113 = sphi 0, %s97
  $region4: #{conv_bn_relu.2} parent=0 // loop_header_branch
    %13 = sbr.rel (%p11) target = $region8
  $region5: #{conv_bn_relu.2} parent=0 // loop_body
    %s15 = ssub.s32 %s10, 1
    %s16 = ssub.s32 %s10, 2
    %s17 = sadd.s32 %s10, 1
    %s18 = ssub.s32 %s10, %s17
    %p19 = scmp.eq.s32.totalorder %s18, 0
    %s21 = sadd.s32 %s20, 1
    %s22 = scalar_select %p19, %s20, %s21
    %p25 = pneg %p19
    %p26 = scmp.eq.s32.totalorder %s10, 1
    %p27 = por %p25, %p26
    %p28 = scmp.ne.s32.totalorder %s20, %s23
    %p29 = scmp.eq.s32.totalorder %s10, 0
    %p30 = por %p28, %p29
    %p31 = scmp.ne.s32.totalorder %s20, %s23
    %p32 = scmp.eq.s32.totalorder %s15, 1
    %p33 = por %p31, %p32
    %p34 = scmp.ne.s32.totalorder %s23, %s24
    %p35 = scmp.eq.s32.totalorder %s15, 0
    %p36 = por %p34, %p35
    %p37 = scmp.ne.s32.totalorder %s23, %s24
    %p38 = scmp.eq.s32.totalorder %s16, 1
    %p39 = por %p37, %p38
    %p41 = scmp.ne.s32.totalorder %s24, %s40
    %p42 = scmp.eq.s32.totalorder %s16, 0
    %p43 = por %p41, %p42
    %s45 = sadd.s32 %s44, 1
    %p48 = scmp.eq.s32.totalorder %s10, 1
    %p49 = scmp.ne.s32.totalorder %s44, %s46
    %p50 = scmp.eq.s32.totalorder %s10, 0
    %p51 = por %p49, %p50
    %p52 = scmp.ne.s32.totalorder %s44, %s46
    %p53 = scmp.eq.s32.totalorder %s15, 1
    %p54 = por %p52, %p53
    %p55 = scmp.ne.s32.totalorder %s46, %s47
    %p56 = scmp.eq.s32.totalorder %s15, 0
    %p57 = por %p55, %p56
    %p58 = scmp.ne.s32.totalorder %s46, %s47
    %p59 = scmp.eq.s32.totalorder %s16, 1
    %p60 = por %p58, %p59
    %p62 = scmp.ne.s32.totalorder %s47, %s61
    %p63 = scmp.eq.s32.totalorder %s16, 0
    %p64 = por %p62, %p63
    %s65 = ssub.s32 %s10, %s17
    %p66 = scmp.eq.s32.totalorder %s65, 0
    %s68 = sadd.s32 %s67, 1
    %s69 = scalar_select %p66, %s67, %s68
    %p72 = pneg %p66
    %p73 = scmp.eq.s32.totalorder %s10, 1
    %p74 = por %p72, %p73
    %p75 = scmp.ne.s32.totalorder %s67, %s70
    %p76 = scmp.eq.s32.totalorder %s10, 0
    %p77 = por %p75, %p76
    %p78 = scmp.ne.s32.totalorder %s67, %s70
    %p79 = scmp.eq.s32.totalorder %s15, 1
    %p80 = por %p78, %p79
    %p81 = scmp.ne.s32.totalorder %s70, %s71
    %p82 = scmp.eq.s32.totalorder %s15, 0
    %p83 = por %p81, %p82
    %p84 = scmp.ne.s32.totalorder %s70, %s71
    %p85 = scmp.eq.s32.totalorder %s16, 1
    %p86 = por %p84, %p85
    %p88 = scmp.ne.s32.totalorder %s71, %s87
    %p89 = scmp.eq.s32.totalorder %s16, 0
    %p90 = por %p88, %p89
    %s91 = ssub.s32 %s10, %s17
    %p92 = scmp.eq.s32.totalorder %s91, 0
    %s94 = sadd.s32 %s93, 1
    %s95 = scalar_select %p92, %s93, %s94
    %p98 = pneg %p92
    %p99 = scmp.eq.s32.totalorder %s10, 1
    %p100 = por %p98, %p99
    %p101 = scmp.ne.s32.totalorder %s93, %s96
    %p102 = scmp.eq.s32.totalorder %s10, 0
    %p103 = por %p101, %p102
    %p104 = scmp.ne.s32.totalorder %s93, %s96
    %p105 = scmp.eq.s32.totalorder %s15, 1
    %p106 = por %p104, %p105
    %p107 = scmp.ne.s32.totalorder %s96, %s97
    %p108 = scmp.eq.s32.totalorder %s15, 0
    %p109 = por %p107, %p108
    %p110 = scmp.ne.s32.totalorder %s96, %s97
    %p111 = scmp.eq.s32.totalorder %s16, 1
    %p112 = por %p110, %p111
    %p114 = scmp.ne.s32.totalorder %s97, %s113
    %p115 = scmp.eq.s32.totalorder %s16, 0
    %p116 = por %p114, %p115
    %p117 = scmp.le.s32.totalorder 1, %s10
    %p118 = scmp.lt.s32.totalorder %s10, 3
    %p119 = pnand %p117, %p118
    %p120 = pneg %p119
    // Predicated region
    $region9: #{conv_bn_relu.2} parent=5 // pred_check
      _
    $region10: #{conv_bn_relu.2} parent=5 // pred_check_branch
      %122 = sbr.rel (%p119) target = $region12
    $region11: #{conv_bn_relu.2} parent=5 // pred_region
      %s123 = ssub.s32 %s10, 1
      // Predicated region
      $region13: #{conv_bn_relu.2} parent=11 // pred_check
        %p124 = pneg %p57
      $region14: #{conv_bn_relu.2} parent=11 // pred_check_branch
        %126 = sbr.rel (%p124) target = $region16
      $region15: #{conv_bn_relu.2} parent=11 // pred_region
        _
      $region16: #{conv_bn_relu.2} parent=11 // pred_fallthru
        _
    $region12: #{conv_bn_relu.2} parent=5 // pred_fallthru
      _
    %p127 = scmp.lt.s32.totalorder %s10, 2
    // Predicated region
    $region17: #{conv_bn_relu.2} parent=5 // pred_check
      %p128 = pneg %p127
    $region18: #{conv_bn_relu.2} parent=5 // pred_check_branch
      %130 = sbr.rel (%p128) target = $region20
    $region19: #{conv_bn_relu.2} parent=5 // pred_region
      // Predicated region
      $region21: #{conv_bn_relu.2} parent=19 // pred_check
        %p131 = pneg %p30
      $region22: #{conv_bn_relu.2} parent=19 // pred_check_branch
        %133 = sbr.rel (%p131) target = $region24
      $region23: #{conv_bn_relu.2} parent=19 // pred_region
        %p134 = scmp.lt.s32.totalorder %s10, 1
        %s135 = scalar_select %p134, %s10, 1
        %s136 = smul.addr %s135, 54
        %s137 = smul.addr %s136, 4
        %s138 = scalar_lea.vmem %s0, %s137
      $region24: #{conv_bn_relu.2} parent=19 // pred_fallthru
        _
    $region20: #{conv_bn_relu.2} parent=5 // pred_fallthru
      _
    %p139 = scmp.le.s32.totalorder 1, %s10
    %p140 = scmp.lt.s32.totalorder %s10, 3
    %p141 = pnand %p139, %p140
    %p142 = pneg %p141
    // Predicated region
    $region25: #{conv_bn_relu.2} parent=5 // pred_check
      _
    $region26: #{conv_bn_relu.2} parent=5 // pred_check_branch
      %144 = sbr.rel (%p141) target = $region28
    $region27: #{conv_bn_relu.2} parent=5 // pred_region
      %s145 = ssub.s32 %s10, 1
      %p146 = scmp.lt.s32.totalorder %s15, 1
      %s147 = scalar_select %p146, %s15, 1
      %s148 = smul.addr %s147, 54
      %s149 = smul.addr %s148, 4
      %s150 = scalar_lea.vmem %s0, %s149
      %p151 = pneg %p36
      %p152 = pneg %p33
      %p153 = pneg %p57
      %p154 = pneg %p54
      %p155 = pneg %p83
      %p156 = pneg %p80
      %p157 = scmp.lt.s32.totalorder %s15, 1
      %s158 = scalar_select %p157, %s15, 1
      %s159 = smul.addr %s158, 32
      %s160 = smul.addr %s159, 4
      %s161 = scalar_lea.vmem %s2, %s160
      %p162 = pneg %p109
      %p163 = pneg %p106
      %p164 = scmp.lt.s32.totalorder %s15, 1
      %s165 = scalar_select %p164, %s15, 1
      %s166 = smul.addr %s165, 8
      %s167 = scalar_lea.vmem %s3, %s166
      %p168 = scmp.lt.s32.totalorder %s15, 1
      %s169 = scalar_select %p168, %s15, 1
      %s170 = smul.addr %s169, 54
      %s171 = smul.addr %s170, 4
      %s172 = scalar_lea.vmem %s0, %s171
      %p173 = scmp.lt.s32.totalorder %s15, 1
      %s174 = scalar_select %p173, %s15, 1
      %s175 = smul.addr %s174, 32
      %s176 = smul.addr %s175, 4
      %s177 = scalar_lea.vmem %s2, %s176
      %p178 = scmp.lt.s32.totalorder %s15, 1
      %s179 = scalar_select %p178, %s15, 1
      %s180 = smul.addr %s179, 8
      %s181 = scalar_lea.vmem %s3, %s180
      %v183 = vld [vmem:[%s172] sm:$0xf]
      %v184 = vld [vmem:[%s172 + $0x4] sm:$0xf]
      %v185 = vld [vmem:[%s172 + $0x8] sm:$0x1]
      %v186 = vld [vmem:[%s172 + $0xc] sm:$0xf]
      %v187 = vld [vmem:[%s172 + $0x10] sm:$0xf]
      %v188 = vld [vmem:[%s172 + $0x14] sm:$0x1]
      %v189 = vld [vmem:[%s172 + $0x18] sm:$0xf]
      %v190 = vld [vmem:[%s172 + $0x1c] sm:$0xf]
      %v191 = vld [vmem:[%s172 + $0x20] sm:$0x1]
      %v192 = vld [vmem:[%s172 + $0x24] sm:$0xf]
      %v193 = vld [vmem:[%s172 + $0x28] sm:$0xf]
      %v194 = vld [vmem:[%s172 + $0x2c] sm:$0x1]
      %v195 = vld [vmem:[%s172 + $0x30] sm:$0xf]
      %v196 = vld [vmem:[%s172 + $0x34] sm:$0xf]
      %v197 = vld [vmem:[%s172 + $0x38] sm:$0x1]
      %v198 = vld [vmem:[%s172 + $0x3c] sm:$0xf]
      %v199 = vld [vmem:[%s172 + $0x40] sm:$0xf]
      %v200 = vld [vmem:[%s172 + $0x44] sm:$0x1]
      %v201 = vld [vmem:[%s172 + $0x48] sm:$0xf]
      %v202 = vld [vmem:[%s172 + $0x4c] sm:$0xf]
      %v203 = vld [vmem:[%s172 + $0x50] sm:$0x1]
      %v204 = vld [vmem:[%s172 + $0x54] sm:$0xf]
      %v205 = vld [vmem:[%s172 + $0x58] sm:$0xf]
      %v206 = vld [vmem:[%s172 + $0x5c] sm:$0x1]
      %v207 = vld [vmem:[%s172 + $0x60] sm:$0xf]
      %v208 = vld [vmem:[%s172 + $0x64] sm:$0xf]
      %v209 = vld [vmem:[%s172 + $0x68] sm:$0x1]
      %v210 = vld [vmem:[%s172 + $0x6c] sm:$0xf]
      %v211 = vld [vmem:[%s172 + $0x70] sm:$0xf]
      %v212 = vld [vmem:[%s172 + $0x74] sm:$0x1]
      %v213 = vld [vmem:[%s172 + $0x78] sm:$0xf]
      %v214 = vld [vmem:[%s172 + $0x7c] sm:$0xf]
      %v215 = vld [vmem:[%s172 + $0x80] sm:$0x1]
      %v216 = vld [vmem:[%s172 + $0x84] sm:$0xf]
      %v217 = vld [vmem:[%s172 + $0x88] sm:$0xf]
      %v218 = vld [vmem:[%s172 + $0x8c] sm:$0x1]
      %v219 = vld [vmem:[%s172 + $0x90] sm:$0xf]
      %v220 = vld [vmem:[%s172 + $0x94] sm:$0xf]
      %v221 = vld [vmem:[%s172 + $0x98] sm:$0x1]
      %v222 = vld [vmem:[%s172 + $0x9c] sm:$0xf]
      %v223 = vld [vmem:[%s172 + $0xa0] sm:$0xf]
      %v224 = vld [vmem:[%s172 + $0xa4] sm:$0x1]
      %v225 = vld [vmem:[%s172 + $0xa8] sm:$0xf]
      %v226 = vld [vmem:[%s172 + $0xac] sm:$0xf]
      %v227 = vld [vmem:[%s172 + $0xb0] sm:$0x1]
      %v228 = vld [vmem:[%s172 + $0xb4] sm:$0xf]
      %v229 = vld [vmem:[%s172 + $0xb8] sm:$0xf]
      %v230 = vld [vmem:[%s172 + $0xbc] sm:$0x1]
      %v231 = vld [vmem:[%s172 + $0xc0] sm:$0xf]
      %v232 = vld [vmem:[%s172 + $0xc4] sm:$0xf]
      %v233 = vld [vmem:[%s172 + $0xc8] sm:$0x1]
      %v234 = vld [vmem:[%s172 + $0xcc] sm:$0xf]
      %v235 = vld [vmem:[%s172 + $0xd0] sm:$0xf]
      %v236 = vld [vmem:[%s172 + $0xd4] sm:$0x1]
      %v237 = vld [vmem:[%s1] sm:$0x3]
      %vm238 = vsmask.f32 3328
      %vm239 = vsmask.f32 7440
      %vm240 = vmor %vm238, %vm239
      %v242 = vshrl.u32 %v183, 16
      %v244 = vrot.slane %v242, 4
      %v245 = vshll.u32 %v183, 16
      %v247 = vrot.slane %v245, 5
      %v248 = vor.u32 %v244, %v247
      %v249 = vrot.slane %v248, 4
      %v251 = vshll.u32 %v184, 16
      %v253 = vrot.slane %v251, 5
      %v254 = vsel %vm240, %v249, %v253
      %v255 = vshrl.u32 %v184, 16
      %v257 = vrot.slane %v255, 4
      %v258 = vor.u32 %v257, %v253
      %v259 = vrot.slane %v258, 4
      %v261 = vshll.u32 %v185, 16
      %v263 = vrot.slane %v261, 5
      %v264 = vsel %vm240, %v259, %v263
      %v266 = vshrl.u32 %v186, 16
      %v268 = vrot.slane %v266, 4
      %v269 = vshll.u32 %v186, 16
      %v271 = vrot.slane %v269, 5
      %v272 = vor.u32 %v268, %v271
      %v273 = vrot.slane %v272, 4
      %v275 = vshll.u32 %v187, 16
      %v277 = vrot.slane %v275, 5
      %v278 = vsel %vm240, %v273, %v277
      %v279 = vshrl.u32 %v187, 16
      %v281 = vrot.slane %v279, 4
      %v282 = vor.u32 %v281, %v277
      %v283 = vrot.slane %v282, 4
      %v285 = vshll.u32 %v188, 16
      %v287 = vrot.slane %v285, 5
      %v288 = vsel %vm240, %v283, %v287
      %v290 = vshrl.u32 %v189, 16
      %v292 = vrot.slane %v290, 4
      %v293 = vshll.u32 %v189, 16
      %v295 = vrot.slane %v293, 5
      %v296 = vor.u32 %v292, %v295
      %v297 = vrot.slane %v296, 4
      %v299 = vshll.u32 %v190, 16
      %v301 = vrot.slane %v299, 5
      %v302 = vsel %vm240, %v297, %v301
      %v303 = vshrl.u32 %v190, 16
      %v305 = vrot.slane %v303, 4
      %v306 = vor.u32 %v305, %v301
      %v307 = vrot.slane %v306, 4
      %v309 = vshll.u32 %v191, 16
      %v311 = vrot.slane %v309, 5
      %v312 = vsel %vm240, %v307, %v311
      %v314 = vshrl.u32 %v192, 16
      %v316 = vrot.slane %v314, 4
      %v317 = vshll.u32 %v192, 16
      %v319 = vrot.slane %v317, 5
      %v320 = vor.u32 %v316, %v319
      %v321 = vrot.slane %v320, 4
      %v323 = vshll.u32 %v193, 16
      %v325 = vrot.slane %v323, 5
      %v326 = vsel %vm240, %v321, %v325
      %v327 = vshrl.u32 %v193, 16
      %v329 = vrot.slane %v327, 4
      %v330 = vor.u32 %v329, %v325
      %v331 = vrot.slane %v330, 4
      %v333 = vshll.u32 %v194, 16
      %v335 = vrot.slane %v333, 5
      %v336 = vsel %vm240, %v331, %v335
      %v338 = vshrl.u32 %v195, 16
      %v340 = vrot.slane %v338, 4
      %v341 = vshll.u32 %v195, 16
      %v343 = vrot.slane %v341, 5
      %v344 = vor.u32 %v340, %v343
      %v345 = vrot.slane %v344, 4
      %v347 = vshll.u32 %v196, 16
      %v349 = vrot.slane %v347, 5
      %v350 = vsel %vm240, %v345, %v349
      %v351 = vshrl.u32 %v196, 16
      %v353 = vrot.slane %v351, 4
      %v354 = vor.u32 %v353, %v349
      %v355 = vrot.slane %v354, 4
      %v357 = vshll.u32 %v197, 16
      %v359 = vrot.slane %v357, 5
      %v360 = vsel %vm240, %v355, %v359
      %v362 = vshrl.u32 %v198, 16
      %v364 = vrot.slane %v362, 4
      %v365 = vshll.u32 %v198, 16
      %v367 = vrot.slane %v365, 5
      %v368 = vor.u32 %v364, %v367
      %v369 = vrot.slane %v368, 4
      %v371 = vshll.u32 %v199, 16
      %v373 = vrot.slane %v371, 5
      %v374 = vsel %vm240, %v369, %v373
      %v375 = vshrl.u32 %v199, 16
      %v377 = vrot.slane %v375, 4
      %v378 = vor.u32 %v377, %v373
      %v379 = vrot.slane %v378, 4
      %v381 = vshll.u32 %v200, 16
      %v383 = vrot.slane %v381, 5
      %v384 = vsel %vm240, %v379, %v383
      %v386 = vshrl.u32 %v201, 16
      %v388 = vrot.slane %v386, 4
      %v389 = vshll.u32 %v201, 16
      %v391 = vrot.slane %v389, 5
      %v392 = vor.u32 %v388, %v391
      %v393 = vrot.slane %v392, 4
      %v395 = vshll.u32 %v202, 16
      %v397 = vrot.slane %v395, 5
      %v398 = vsel %vm240, %v393, %v397
      %v399 = vshrl.u32 %v202, 16
      %v401 = vrot.slane %v399, 4
      %v402 = vor.u32 %v401, %v397
      %v403 = vrot.slane %v402, 4
      %v405 = vshll.u32 %v203, 16
      %v407 = vrot.slane %v405, 5
      %v408 = vsel %vm240, %v403, %v407
      %v410 = vshrl.u32 %v204, 16
      %v412 = vrot.slane %v410, 4
      %v413 = vshll.u32 %v204, 16
      %v415 = vrot.slane %v413, 5
      %v416 = vor.u32 %v412, %v415
      %v417 = vrot.slane %v416, 4
      %v419 = vshll.u32 %v205, 16
      %v421 = vrot.slane %v419, 5
      %v422 = vsel %vm240, %v417, %v421
      %v423 = vshrl.u32 %v205, 16
      %v425 = vrot.slane %v423, 4
      %v426 = vor.u32 %v425, %v421
      %v427 = vrot.slane %v426, 4
      %v429 = vshll.u32 %v206, 16
      %v431 = vrot.slane %v429, 5
      %v432 = vsel %vm240, %v427, %v431
      %v434 = vshrl.u32 %v207, 16
      %v436 = vrot.slane %v434, 4
      %v437 = vshll.u32 %v207, 16
      %v439 = vrot.slane %v437, 5
      %v440 = vor.u32 %v436, %v439
      %v441 = vrot.slane %v440, 4
      %v443 = vshll.u32 %v208, 16
      %v445 = vrot.slane %v443, 5
      %v446 = vsel %vm240, %v441, %v445
      %v447 = vshrl.u32 %v208, 16
      %v449 = vrot.slane %v447, 4
      %v450 = vor.u32 %v449, %v445
      %v451 = vrot.slane %v450, 4
      %v453 = vshll.u32 %v209, 16
      %v455 = vrot.slane %v453, 5
      %v456 = vsel %vm240, %v451, %v455
      %v458 = vshrl.u32 %v210, 16
      %v460 = vrot.slane %v458, 4
      %v461 = vshll.u32 %v210, 16
      %v463 = vrot.slane %v461, 5
      %v464 = vor.u32 %v460, %v463
      %v465 = vrot.slane %v464, 4
      %v467 = vshll.u32 %v211, 16
      %v469 = vrot.slane %v467, 5
      %v470 = vsel %vm240, %v465, %v469
      %v471 = vshrl.u32 %v211, 16
      %v473 = vrot.slane %v471, 4
      %v474 = vor.u32 %v473, %v469
      %v475 = vrot.slane %v474, 4
      %v477 = vshll.u32 %v212, 16
      %v479 = vrot.slane %v477, 5
      %v480 = vsel %vm240, %v475, %v479
      %v482 = vshrl.u32 %v213, 16
      %v484 = vrot.slane %v482, 4
      %v485 = vshll.u32 %v213, 16
      %v487 = vrot.slane %v485, 5
      %v488 = vor.u32 %v484, %v487
      %v489 = vrot.slane %v488, 4
      %v491 = vshll.u32 %v214, 16
      %v493 = vrot.slane %v491, 5
      %v494 = vsel %vm240, %v489, %v493
      %v495 = vshrl.u32 %v214, 16
      %v497 = vrot.slane %v495, 4
      %v498 = vor.u32 %v497, %v493
      %v499 = vrot.slane %v498, 4
      %v501 = vshll.u32 %v215, 16
      %v503 = vrot.slane %v501, 5
      %v504 = vsel %vm240, %v499, %v503
      %v506 = vshrl.u32 %v216, 16
      %v508 = vrot.slane %v506, 4
      %v509 = vshll.u32 %v216, 16
      %v511 = vrot.slane %v509, 5
      %v512 = vor.u32 %v508, %v511
      %v513 = vrot.slane %v512, 4
      %v515 = vshll.u32 %v217, 16
      %v517 = vrot.slane %v515, 5
      %v518 = vsel %vm240, %v513, %v517
      %v519 = vshrl.u32 %v217, 16
      %v521 = vrot.slane %v519, 4
      %v522 = vor.u32 %v521, %v517
      %v523 = vrot.slane %v522, 4
      %v525 = vshll.u32 %v218, 16
      %v527 = vrot.slane %v525, 5
      %v528 = vsel %vm240, %v523, %v527
      %v530 = vshrl.u32 %v219, 16
      %v532 = vrot.slane %v530, 4
      %v533 = vshll.u32 %v219, 16
      %v535 = vrot.slane %v533, 5
      %v536 = vor.u32 %v532, %v535
      %v537 = vrot.slane %v536, 4
      %v539 = vshll.u32 %v220, 16
      %v541 = vrot.slane %v539, 5
      %v542 = vsel %vm240, %v537, %v541
      %v543 = vshrl.u32 %v220, 16
      %v545 = vrot.slane %v543, 4
      %v546 = vor.u32 %v545, %v541
      %v547 = vrot.slane %v546, 4
      %v549 = vshll.u32 %v221, 16
      %v551 = vrot.slane %v549, 5
      %v552 = vsel %vm240, %v547, %v551
      %v554 = vshrl.u32 %v222, 16
      %v556 = vrot.slane %v554, 4
      %v557 = vshll.u32 %v222, 16
      %v559 = vrot.slane %v557, 5
      %v560 = vor.u32 %v556, %v559
      %v561 = vrot.slane %v560, 4
      %v563 = vshll.u32 %v223, 16
      %v565 = vrot.slane %v563, 5
      %v566 = vsel %vm240, %v561, %v565
      %v567 = vshrl.u32 %v223, 16
      %v569 = vrot.slane %v567, 4
      %v570 = vor.u32 %v569, %v565
      %v571 = vrot.slane %v570, 4
      %v573 = vshll.u32 %v224, 16
      %v575 = vrot.slane %v573, 5
      %v576 = vsel %vm240, %v571, %v575
      %v578 = vshrl.u32 %v225, 16
      %v580 = vrot.slane %v578, 4
      %v581 = vshll.u32 %v225, 16
      %v583 = vrot.slane %v581, 5
      %v584 = vor.u32 %v580, %v583
      %v585 = vrot.slane %v584, 4
      %v587 = vshll.u32 %v226, 16
      %v589 = vrot.slane %v587, 5
      %v590 = vsel %vm240, %v585, %v589
      %v591 = vshrl.u32 %v226, 16
      %v593 = vrot.slane %v591, 4
      %v594 = vor.u32 %v593, %v589
      %v595 = vrot.slane %v594, 4
      %v597 = vshll.u32 %v227, 16
      %v599 = vrot.slane %v597, 5
      %v600 = vsel %vm240, %v595, %v599
      %v602 = vshrl.u32 %v228, 16
      %v604 = vrot.slane %v602, 4
      %v605 = vshll.u32 %v228, 16
      %v607 = vrot.slane %v605, 5
      %v608 = vor.u32 %v604, %v607
      %v609 = vrot.slane %v608, 4
      %v611 = vshll.u32 %v229, 16
      %v613 = vrot.slane %v611, 5
      %v614 = vsel %vm240, %v609, %v613
      %v615 = vshrl.u32 %v229, 16
      %v617 = vrot.slane %v615, 4
      %v618 = vor.u32 %v617, %v613
      %v619 = vrot.slane %v618, 4
      %v621 = vshll.u32 %v230, 16
      %v623 = vrot.slane %v621, 5
      %v624 = vsel %vm240, %v619, %v623
      %s625 = scalar_lea.vmem %s1, 2
      %v626 = vld [vmem:[%s625] sm:$0x3]
      %v627 = vunpack.c.l.b16 %v254
      %v628 = vunpack.c.l.b16 %v264
      %v629 = vunpack.c.l.b16 %v278
      %v630 = vunpack.c.l.b16 %v288
      %v631 = vunpack.c.l.b16 %v302
      %v632 = vunpack.c.l.b16 %v312
      %v633 = vunpack.c.l.b16 %v326
      %v634 = vunpack.c.l.b16 %v336
      %v635 = vunpack.c.l.b16 %v350
      %v636 = vunpack.c.l.b16 %v360
      %v637 = vunpack.c.l.b16 %v374
      %v638 = vunpack.c.l.b16 %v384
      %v639 = vunpack.c.l.b16 %v398
      %v640 = vunpack.c.l.b16 %v408
      %v641 = vunpack.c.l.b16 %v422
      %v642 = vunpack.c.l.b16 %v432
      %v643 = vunpack.c.l.b16 %v446
      %v644 = vunpack.c.l.b16 %v456
      %v645 = vunpack.c.l.b16 %v470
      %v646 = vunpack.c.l.b16 %v480
      %v647 = vunpack.c.l.b16 %v494
      %v648 = vunpack.c.l.b16 %v504
      %v649 = vunpack.c.l.b16 %v518
      %v650 = vunpack.c.l.b16 %v528
      %v651 = vunpack.c.l.b16 %v542
      %v652 = vunpack.c.l.b16 %v552
      %v653 = vunpack.c.l.b16 %v566
      %v654 = vunpack.c.l.b16 %v576
      %v655 = vunpack.c.l.b16 %v590
      %v656 = vunpack.c.l.b16 %v600
      %v657 = vunpack.c.l.b16 %v614
      %v658 = vunpack.c.l.b16 %v624
      %v659 = vpack.c.b16 %v628, %v627
      %v660 = vpack.c.b16 %v630, %v629
      %v661 = vpack.c.b16 %v632, %v631
      %v662 = vpack.c.b16 %v634, %v633
      %v663 = vpack.c.b16 %v636, %v635
      %v664 = vpack.c.b16 %v638, %v637
      %v665 = vpack.c.b16 %v640, %v639
      %v666 = vpack.c.b16 %v642, %v641
      %v667 = vpack.c.b16 %v644, %v643
      %v668 = vpack.c.b16 %v646, %v645
      %v669 = vpack.c.b16 %v648, %v647
      %v670 = vpack.c.b16 %v650, %v649
      %v671 = vpack.c.b16 %v652, %v651
      %v672 = vpack.c.b16 %v654, %v653
      %v673 = vpack.c.b16 %v656, %v655
      %v674 = vpack.c.b16 %v658, %v657
      %vm675 = vcmask 31744
      %v677 = vsel %vm675, %v659, 0
      %v680 = vsel %vm675, %v660, 0
      %v683 = vsel %vm675, %v661, 0
      %v686 = vsel %vm675, %v662, 0
      %v689 = vsel %vm675, %v663, 0
      %v692 = vsel %vm675, %v664, 0
      %v695 = vsel %vm675, %v665, 0
      %v698 = vsel %vm675, %v666, 0
      %v701 = vsel %vm675, %v667, 0
      %v704 = vsel %vm675, %v668, 0
      %v707 = vsel %vm675, %v669, 0
      %v710 = vsel %vm675, %v670, 0
      %v713 = vsel %vm675, %v671, 0
      %v716 = vsel %vm675, %v672, 0
      %v719 = vsel %vm675, %v673, 0
      %v722 = vsel %vm675, %v674, 0
      %vm724 = vcmask 1041408
      %v726 = vsel %vm724, %v626, 0
      %728 = vmatprep.subr.bf16.mxu0 0
      %729 = vmatpush1.bf16.msra.mxu0 0
      %730 = vmatprep.subr.bf16.mxu0 0
      %731 = vmatpush1.bf16.msra.mxu0 0
      %732 = vmatprep.subr.bf16.mxu0 0
      %733 = vmatpush1.bf16.msra.mxu0 0
      %734 = vmatprep.subr.bf16.mxu0 0
      %735 = vmatpush1.bf16.msra.mxu0 0
      %736 = vmatprep.subr.bf16.mxu0 0
      %737 = vmatpush1.bf16.msra.mxu0 0
      %738 = vmatprep.subr.bf16.mxu0 0
      %739 = vmatpush1.bf16.msra.mxu0 0
      %740 = vmatprep.subr.bf16.mxu0 0
      %741 = vmatpush1.bf16.msra.mxu0 0
      %742 = vmatprep.subr.bf16.mxu0 0
      %743 = vmatpush1.bf16.msra.mxu0 %v726
      %744 = vmatprep.subr.bf16.mxu0 0
      %745 = vmatpush2.bf16.msra.mxu0 0
      %746 = vmatprep.subr.bf16.mxu0 0
      %747 = vmatpush2.bf16.msra.mxu0 0
      %748 = vmatprep.subr.bf16.mxu0 0
      %749 = vmatpush2.bf16.msra.mxu0 0
      %750 = vmatprep.subr.bf16.mxu0 0
      %751 = vmatpush2.bf16.msra.mxu0 0
      %752 = vmatprep.subr.bf16.mxu0 0
      %753 = vmatpush2.bf16.msra.mxu0 0
      %754 = vmatprep.subr.bf16.mxu0 0
      %755 = vmatpush2.bf16.msra.mxu0 0
      %756 = vmatprep.subr.bf16.mxu0 0
      %757 = vmatpush2.bf16.msra.mxu0 0
      %758 = vmatprep.subr.bf16.mxu0 0
      %759 = vmatpush2.bf16.msra.mxu0 0
      %760 = vmatprep.mubr.bf16.mxu0 0
      %761 = vmatmul.mubr.bf16.gmra.mxu0 %v677
      %v762 = vpop.f32.mrf.mxu0
      %v763 = vadd.f32 0.0, %v762
      %v764 = vpop.f32.mrf.mxu0
      %v765 = vpop.f32.mrf.mxu0
      %v766 = vadd.f32 0.0, %v765
      %v767 = vpop.f32.mrf.mxu0
      %768 = vmatprep.mubr.bf16.mxu0 0
      %769 = vmatmul.mubr.bf16.gmra.mxu0 %v680
      %v770 = vpop.f32.mrf.mxu0
      %v771 = vadd.f32 0.0, %v770
      %v772 = vpop.f32.mrf.mxu0
      %v773 = vpop.f32.mrf.mxu0
      %v774 = vadd.f32 0.0, %v773
      %v775 = vpop.f32.mrf.mxu0
      %776 = vmatprep.mubr.bf16.mxu0 0
      %777 = vmatmul.mubr.bf16.gmra.mxu0 %v683
      %v778 = vpop.f32.mrf.mxu0
      %v779 = vadd.f32 0.0, %v778
      %v780 = vpop.f32.mrf.mxu0
      %v781 = vpop.f32.mrf.mxu0
      %v782 = vadd.f32 0.0, %v781
      %v783 = vpop.f32.mrf.mxu0
      %784 = vmatprep.mubr.bf16.mxu0 0
      %785 = vmatmul.mubr.bf16.gmra.mxu0 %v686
      %v786 = vpop.f32.mrf.mxu0
      %v787 = vadd.f32 0.0, %v786
      %v788 = vpop.f32.mrf.mxu0
      %v789 = vpop.f32.mrf.mxu0
      %v790 = vadd.f32 0.0, %v789
      %v791 = vpop.f32.mrf.mxu0
      %792 = vmatprep.mubr.bf16.mxu0 0
      %793 = vmatmul.mubr.bf16.gmra.mxu0 %v689
      %v794 = vpop.f32.mrf.mxu0
      %v795 = vadd.f32 0.0, %v794
      %v796 = vpop.f32.mrf.mxu0
      %v797 = vpop.f32.mrf.mxu0
      %v798 = vadd.f32 0.0, %v797
      %v799 = vpop.f32.mrf.mxu0
      %800 = vmatprep.mubr.bf16.mxu0 0
      %801 = vmatmul.mubr.bf16.gmra.mxu0 %v692
      %v802 = vpop.f32.mrf.mxu0
      %v803 = vadd.f32 0.0, %v802
      %v804 = vpop.f32.mrf.mxu0
      %v805 = vpop.f32.mrf.mxu0
      %v806 = vadd.f32 0.0, %v805
      %v807 = vpop.f32.mrf.mxu0
      %808 = vmatprep.mubr.bf16.mxu0 0
      %809 = vmatmul.mubr.bf16.gmra.mxu0 %v695
      %v810 = vpop.f32.mrf.mxu0
      %v811 = vadd.f32 0.0, %v810
      %v812 = vpop.f32.mrf.mxu0
      %v813 = vpop.f32.mrf.mxu0
      %v814 = vadd.f32 0.0, %v813
      %v815 = vpop.f32.mrf.mxu0
      %816 = vmatprep.mubr.bf16.mxu0 0
      %817 = vmatmul.mubr.bf16.gmra.mxu0 %v698
      %v818 = vpop.f32.mrf.mxu0
      %v819 = vadd.f32 0.0, %v818
      %v820 = vpop.f32.mrf.mxu0
      %v821 = vpop.f32.mrf.mxu0
      %v822 = vadd.f32 0.0, %v821
      %v823 = vpop.f32.mrf.mxu0
      %824 = vmatprep.mubr.bf16.mxu0 0
      %825 = vmatmul.mubr.bf16.gmra.mxu0 %v701
      %v826 = vpop.f32.mrf.mxu0
      %v827 = vadd.f32 0.0, %v826
      %v828 = vpop.f32.mrf.mxu0
      %v829 = vpop.f32.mrf.mxu0
      %v830 = vadd.f32 0.0, %v829
      %v831 = vpop.f32.mrf.mxu0
      %832 = vmatprep.mubr.bf16.mxu0 0
      %833 = vmatmul.mubr.bf16.gmra.mxu0 %v704
      %v834 = vpop.f32.mrf.mxu0
      %v835 = vadd.f32 0.0, %v834
      %v836 = vpop.f32.mrf.mxu0
      %v837 = vpop.f32.mrf.mxu0
      %v838 = vadd.f32 0.0, %v837
      %v839 = vpop.f32.mrf.mxu0
      %840 = vmatprep.mubr.bf16.mxu0 0
      %841 = vmatmul.mubr.bf16.gmra.mxu0 %v707
      %v842 = vpop.f32.mrf.mxu0
      %v843 = vadd.f32 0.0, %v842
      %v844 = vpop.f32.mrf.mxu0
      %v845 = vpop.f32.mrf.mxu0
      %v846 = vadd.f32 0.0, %v845
      %v847 = vpop.f32.mrf.mxu0
      %848 = vmatprep.mubr.bf16.mxu0 0
      %849 = vmatmul.mubr.bf16.gmra.mxu0 %v710
      %v850 = vpop.f32.mrf.mxu0
      %v851 = vadd.f32 0.0, %v850
      %v852 = vpop.f32.mrf.mxu0
      %v853 = vpop.f32.mrf.mxu0
      %v854 = vadd.f32 0.0, %v853
      %v855 = vpop.f32.mrf.mxu0
      %856 = vmatprep.mubr.bf16.mxu0 0
      %857 = vmatmul.mubr.bf16.gmra.mxu0 %v713
      %v858 = vpop.f32.mrf.mxu0
      %v859 = vadd.f32 0.0, %v858
      %v860 = vpop.f32.mrf.mxu0
      %v861 = vpop.f32.mrf.mxu0
      %v862 = vadd.f32 0.0, %v861
      %v863 = vpop.f32.mrf.mxu0
      %864 = vmatprep.mubr.bf16.mxu0 0
      %865 = vmatmul.mubr.bf16.gmra.mxu0 %v716
      %v866 = vpop.f32.mrf.mxu0
      %v867 = vadd.f32 0.0, %v866
      %v868 = vpop.f32.mrf.mxu0
      %v869 = vpop.f32.mrf.mxu0
      %v870 = vadd.f32 0.0, %v869
      %v871 = vpop.f32.mrf.mxu0
      %872 = vmatprep.mubr.bf16.mxu0 0
      %873 = vmatmul.mubr.bf16.gmra.mxu0 %v719
      %v874 = vpop.f32.mrf.mxu0
      %v875 = vadd.f32 0.0, %v874
      %v876 = vpop.f32.mrf.mxu0
      %v877 = vpop.f32.mrf.mxu0
      %v878 = vadd.f32 0.0, %v877
      %v879 = vpop.f32.mrf.mxu0
      %880 = vmatprep.mubr.bf16.mxu0 0
      %881 = vmatmul.mubr.bf16.gmra.mxu0 %v722
      %v882 = vpop.f32.mrf.mxu0
      %v883 = vadd.f32 0.0, %v882
      %v884 = vpop.f32.mrf.mxu0
      %v885 = vpop.f32.mrf.mxu0
      %v886 = vadd.f32 0.0, %v885
      %v887 = vpop.f32.mrf.mxu0
      %888 = vdwg.mxu0
      %v921 = vunpack.c.l.b16 %v183
      %v922 = vunpack.c.l.b16 %v184
      %v923 = vunpack.c.l.b16 %v186
      %v924 = vunpack.c.l.b16 %v187
      %v925 = vunpack.c.l.b16 %v189
      %v926 = vunpack.c.l.b16 %v190
      %v927 = vunpack.c.l.b16 %v192
      %v928 = vunpack.c.l.b16 %v193
      %v929 = vunpack.c.l.b16 %v195
      %v930 = vunpack.c.l.b16 %v196
      %v931 = vunpack.c.l.b16 %v198
      %v932 = vunpack.c.l.b16 %v199
      %v933 = vunpack.c.l.b16 %v201
      %v934 = vunpack.c.l.b16 %v202
      %v935 = vunpack.c.l.b16 %v204
      %v936 = vunpack.c.l.b16 %v205
      %v937 = vunpack.c.l.b16 %v207
      %v938 = vunpack.c.l.b16 %v208
      %v939 = vunpack.c.l.b16 %v210
      %v940 = vunpack.c.l.b16 %v211
      %v941 = vunpack.c.l.b16 %v213
      %v942 = vunpack.c.l.b16 %v214
      %v943 = vunpack.c.l.b16 %v216
      %v944 = vunpack.c.l.b16 %v217
      %v945 = vunpack.c.l.b16 %v219
      %v946 = vunpack.c.l.b16 %v220
      %v947 = vunpack.c.l.b16 %v222
      %v948 = vunpack.c.l.b16 %v223
      %v949 = vunpack.c.l.b16 %v225
      %v950 = vunpack.c.l.b16 %v226
      %v951 = vunpack.c.l.b16 %v228
      %v952 = vunpack.c.l.b16 %v229
      %v953 = vpack.c.b16 %v922, %v921
      %v954 = vpack.c.b16 %v924, %v923
      %v955 = vpack.c.b16 %v926, %v925
      %v956 = vpack.c.b16 %v928, %v927
      %v957 = vpack.c.b16 %v930, %v929
      %v958 = vpack.c.b16 %v932, %v931
      %v959 = vpack.c.b16 %v934, %v933
      %v960 = vpack.c.b16 %v936, %v935
      %v961 = vpack.c.b16 %v938, %v937
      %v962 = vpack.c.b16 %v940, %v939
      %v963 = vpack.c.b16 %v942, %v941
      %v964 = vpack.c.b16 %v944, %v943
      %v965 = vpack.c.b16 %v946, %v945
      %v966 = vpack.c.b16 %v948, %v947
      %v967 = vpack.c.b16 %v950, %v949
      %v968 = vpack.c.b16 %v952, %v951
      %v970 = vsel %vm675, %v953, 0
      %v973 = vsel %vm675, %v954, 0
      %v976 = vsel %vm675, %v955, 0
      %v979 = vsel %vm675, %v956, 0
      %v982 = vsel %vm675, %v957, 0
      %v985 = vsel %vm675, %v958, 0
      %v988 = vsel %vm675, %v959, 0
      %v991 = vsel %vm675, %v960, 0
      %v994 = vsel %vm675, %v961, 0
      %v997 = vsel %vm675, %v962, 0
      %v1000 = vsel %vm675, %v963, 0
      %v1003 = vsel %vm675, %v964, 0
      %v1006 = vsel %vm675, %v965, 0
      %v1009 = vsel %vm675, %v966, 0
      %v1012 = vsel %vm675, %v967, 0
      %v1015 = vsel %vm675, %v968, 0
      %v1018 = vsel %vm724, %v237, 0
      %1020 = vmatprep.subr.bf16.mxu0 0
      %1021 = vmatpush1.bf16.msra.mxu0 0
      %1022 = vmatprep.subr.bf16.mxu0 0
      %1023 = vmatpush1.bf16.msra.mxu0 0
      %1024 = vmatprep.subr.bf16.mxu0 0
      %1025 = vmatpush1.bf16.msra.mxu0 0
      %1026 = vmatprep.subr.bf16.mxu0 0
      %1027 = vmatpush1.bf16.msra.mxu0 0
      %1028 = vmatprep.subr.bf16.mxu0 0
      %1029 = vmatpush1.bf16.msra.mxu0 0
      %1030 = vmatprep.subr.bf16.mxu0 0
      %1031 = vmatpush1.bf16.msra.mxu0 0
      %1032 = vmatprep.subr.bf16.mxu0 0
      %1033 = vmatpush1.bf16.msra.mxu0 0
      %1034 = vmatprep.subr.bf16.mxu0 0
      %1035 = vmatpush1.bf16.msra.mxu0 %v1018
      %1036 = vmatprep.subr.bf16.mxu0 0
      %1037 = vmatpush2.bf16.msra.mxu0 0
      %1038 = vmatprep.subr.bf16.mxu0 0
      %1039 = vmatpush2.bf16.msra.mxu0 0
      %1040 = vmatprep.subr.bf16.mxu0 0
      %1041 = vmatpush2.bf16.msra.mxu0 0
      %1042 = vmatprep.subr.bf16.mxu0 0
      %1043 = vmatpush2.bf16.msra.mxu0 0
      %1044 = vmatprep.subr.bf16.mxu0 0
      %1045 = vmatpush2.bf16.msra.mxu0 0
      %1046 = vmatprep.subr.bf16.mxu0 0
      %1047 = vmatpush2.bf16.msra.mxu0 0
      %1048 = vmatprep.subr.bf16.mxu0 0
      %1049 = vmatpush2.bf16.msra.mxu0 0
      %1050 = vmatprep.subr.bf16.mxu0 0
      %1051 = vmatpush2.bf16.msra.mxu0 0
      %1052 = vmatprep.mubr.bf16.mxu0 0
      %1053 = vmatmul.mubr.bf16.gmra.mxu0 %v970
      %v1054 = vpop.f32.mrf.mxu0
      %v1055 = vadd.f32 %v763, %v1054
      %v1056 = vpop.f32.mrf.mxu0
      %v1057 = vpop.f32.mrf.mxu0
      %v1058 = vadd.f32 %v766, %v1057
      %v1059 = vpop.f32.mrf.mxu0
      %1060 = vmatprep.mubr.bf16.mxu0 0
      %1061 = vmatmul.mubr.bf16.gmra.mxu0 %v973
      %v1062 = vpop.f32.mrf.mxu0
      %v1063 = vadd.f32 %v771, %v1062
      %v1064 = vpop.f32.mrf.mxu0
      %v1065 = vpop.f32.mrf.mxu0
      %v1066 = vadd.f32 %v774, %v1065
      %v1067 = vpop.f32.mrf.mxu0
      %1068 = vmatprep.mubr.bf16.mxu0 0
      %1069 = vmatmul.mubr.bf16.gmra.mxu0 %v976
      %v1070 = vpop.f32.mrf.mxu0
      %v1071 = vadd.f32 %v779, %v1070
      %v1072 = vpop.f32.mrf.mxu0
      %v1073 = vpop.f32.mrf.mxu0
      %v1074 = vadd.f32 %v782, %v1073
      %v1075 = vpop.f32.mrf.mxu0
      %1076 = vmatprep.mubr.bf16.mxu0 0
      %1077 = vmatmul.mubr.bf16.gmra.mxu0 %v979
      %v1078 = vpop.f32.mrf.mxu0
      %v1079 = vadd.f32 %v787, %v1078
      %v1080 = vpop.f32.mrf.mxu0
      %v1081 = vpop.f32.mrf.mxu0
      %v1082 = vadd.f32 %v790, %v1081
      %v1083 = vpop.f32.mrf.mxu0
      %1084 = vmatprep.mubr.bf16.mxu0 0
      %1085 = vmatmul.mubr.bf16.gmra.mxu0 %v982
      %v1086 = vpop.f32.mrf.mxu0
      %v1087 = vadd.f32 %v795, %v1086
      %v1088 = vpop.f32.mrf.mxu0
      %v1089 = vpop.f32.mrf.mxu0
      %v1090 = vadd.f32 %v798, %v1089
      %v1091 = vpop.f32.mrf.mxu0
      %1092 = vmatprep.mubr.bf16.mxu0 0
      %1093 = vmatmul.mubr.bf16.gmra.mxu0 %v985
      %v1094 = vpop.f32.mrf.mxu0
      %v1095 = vadd.f32 %v803, %v1094
      %v1096 = vpop.f32.mrf.mxu0
      %v1097 = vpop.f32.mrf.mxu0
      %v1098 = vadd.f32 %v806, %v1097
      %v1099 = vpop.f32.mrf.mxu0
      %1100 = vmatprep.mubr.bf16.mxu0 0
      %1101 = vmatmul.mubr.bf16.gmra.mxu0 %v988
      %v1102 = vpop.f32.mrf.mxu0
      %v1103 = vadd.f32 %v811, %v1102
      %v1104 = vpop.f32.mrf.mxu0
      %v1105 = vpop.f32.mrf.mxu0
      %v1106 = vadd.f32 %v814, %v1105
      %v1107 = vpop.f32.mrf.mxu0
      %1108 = vmatprep.mubr.bf16.mxu0 0
      %1109 = vmatmul.mubr.bf16.gmra.mxu0 %v991
      %v1110 = vpop.f32.mrf.mxu0
      %v1111 = vadd.f32 %v819, %v1110
      %v1112 = vpop.f32.mrf.mxu0
      %v1113 = vpop.f32.mrf.mxu0
      %v1114 = vadd.f32 %v822, %v1113
      %v1115 = vpop.f32.mrf.mxu0
      %1116 = vmatprep.mubr.bf16.mxu0 0
      %1117 = vmatmul.mubr.bf16.gmra.mxu0 %v994
      %v1118 = vpop.f32.mrf.mxu0
      %v1119 = vadd.f32 %v827, %v1118
      %v1120 = vpop.f32.mrf.mxu0
      %v1121 = vpop.f32.mrf.mxu0
      %v1122 = vadd.f32 %v830, %v1121
      %v1123 = vpop.f32.mrf.mxu0
      %1124 = vmatprep.mubr.bf16.mxu0 0
      %1125 = vmatmul.mubr.bf16.gmra.mxu0 %v997
      %v1126 = vpop.f32.mrf.mxu0
      %v1127 = vadd.f32 %v835, %v1126
      %v1128 = vpop.f32.mrf.mxu0
      %v1129 = vpop.f32.mrf.mxu0
      %v1130 = vadd.f32 %v838, %v1129
      %v1131 = vpop.f32.mrf.mxu0
      %1132 = vmatprep.mubr.bf16.mxu0 0
      %1133 = vmatmul.mubr.bf16.gmra.mxu0 %v1000
      %v1134 = vpop.f32.mrf.mxu0
      %v1135 = vadd.f32 %v843, %v1134
      %v1136 = vpop.f32.mrf.mxu0
      %v1137 = vpop.f32.mrf.mxu0
      %v1138 = vadd.f32 %v846, %v1137
      %v1139 = vpop.f32.mrf.mxu0
      %1140 = vmatprep.mubr.bf16.mxu0 0
      %1141 = vmatmul.mubr.bf16.gmra.mxu0 %v1003
      %v1142 = vpop.f32.mrf.mxu0
      %v1143 = vadd.f32 %v851, %v1142
      %v1144 = vpop.f32.mrf.mxu0
      %v1145 = vpop.f32.mrf.mxu0
      %v1146 = vadd.f32 %v854, %v1145
      %v1147 = vpop.f32.mrf.mxu0
      %1148 = vmatprep.mubr.bf16.mxu0 0
      %1149 = vmatmul.mubr.bf16.gmra.mxu0 %v1006
      %v1150 = vpop.f32.mrf.mxu0
      %v1151 = vadd.f32 %v859, %v1150
      %v1152 = vpop.f32.mrf.mxu0
      %v1153 = vpop.f32.mrf.mxu0
      %v1154 = vadd.f32 %v862, %v1153
      %v1155 = vpop.f32.mrf.mxu0
      %1156 = vmatprep.mubr.bf16.mxu0 0
      %1157 = vmatmul.mubr.bf16.gmra.mxu0 %v1009
      %v1158 = vpop.f32.mrf.mxu0
      %v1159 = vadd.f32 %v867, %v1158
      %v1160 = vpop.f32.mrf.mxu0
      %v1161 = vpop.f32.mrf.mxu0
      %v1162 = vadd.f32 %v870, %v1161
      %v1163 = vpop.f32.mrf.mxu0
      %1164 = vmatprep.mubr.bf16.mxu0 0
      %1165 = vmatmul.mubr.bf16.gmra.mxu0 %v1012
      %v1166 = vpop.f32.mrf.mxu0
      %v1167 = vadd.f32 %v875, %v1166
      %v1168 = vpop.f32.mrf.mxu0
      %v1169 = vpop.f32.mrf.mxu0
      %v1170 = vadd.f32 %v878, %v1169
      %v1171 = vpop.f32.mrf.mxu0
      %1172 = vmatprep.mubr.bf16.mxu0 0
      %1173 = vmatmul.mubr.bf16.gmra.mxu0 %v1015
      %v1174 = vpop.f32.mrf.mxu0
      %v1175 = vadd.f32 %v883, %v1174
      %v1176 = vpop.f32.mrf.mxu0
      %v1177 = vpop.f32.mrf.mxu0
      %v1178 = vadd.f32 %v886, %v1177
      %v1179 = vpop.f32.mrf.mxu0
      %1180 = vdwg.mxu0
      %vm1197 = vcmask 1042432
      %vm1198 = vcmask 1046532
      %vm1199 = vmor %vm1197, %vm1198
      %v1200 = vrot.slane %v183, 5
      %v1201 = vrot.slane %v1200, 4
      %v1202 = vrot.slane %v184, 5
      %v1203 = vsel %vm1199, %v1201, %v1202
      %v1204 = vrot.slane %v1202, 4
      %v1205 = vrot.slane %v185, 5
      %v1206 = vsel %vm1199, %v1204, %v1205
      %v1207 = vrot.slane %v186, 5
      %v1208 = vrot.slane %v1207, 4
      %v1209 = vrot.slane %v187, 5
      %v1210 = vsel %vm1199, %v1208, %v1209
      %v1211 = vrot.slane %v1209, 4
      %v1212 = vrot.slane %v188, 5
      %v1213 = vsel %vm1199, %v1211, %v1212
      %v1214 = vrot.slane %v189, 5
      %v1215 = vrot.slane %v1214, 4
      %v1216 = vrot.slane %v190, 5
      %v1217 = vsel %vm1199, %v1215, %v1216
      %v1218 = vrot.slane %v1216, 4
      %v1219 = vrot.slane %v191, 5
      %v1220 = vsel %vm1199, %v1218, %v1219
      %v1221 = vrot.slane %v192, 5
      %v1222 = vrot.slane %v1221, 4
      %v1223 = vrot.slane %v193, 5
      %v1224 = vsel %vm1199, %v1222, %v1223
      %v1225 = vrot.slane %v1223, 4
      %v1226 = vrot.slane %v194, 5
      %v1227 = vsel %vm1199, %v1225, %v1226
      %v1228 = vrot.slane %v195, 5
      %v1229 = vrot.slane %v1228, 4
      %v1230 = vrot.slane %v196, 5
      %v1231 = vsel %vm1199, %v1229, %v1230
      %v1232 = vrot.slane %v1230, 4
      %v1233 = vrot.slane %v197, 5
      %v1234 = vsel %vm1199, %v1232, %v1233
      %v1235 = vrot.slane %v198, 5
      %v1236 = vrot.slane %v1235, 4
      %v1237 = vrot.slane %v199, 5
      %v1238 = vsel %vm1199, %v1236, %v1237
      %v1239 = vrot.slane %v1237, 4
      %v1240 = vrot.slane %v200, 5
      %v1241 = vsel %vm1199, %v1239, %v1240
      %v1242 = vrot.slane %v201, 5
      %v1243 = vrot.slane %v1242, 4
      %v1244 = vrot.slane %v202, 5
      %v1245 = vsel %vm1199, %v1243, %v1244
      %v1246 = vrot.slane %v1244, 4
      %v1247 = vrot.slane %v203, 5
      %v1248 = vsel %vm1199, %v1246, %v1247
      %v1249 = vrot.slane %v204, 5
      %v1250 = vrot.slane %v1249, 4
      %v1251 = vrot.slane %v205, 5
      %v1252 = vsel %vm1199, %v1250, %v1251
      %v1253 = vrot.slane %v1251, 4
      %v1254 = vrot.slane %v206, 5
      %v1255 = vsel %vm1199, %v1253, %v1254
      %v1256 = vrot.slane %v207, 5
      %v1257 = vrot.slane %v1256, 4
      %v1258 = vrot.slane %v208, 5
      %v1259 = vsel %vm1199, %v1257, %v1258
      %v1260 = vrot.slane %v1258, 4
      %v1261 = vrot.slane %v209, 5
      %v1262 = vsel %vm1199, %v1260, %v1261
      %v1263 = vrot.slane %v210, 5
      %v1264 = vrot.slane %v1263, 4
      %v1265 = vrot.slane %v211, 5
      %v1266 = vsel %vm1199, %v1264, %v1265
      %v1267 = vrot.slane %v1265, 4
      %v1268 = vrot.slane %v212, 5
      %v1269 = vsel %vm1199, %v1267, %v1268
      %v1270 = vrot.slane %v213, 5
      %v1271 = vrot.slane %v1270, 4
      %v1272 = vrot.slane %v214, 5
      %v1273 = vsel %vm1199, %v1271, %v1272
      %v1274 = vrot.slane %v1272, 4
      %v1275 = vrot.slane %v215, 5
      %v1276 = vsel %vm1199, %v1274, %v1275
      %v1277 = vrot.slane %v216, 5
      %v1278 = vrot.slane %v1277, 4
      %v1279 = vrot.slane %v217, 5
      %v1280 = vsel %vm1199, %v1278, %v1279
      %v1281 = vrot.slane %v1279, 4
      %v1282 = vrot.slane %v218, 5
      %v1283 = vsel %vm1199, %v1281, %v1282
      %v1284 = vrot.slane %v219, 5
      %v1285 = vrot.slane %v1284, 4
      %v1286 = vrot.slane %v220, 5
      %v1287 = vsel %vm1199, %v1285, %v1286
      %v1288 = vrot.slane %v1286, 4
      %v1289 = vrot.slane %v221, 5
      %v1290 = vsel %vm1199, %v1288, %v1289
      %v1291 = vrot.slane %v222, 5
      %v1292 = vrot.slane %v1291, 4
      %v1293 = vrot.slane %v223, 5
      %v1294 = vsel %vm1199, %v1292, %v1293
      %v1295 = vrot.slane %v1293, 4
      %v1296 = vrot.slane %v224, 5
      %v1297 = vsel %vm1199, %v1295, %v1296
      %v1298 = vrot.slane %v225, 5
      %v1299 = vrot.slane %v1298, 4
      %v1300 = vrot.slane %v226, 5
      %v1301 = vsel %vm1199, %v1299, %v1300
      %v1302 = vrot.slane %v1300, 4
      %v1303 = vrot.slane %v227, 5
      %v1304 = vsel %vm1199, %v1302, %v1303
      %v1305 = vrot.slane %v228, 5
      %v1306 = vrot.slane %v1305, 4
      %v1307 = vrot.slane %v229, 5
      %v1308 = vsel %vm1199, %v1306, %v1307
      %v1309 = vrot.slane %v1307, 4
      %v1310 = vrot.slane %v230, 5
      %v1311 = vsel %vm1199, %v1309, %v1310
      %s1312 = scalar_lea.vmem %s1, 4
      %v1313 = vld [vmem:[%s1312] sm:$0x3]
      %v1314 = vunpack.c.l.b16 %v1203
      %v1315 = vunpack.c.l.b16 %v1206
      %v1316 = vunpack.c.l.b16 %v1210
      %v1317 = vunpack.c.l.b16 %v1213
      %v1318 = vunpack.c.l.b16 %v1217
      %v1319 = vunpack.c.l.b16 %v1220
      %v1320 = vunpack.c.l.b16 %v1224
      %v1321 = vunpack.c.l.b16 %v1227
      %v1322 = vunpack.c.l.b16 %v1231
      %v1323 = vunpack.c.l.b16 %v1234
      %v1324 = vunpack.c.l.b16 %v1238
      %v1325 = vunpack.c.l.b16 %v1241
      %v1326 = vunpack.c.l.b16 %v1245
      %v1327 = vunpack.c.l.b16 %v1248
      %v1328 = vunpack.c.l.b16 %v1252
      %v1329 = vunpack.c.l.b16 %v1255
      %v1330 = vunpack.c.l.b16 %v1259
      %v1331 = vunpack.c.l.b16 %v1262
      %v1332 = vunpack.c.l.b16 %v1266
      %v1333 = vunpack.c.l.b16 %v1269
      %v1334 = vunpack.c.l.b16 %v1273
      %v1335 = vunpack.c.l.b16 %v1276
      %v1336 = vunpack.c.l.b16 %v1280
      %v1337 = vunpack.c.l.b16 %v1283
      %v1338 = vunpack.c.l.b16 %v1287
      %v1339 = vunpack.c.l.b16 %v1290
      %v1340 = vunpack.c.l.b16 %v1294
      %v1341 = vunpack.c.l.b16 %v1297
      %v1342 = vunpack.c.l.b16 %v1301
      %v1343 = vunpack.c.l.b16 %v1304
      %v1344 = vunpack.c.l.b16 %v1308
      %v1345 = vunpack.c.l.b16 %v1311
      %v1346 = vpack.c.b16 %v1315, %v1314
      %v1347 = vpack.c.b16 %v1317, %v1316
      %v1348 = vpack.c.b16 %v1319, %v1318
      %v1349 = vpack.c.b16 %v1321, %v1320
      %v1350 = vpack.c.b16 %v1323, %v1322
      %v1351 = vpack.c.b16 %v1325, %v1324
      %v1352 = vpack.c.b16 %v1327, %v1326
      %v1353 = vpack.c.b16 %v1329, %v1328
      %v1354 = vpack.c.b16 %v1331, %v1330
      %v1355 = vpack.c.b16 %v1333, %v1332
      %v1356 = vpack.c.b16 %v1335, %v1334
      %v1357 = vpack.c.b16 %v1337, %v1336
      %v1358 = vpack.c.b16 %v1339, %v1338
      %v1359 = vpack.c.b16 %v1341, %v1340
      %v1360 = vpack.c.b16 %v1343, %v1342
      %v1361 = vpack.c.b16 %v1345, %v1344
      %v1363 = vsel %vm675, %v1346, 0
      %v1366 = vsel %vm675, %v1347, 0
      %v1369 = vsel %vm675, %v1348, 0
      %v1372 = vsel %vm675, %v1349, 0
      %v1375 = vsel %vm675, %v1350, 0
      %v1378 = vsel %vm675, %v1351, 0
      %v1381 = vsel %vm675, %v1352, 0
      %v1384 = vsel %vm675, %v1353, 0
      %v1387 = vsel %vm675, %v1354, 0
      %v1390 = vsel %vm675, %v1355, 0
      %v1393 = vsel %vm675, %v1356, 0
      %v1396 = vsel %vm675, %v1357, 0
      %v1399 = vsel %vm675, %v1358, 0
      %v1402 = vsel %vm675, %v1359, 0
      %v1405 = vsel %vm675, %v1360, 0
      %v1408 = vsel %vm675, %v1361, 0
      %v1411 = vsel %vm724, %v1313, 0
      %1413 = vmatprep.subr.bf16.mxu0 0
      %1414 = vmatpush1.bf16.msra.mxu0 0
      %1415 = vmatprep.subr.bf16.mxu0 0
      %1416 = vmatpush1.bf16.msra.mxu0 0
      %1417 = vmatprep.subr.bf16.mxu0 0
      %1418 = vmatpush1.bf16.msra.mxu0 0
      %1419 = vmatprep.subr.bf16.mxu0 0
      %1420 = vmatpush1.bf16.msra.mxu0 0
      %1421 = vmatprep.subr.bf16.mxu0 0
      %1422 = vmatpush1.bf16.msra.mxu0 0
      %1423 = vmatprep.subr.bf16.mxu0 0
      %1424 = vmatpush1.bf16.msra.mxu0 0
      %1425 = vmatprep.subr.bf16.mxu0 0
      %1426 = vmatpush1.bf16.msra.mxu0 0
      %1427 = vmatprep.subr.bf16.mxu0 0
      %1428 = vmatpush1.bf16.msra.mxu0 %v1411
      %1429 = vmatprep.subr.bf16.mxu0 0
      %1430 = vmatpush2.bf16.msra.mxu0 0
      %1431 = vmatprep.subr.bf16.mxu0 0
      %1432 = vmatpush2.bf16.msra.mxu0 0
      %1433 = vmatprep.subr.bf16.mxu0 0
      %1434 = vmatpush2.bf16.msra.mxu0 0
      %1435 = vmatprep.subr.bf16.mxu0 0
      %1436 = vmatpush2.bf16.msra.mxu0 0
      %1437 = vmatprep.subr.bf16.mxu0 0
      %1438 = vmatpush2.bf16.msra.mxu0 0
      %1439 = vmatprep.subr.bf16.mxu0 0
      %1440 = vmatpush2.bf16.msra.mxu0 0
      %1441 = vmatprep.subr.bf16.mxu0 0
      %1442 = vmatpush2.bf16.msra.mxu0 0
      %1443 = vmatprep.subr.bf16.mxu0 0
      %1444 = vmatpush2.bf16.msra.mxu0 0
      %1445 = vmatprep.mubr.bf16.mxu0 0
      %1446 = vmatmul.mubr.bf16.gmra.mxu0 %v1363
      %v1447 = vpop.f32.mrf.mxu0
      %v1448 = vadd.f32 0.0, %v1447
      %v1449 = vpop.f32.mrf.mxu0
      %v1450 = vpop.f32.mrf.mxu0
      %v1451 = vadd.f32 0.0, %v1450
      %v1452 = vpop.f32.mrf.mxu0
      %1453 = vmatprep.mubr.bf16.mxu0 0
      %1454 = vmatmul.mubr.bf16.gmra.mxu0 %v1366
      %v1455 = vpop.f32.mrf.mxu0
      %v1456 = vadd.f32 0.0, %v1455
      %v1457 = vpop.f32.mrf.mxu0
      %v1458 = vpop.f32.mrf.mxu0
      %v1459 = vadd.f32 0.0, %v1458
      %v1460 = vpop.f32.mrf.mxu0
      %1461 = vmatprep.mubr.bf16.mxu0 0
      %1462 = vmatmul.mubr.bf16.gmra.mxu0 %v1369
      %v1463 = vpop.f32.mrf.mxu0
      %v1464 = vadd.f32 0.0, %v1463
      %v1465 = vpop.f32.mrf.mxu0
      %v1466 = vpop.f32.mrf.mxu0
      %v1467 = vadd.f32 0.0, %v1466
      %v1468 = vpop.f32.mrf.mxu0
      %1469 = vmatprep.mubr.bf16.mxu0 0
      %1470 = vmatmul.mubr.bf16.gmra.mxu0 %v1372
      %v1471 = vpop.f32.mrf.mxu0
      %v1472 = vadd.f32 0.0, %v1471
      %v1473 = vpop.f32.mrf.mxu0
      %v1474 = vpop.f32.mrf.mxu0
      %v1475 = vadd.f32 0.0, %v1474
      %v1476 = vpop.f32.mrf.mxu0
      %1477 = vmatprep.mubr.bf16.mxu0 0
      %1478 = vmatmul.mubr.bf16.gmra.mxu0 %v1375
      %v1479 = vpop.f32.mrf.mxu0
      %v1480 = vadd.f32 0.0, %v1479
      %v1481 = vpop.f32.mrf.mxu0
      %v1482 = vpop.f32.mrf.mxu0
      %v1483 = vadd.f32 0.0, %v1482
      %v1484 = vpop.f32.mrf.mxu0
      %1485 = vmatprep.mubr.bf16.mxu0 0
      %1486 = vmatmul.mubr.bf16.gmra.mxu0 %v1378
      %v1487 = vpop.f32.mrf.mxu0
      %v1488 = vadd.f32 0.0, %v1487
      %v1489 = vpop.f32.mrf.mxu0
      %v1490 = vpop.f32.mrf.mxu0
      %v1491 = vadd.f32 0.0, %v1490
      %v1492 = vpop.f32.mrf.mxu0
      %1493 = vmatprep.mubr.bf16.mxu0 0
      %1494 = vmatmul.mubr.bf16.gmra.mxu0 %v1381
      %v1495 = vpop.f32.mrf.mxu0
      %v1496 = vadd.f32 0.0, %v1495
      %v1497 = vpop.f32.mrf.mxu0
      %v1498 = vpop.f32.mrf.mxu0
      %v1499 = vadd.f32 0.0, %v1498
      %v1500 = vpop.f32.mrf.mxu0
      %1501 = vmatprep.mubr.bf16.mxu0 0
      %1502 = vmatmul.mubr.bf16.gmra.mxu0 %v1384
      %v1503 = vpop.f32.mrf.mxu0
      %v1504 = vadd.f32 0.0, %v1503
      %v1505 = vpop.f32.mrf.mxu0
      %v1506 = vpop.f32.mrf.mxu0
      %v1507 = vadd.f32 0.0, %v1506
      %v1508 = vpop.f32.mrf.mxu0
      %1509 = vmatprep.mubr.bf16.mxu0 0
      %1510 = vmatmul.mubr.bf16.gmra.mxu0 %v1387
      %v1511 = vpop.f32.mrf.mxu0
      %v1512 = vadd.f32 0.0, %v1511
      %v1513 = vpop.f32.mrf.mxu0
      %v1514 = vpop.f32.mrf.mxu0
      %v1515 = vadd.f32 0.0, %v1514
      %v1516 = vpop.f32.mrf.mxu0
      %1517 = vmatprep.mubr.bf16.mxu0 0
      %1518 = vmatmul.mubr.bf16.gmra.mxu0 %v1390
      %v1519 = vpop.f32.mrf.mxu0
      %v1520 = vadd.f32 0.0, %v1519
      %v1521 = vpop.f32.mrf.mxu0
      %v1522 = vpop.f32.mrf.mxu0
      %v1523 = vadd.f32 0.0, %v1522
      %v1524 = vpop.f32.mrf.mxu0
      %1525 = vmatprep.mubr.bf16.mxu0 0
      %1526 = vmatmul.mubr.bf16.gmra.mxu0 %v1393
      %v1527 = vpop.f32.mrf.mxu0
      %v1528 = vadd.f32 0.0, %v1527
      %v1529 = vpop.f32.mrf.mxu0
      %v1530 = vpop.f32.mrf.mxu0
      %v1531 = vadd.f32 0.0, %v1530
      %v1532 = vpop.f32.mrf.mxu0
      %1533 = vmatprep.mubr.bf16.mxu0 0
      %1534 = vmatmul.mubr.bf16.gmra.mxu0 %v1396
      %v1535 = vpop.f32.mrf.mxu0
      %v1536 = vadd.f32 0.0, %v1535
      %v1537 = vpop.f32.mrf.mxu0
      %v1538 = vpop.f32.mrf.mxu0
      %v1539 = vadd.f32 0.0, %v1538
      %v1540 = vpop.f32.mrf.mxu0
      %1541 = vmatprep.mubr.bf16.mxu0 0
      %1542 = vmatmul.mubr.bf16.gmra.mxu0 %v1399
      %v1543 = vpop.f32.mrf.mxu0
      %v1544 = vadd.f32 0.0, %v1543
      %v1545 = vpop.f32.mrf.mxu0
      %v1546 = vpop.f32.mrf.mxu0
      %v1547 = vadd.f32 0.0, %v1546
      %v1548 = vpop.f32.mrf.mxu0
      %1549 = vmatprep.mubr.bf16.mxu0 0
      %1550 = vmatmul.mubr.bf16.gmra.mxu0 %v1402
      %v1551 = vpop.f32.mrf.mxu0
      %v1552 = vadd.f32 0.0, %v1551
      %v1553 = vpop.f32.mrf.mxu0
      %v1554 = vpop.f32.mrf.mxu0
      %v1555 = vadd.f32 0.0, %v1554
      %v1556 = vpop.f32.mrf.mxu0
      %1557 = vmatprep.mubr.bf16.mxu0 0
      %1558 = vmatmul.mubr.bf16.gmra.mxu0 %v1405
      %v1559 = vpop.f32.mrf.mxu0
      %v1560 = vadd.f32 0.0, %v1559
      %v1561 = vpop.f32.mrf.mxu0
      %v1562 = vpop.f32.mrf.mxu0
      %v1563 = vadd.f32 0.0, %v1562
      %v1564 = vpop.f32.mrf.mxu0
      %1565 = vmatprep.mubr.bf16.mxu0 0
      %1566 = vmatmul.mubr.bf16.gmra.mxu0 %v1408
      %v1567 = vpop.f32.mrf.mxu0
      %v1568 = vadd.f32 0.0, %v1567
      %v1569 = vpop.f32.mrf.mxu0
      %v1570 = vpop.f32.mrf.mxu0
      %v1571 = vadd.f32 0.0, %v1570
      %v1572 = vpop.f32.mrf.mxu0
      %1573 = vdwg.mxu0
      %v1574 = vadd.f32 %v1055, %v1448
      %v1575 = vadd.f32 %v1058, %v1451
      %v1576 = vadd.f32 %v1063, %v1456
      %v1577 = vadd.f32 %v1066, %v1459
      %v1578 = vadd.f32 %v1071, %v1464
      %v1579 = vadd.f32 %v1074, %v1467
      %v1580 = vadd.f32 %v1079, %v1472
      %v1581 = vadd.f32 %v1082, %v1475
      %v1582 = vadd.f32 %v1087, %v1480
      %v1583 = vadd.f32 %v1090, %v1483
      %v1584 = vadd.f32 %v1095, %v1488
      %v1585 = vadd.f32 %v1098, %v1491
      %v1586 = vadd.f32 %v1103, %v1496
      %v1587 = vadd.f32 %v1106, %v1499
      %v1588 = vadd.f32 %v1111, %v1504
      %v1589 = vadd.f32 %v1114, %v1507
      %v1590 = vadd.f32 %v1119, %v1512
      %v1591 = vadd.f32 %v1122, %v1515
      %v1592 = vadd.f32 %v1127, %v1520
      %v1593 = vadd.f32 %v1130, %v1523
      %v1594 = vadd.f32 %v1135, %v1528
      %v1595 = vadd.f32 %v1138, %v1531
      %v1596 = vadd.f32 %v1143, %v1536
      %v1597 = vadd.f32 %v1146, %v1539
      %v1598 = vadd.f32 %v1151, %v1544
      %v1599 = vadd.f32 %v1154, %v1547
      %v1600 = vadd.f32 %v1159, %v1552
      %v1601 = vadd.f32 %v1162, %v1555
      %v1602 = vadd.f32 %v1167, %v1560
      %v1603 = vadd.f32 %v1170, %v1563
      %v1604 = vadd.f32 %v1175, %v1568
      %v1605 = vadd.f32 %v1178, %v1571
      %s1606 = scalar_lea.vmem %s1, 6
      %v1607 = vld [vmem:[%s1606] sm:$0x3]
      %v1610 = vunpack.c.l.b16 %v231
      %v1611 = vunpack.c.l.b16 %v232
      %v1612 = vpack.c.b16 %v1611, %v1610
      %v1614 = vsel %vm675, %v1612, 0
      %v1617 = vsel %vm724, %v1607, 0
      %1619 = vmatprep.subr.bf16.mxu0 0
      %1620 = vmatpush1.bf16.msra.mxu0 0
      %1621 = vmatprep.subr.bf16.mxu0 0
      %1622 = vmatpush1.bf16.msra.mxu0 0
      %1623 = vmatprep.subr.bf16.mxu0 0
      %1624 = vmatpush1.bf16.msra.mxu0 0
      %1625 = vmatprep.subr.bf16.mxu0 0
      %1626 = vmatpush1.bf16.msra.mxu0 0
      %1627 = vmatprep.subr.bf16.mxu0 0
      %1628 = vmatpush1.bf16.msra.mxu0 0
      %1629 = vmatprep.subr.bf16.mxu0 0
      %1630 = vmatpush1.bf16.msra.mxu0 0
      %1631 = vmatprep.subr.bf16.mxu0 0
      %1632 = vmatpush1.bf16.msra.mxu0 0
      %1633 = vmatprep.subr.bf16.mxu0 0
      %1634 = vmatpush1.bf16.msra.mxu0 %v1617
      %1635 = vmatprep.subr.bf16.mxu0 0
      %1636 = vmatpush2.bf16.msra.mxu0 0
      %1637 = vmatprep.subr.bf16.mxu0 0
      %1638 = vmatpush2.bf16.msra.mxu0 0
      %1639 = vmatprep.subr.bf16.mxu0 0
      %1640 = vmatpush2.bf16.msra.mxu0 0
      %1641 = vmatprep.subr.bf16.mxu0 0
      %1642 = vmatpush2.bf16.msra.mxu0 0
      %1643 = vmatprep.subr.bf16.mxu0 0
      %1644 = vmatpush2.bf16.msra.mxu0 0
      %1645 = vmatprep.subr.bf16.mxu0 0
      %1646 = vmatpush2.bf16.msra.mxu0 0
      %1647 = vmatprep.subr.bf16.mxu0 0
      %1648 = vmatpush2.bf16.msra.mxu0 0
      %1649 = vmatprep.subr.bf16.mxu0 0
      %1650 = vmatpush2.bf16.msra.mxu0 0
      %1651 = vmatprep.mubr.bf16.mxu0 0
      %1652 = vmatmul.mubr.bf16.gmra.mxu0 %v973
      %v1653 = vpop.f32.mrf.mxu0
      %v1654 = vadd.f32 0.0, %v1653
      %v1655 = vpop.f32.mrf.mxu0
      %v1656 = vpop.f32.mrf.mxu0
      %v1657 = vadd.f32 0.0, %v1656
      %v1658 = vpop.f32.mrf.mxu0
      %1659 = vmatprep.mubr.bf16.mxu0 0
      %1660 = vmatmul.mubr.bf16.gmra.mxu0 %v976
      %v1661 = vpop.f32.mrf.mxu0
      %v1662 = vadd.f32 0.0, %v1661
      %v1663 = vpop.f32.mrf.mxu0
      %v1664 = vpop.f32.mrf.mxu0
      %v1665 = vadd.f32 0.0, %v1664
      %v1666 = vpop.f32.mrf.mxu0
      %1667 = vmatprep.mubr.bf16.mxu0 0
      %1668 = vmatmul.mubr.bf16.gmra.mxu0 %v979
      %v1669 = vpop.f32.mrf.mxu0
      %v1670 = vadd.f32 0.0, %v1669
      %v1671 = vpop.f32.mrf.mxu0
      %v1672 = vpop.f32.mrf.mxu0
      %v1673 = vadd.f32 0.0, %v1672
      %v1674 = vpop.f32.mrf.mxu0
      %1675 = vmatprep.mubr.bf16.mxu0 0
      %1676 = vmatmul.mubr.bf16.gmra.mxu0 %v982
      %v1677 = vpop.f32.mrf.mxu0
      %v1678 = vadd.f32 0.0, %v1677
      %v1679 = vpop.f32.mrf.mxu0
      %v1680 = vpop.f32.mrf.mxu0
      %v1681 = vadd.f32 0.0, %v1680
      %v1682 = vpop.f32.mrf.mxu0
      %1683 = vmatprep.mubr.bf16.mxu0 0
      %1684 = vmatmul.mubr.bf16.gmra.mxu0 %v985
      %v1685 = vpop.f32.mrf.mxu0
      %v1686 = vadd.f32 0.0, %v1685
      %v1687 = vpop.f32.mrf.mxu0
      %v1688 = vpop.f32.mrf.mxu0
      %v1689 = vadd.f32 0.0, %v1688
      %v1690 = vpop.f32.mrf.mxu0
      %1691 = vmatprep.mubr.bf16.mxu0 0
      %1692 = vmatmul.mubr.bf16.gmra.mxu0 %v988
      %v1693 = vpop.f32.mrf.mxu0
      %v1694 = vadd.f32 0.0, %v1693
      %v1695 = vpop.f32.mrf.mxu0
      %v1696 = vpop.f32.mrf.mxu0
      %v1697 = vadd.f32 0.0, %v1696
      %v1698 = vpop.f32.mrf.mxu0
      %1699 = vmatprep.mubr.bf16.mxu0 0
      %1700 = vmatmul.mubr.bf16.gmra.mxu0 %v991
      %v1701 = vpop.f32.mrf.mxu0
      %v1702 = vadd.f32 0.0, %v1701
      %v1703 = vpop.f32.mrf.mxu0
      %v1704 = vpop.f32.mrf.mxu0
      %v1705 = vadd.f32 0.0, %v1704
      %v1706 = vpop.f32.mrf.mxu0
      %1707 = vmatprep.mubr.bf16.mxu0 0
      %1708 = vmatmul.mubr.bf16.gmra.mxu0 %v994
      %v1709 = vpop.f32.mrf.mxu0
      %v1710 = vadd.f32 0.0, %v1709
      %v1711 = vpop.f32.mrf.mxu0
      %v1712 = vpop.f32.mrf.mxu0
      %v1713 = vadd.f32 0.0, %v1712
      %v1714 = vpop.f32.mrf.mxu0
      %1715 = vmatprep.mubr.bf16.mxu0 0
      %1716 = vmatmul.mubr.bf16.gmra.mxu0 %v997
      %v1717 = vpop.f32.mrf.mxu0
      %v1718 = vadd.f32 0.0, %v1717
      %v1719 = vpop.f32.mrf.mxu0
      %v1720 = vpop.f32.mrf.mxu0
      %v1721 = vadd.f32 0.0, %v1720
      %v1722 = vpop.f32.mrf.mxu0
      %1723 = vmatprep.mubr.bf16.mxu0 0
      %1724 = vmatmul.mubr.bf16.gmra.mxu0 %v1000
      %v1725 = vpop.f32.mrf.mxu0
      %v1726 = vadd.f32 0.0, %v1725
      %v1727 = vpop.f32.mrf.mxu0
      %v1728 = vpop.f32.mrf.mxu0
      %v1729 = vadd.f32 0.0, %v1728
      %v1730 = vpop.f32.mrf.mxu0
      %1731 = vmatprep.mubr.bf16.mxu0 0
      %1732 = vmatmul.mubr.bf16.gmra.mxu0 %v1003
      %v1733 = vpop.f32.mrf.mxu0
      %v1734 = vadd.f32 0.0, %v1733
      %v1735 = vpop.f32.mrf.mxu0
      %v1736 = vpop.f32.mrf.mxu0
      %v1737 = vadd.f32 0.0, %v1736
      %v1738 = vpop.f32.mrf.mxu0
      %1739 = vmatprep.mubr.bf16.mxu0 0
      %1740 = vmatmul.mubr.bf16.gmra.mxu0 %v1006
      %v1741 = vpop.f32.mrf.mxu0
      %v1742 = vadd.f32 0.0, %v1741
      %v1743 = vpop.f32.mrf.mxu0
      %v1744 = vpop.f32.mrf.mxu0
      %v1745 = vadd.f32 0.0, %v1744
      %v1746 = vpop.f32.mrf.mxu0
      %1747 = vmatprep.mubr.bf16.mxu0 0
      %1748 = vmatmul.mubr.bf16.gmra.mxu0 %v1009
      %v1749 = vpop.f32.mrf.mxu0
      %v1750 = vadd.f32 0.0, %v1749
      %v1751 = vpop.f32.mrf.mxu0
      %v1752 = vpop.f32.mrf.mxu0
      %v1753 = vadd.f32 0.0, %v1752
      %v1754 = vpop.f32.mrf.mxu0
      %1755 = vmatprep.mubr.bf16.mxu0 0
      %1756 = vmatmul.mubr.bf16.gmra.mxu0 %v1012
      %v1757 = vpop.f32.mrf.mxu0
      %v1758 = vadd.f32 0.0, %v1757
      %v1759 = vpop.f32.mrf.mxu0
      %v1760 = vpop.f32.mrf.mxu0
      %v1761 = vadd.f32 0.0, %v1760
      %v1762 = vpop.f32.mrf.mxu0
      %1763 = vmatprep.mubr.bf16.mxu0 0
      %1764 = vmatmul.mubr.bf16.gmra.mxu0 %v1015
      %v1765 = vpop.f32.mrf.mxu0
      %v1766 = vadd.f32 0.0, %v1765
      %v1767 = vpop.f32.mrf.mxu0
      %v1768 = vpop.f32.mrf.mxu0
      %v1769 = vadd.f32 0.0, %v1768
      %v1770 = vpop.f32.mrf.mxu0
      %1771 = vmatprep.mubr.bf16.mxu0 0
      %1772 = vmatmul.mubr.bf16.gmra.mxu0 %v1614
      %v1773 = vpop.f32.mrf.mxu0
      %v1774 = vadd.f32 0.0, %v1773
      %v1775 = vpop.f32.mrf.mxu0
      %v1776 = vpop.f32.mrf.mxu0
      %v1777 = vadd.f32 0.0, %v1776
      %v1778 = vpop.f32.mrf.mxu0
      %1779 = vdwg.mxu0
      %v1780 = vadd.f32 %v1574, %v1654
      %v1781 = vadd.f32 %v1575, %v1657
      %v1782 = vadd.f32 %v1576, %v1662
      %v1783 = vadd.f32 %v1577, %v1665
      %v1784 = vadd.f32 %v1578, %v1670
      %v1785 = vadd.f32 %v1579, %v1673
      %v1786 = vadd.f32 %v1580, %v1678
      %v1787 = vadd.f32 %v1581, %v1681
      %v1788 = vadd.f32 %v1582, %v1686
      %v1789 = vadd.f32 %v1583, %v1689
      %v1790 = vadd.f32 %v1584, %v1694
      %v1791 = vadd.f32 %v1585, %v1697
      %v1792 = vadd.f32 %v1586, %v1702
      %v1793 = vadd.f32 %v1587, %v1705
      %v1794 = vadd.f32 %v1588, %v1710
      %v1795 = vadd.f32 %v1589, %v1713
      %v1796 = vadd.f32 %v1590, %v1718
      %v1797 = vadd.f32 %v1591, %v1721
      %v1798 = vadd.f32 %v1592, %v1726
      %v1799 = vadd.f32 %v1593, %v1729
      %v1800 = vadd.f32 %v1594, %v1734
      %v1801 = vadd.f32 %v1595, %v1737
      %v1802 = vadd.f32 %v1596, %v1742
      %v1803 = vadd.f32 %v1597, %v1745
      %v1804 = vadd.f32 %v1598, %v1750
      %v1805 = vadd.f32 %v1599, %v1753
      %v1806 = vadd.f32 %v1600, %v1758
      %v1807 = vadd.f32 %v1601, %v1761
      %v1808 = vadd.f32 %v1602, %v1766
      %v1809 = vadd.f32 %v1603, %v1769
      %v1810 = vadd.f32 %v1604, %v1774
      %v1811 = vadd.f32 %v1605, %v1777
      %v1813 = vshrl.u32 %v231, 16
      %v1815 = vrot.slane %v1813, 4
      %v1816 = vshll.u32 %v231, 16
      %v1818 = vrot.slane %v1816, 5
      %v1819 = vor.u32 %v1815, %v1818
      %v1820 = vrot.slane %v1819, 4
      %v1822 = vshll.u32 %v232, 16
      %v1824 = vrot.slane %v1822, 5
      %v1825 = vsel %vm240, %v1820, %v1824
      %v1826 = vshrl.u32 %v232, 16
      %v1828 = vrot.slane %v1826, 4
      %v1829 = vor.u32 %v1828, %v1824
      %v1830 = vrot.slane %v1829, 4
      %v1832 = vshll.u32 %v233, 16
      %v1834 = vrot.slane %v1832, 5
      %v1835 = vsel %vm240, %v1830, %v1834
      %s1836 = scalar_lea.vmem %s1, 8
      %v1837 = vld [vmem:[%s1836] sm:$0x3]
      %v1838 = vunpack.c.l.b16 %v1825
      %v1839 = vunpack.c.l.b16 %v1835
      %v1840 = vpack.c.b16 %v1839, %v1838
      %v1842 = vsel %vm675, %v1840, 0
      %v1845 = vsel %vm724, %v1837, 0
      %1847 = vmatprep.subr.bf16.mxu0 0
      %1848 = vmatpush1.bf16.msra.mxu0 0
      %1849 = vmatprep.subr.bf16.mxu0 0
      %1850 = vmatpush1.bf16.msra.mxu0 0
      %1851 = vmatprep.subr.bf16.mxu0 0
      %1852 = vmatpush1.bf16.msra.mxu0 0
      %1853 = vmatprep.subr.bf16.mxu0 0
      %1854 = vmatpush1.bf16.msra.mxu0 0
      %1855 = vmatprep.subr.bf16.mxu0 0
      %1856 = vmatpush1.bf16.msra.mxu0 0
      %1857 = vmatprep.subr.bf16.mxu0 0
      %1858 = vmatpush1.bf16.msra.mxu0 0
      %1859 = vmatprep.subr.bf16.mxu0 0
      %1860 = vmatpush1.bf16.msra.mxu0 0
      %1861 = vmatprep.subr.bf16.mxu0 0
      %1862 = vmatpush1.bf16.msra.mxu0 %v1845
      %1863 = vmatprep.subr.bf16.mxu0 0
      %1864 = vmatpush2.bf16.msra.mxu0 0
      %1865 = vmatprep.subr.bf16.mxu0 0
      %1866 = vmatpush2.bf16.msra.mxu0 0
      %1867 = vmatprep.subr.bf16.mxu0 0
      %1868 = vmatpush2.bf16.msra.mxu0 0
      %1869 = vmatprep.subr.bf16.mxu0 0
      %1870 = vmatpush2.bf16.msra.mxu0 0
      %1871 = vmatprep.subr.bf16.mxu0 0
      %1872 = vmatpush2.bf16.msra.mxu0 0
      %1873 = vmatprep.subr.bf16.mxu0 0
      %1874 = vmatpush2.bf16.msra.mxu0 0
      %1875 = vmatprep.subr.bf16.mxu0 0
      %1876 = vmatpush2.bf16.msra.mxu0 0
      %1877 = vmatprep.subr.bf16.mxu0 0
      %1878 = vmatpush2.bf16.msra.mxu0 0
      %1879 = vmatprep.mubr.bf16.mxu0 0
      %1880 = vmatmul.mubr.bf16.gmra.mxu0 %v680
      %v1881 = vpop.f32.mrf.mxu0
      %v1882 = vadd.f32 0.0, %v1881
      %v1883 = vpop.f32.mrf.mxu0
      %v1884 = vpop.f32.mrf.mxu0
      %v1885 = vadd.f32 0.0, %v1884
      %v1886 = vpop.f32.mrf.mxu0
      %1887 = vmatprep.mubr.bf16.mxu0 0
      %1888 = vmatmul.mubr.bf16.gmra.mxu0 %v683
      %v1889 = vpop.f32.mrf.mxu0
      %v1890 = vadd.f32 0.0, %v1889
      %v1891 = vpop.f32.mrf.mxu0
      %v1892 = vpop.f32.mrf.mxu0
      %v1893 = vadd.f32 0.0, %v1892
      %v1894 = vpop.f32.mrf.mxu0
      %1895 = vmatprep.mubr.bf16.mxu0 0
      %1896 = vmatmul.mubr.bf16.gmra.mxu0 %v686
      %v1897 = vpop.f32.mrf.mxu0
      %v1898 = vadd.f32 0.0, %v1897
      %v1899 = vpop.f32.mrf.mxu0
      %v1900 = vpop.f32.mrf.mxu0
      %v1901 = vadd.f32 0.0, %v1900
      %v1902 = vpop.f32.mrf.mxu0
      %1903 = vmatprep.mubr.bf16.mxu0 0
      %1904 = vmatmul.mubr.bf16.gmra.mxu0 %v689
      %v1905 = vpop.f32.mrf.mxu0
      %v1906 = vadd.f32 0.0, %v1905
      %v1907 = vpop.f32.mrf.mxu0
      %v1908 = vpop.f32.mrf.mxu0
      %v1909 = vadd.f32 0.0, %v1908
      %v1910 = vpop.f32.mrf.mxu0
      %1911 = vmatprep.mubr.bf16.mxu0 0
      %1912 = vmatmul.mubr.bf16.gmra.mxu0 %v692
      %v1913 = vpop.f32.mrf.mxu0
      %v1914 = vadd.f32 0.0, %v1913
      %v1915 = vpop.f32.mrf.mxu0
      %v1916 = vpop.f32.mrf.mxu0
      %v1917 = vadd.f32 0.0, %v1916
      %v1918 = vpop.f32.mrf.mxu0
      %1919 = vmatprep.mubr.bf16.mxu0 0
      %1920 = vmatmul.mubr.bf16.gmra.mxu0 %v695
      %v1921 = vpop.f32.mrf.mxu0
      %v1922 = vadd.f32 0.0, %v1921
      %v1923 = vpop.f32.mrf.mxu0
      %v1924 = vpop.f32.mrf.mxu0
      %v1925 = vadd.f32 0.0, %v1924
      %v1926 = vpop.f32.mrf.mxu0
      %1927 = vmatprep.mubr.bf16.mxu0 0
      %1928 = vmatmul.mubr.bf16.gmra.mxu0 %v698
      %v1929 = vpop.f32.mrf.mxu0
      %v1930 = vadd.f32 0.0, %v1929
      %v1931 = vpop.f32.mrf.mxu0
      %v1932 = vpop.f32.mrf.mxu0
      %v1933 = vadd.f32 0.0, %v1932
      %v1934 = vpop.f32.mrf.mxu0
      %1935 = vmatprep.mubr.bf16.mxu0 0
      %1936 = vmatmul.mubr.bf16.gmra.mxu0 %v701
      %v1937 = vpop.f32.mrf.mxu0
      %v1938 = vadd.f32 0.0, %v1937
      %v1939 = vpop.f32.mrf.mxu0
      %v1940 = vpop.f32.mrf.mxu0
      %v1941 = vadd.f32 0.0, %v1940
      %v1942 = vpop.f32.mrf.mxu0
      %1943 = vmatprep.mubr.bf16.mxu0 0
      %1944 = vmatmul.mubr.bf16.gmra.mxu0 %v704
      %v1945 = vpop.f32.mrf.mxu0
      %v1946 = vadd.f32 0.0, %v1945
      %v1947 = vpop.f32.mrf.mxu0
      %v1948 = vpop.f32.mrf.mxu0
      %v1949 = vadd.f32 0.0, %v1948
      %v1950 = vpop.f32.mrf.mxu0
      %1951 = vmatprep.mubr.bf16.mxu0 0
      %1952 = vmatmul.mubr.bf16.gmra.mxu0 %v707
      %v1953 = vpop.f32.mrf.mxu0
      %v1954 = vadd.f32 0.0, %v1953
      %v1955 = vpop.f32.mrf.mxu0
      %v1956 = vpop.f32.mrf.mxu0
      %v1957 = vadd.f32 0.0, %v1956
      %v1958 = vpop.f32.mrf.mxu0
      %1959 = vmatprep.mubr.bf16.mxu0 0
      %1960 = vmatmul.mubr.bf16.gmra.mxu0 %v710
      %v1961 = vpop.f32.mrf.mxu0
      %v1962 = vadd.f32 0.0, %v1961
      %v1963 = vpop.f32.mrf.mxu0
      %v1964 = vpop.f32.mrf.mxu0
      %v1965 = vadd.f32 0.0, %v1964
      %v1966 = vpop.f32.mrf.mxu0
      %1967 = vmatprep.mubr.bf16.mxu0 0
      %1968 = vmatmul.mubr.bf16.gmra.mxu0 %v713
      %v1969 = vpop.f32.mrf.mxu0
      %v1970 = vadd.f32 0.0, %v1969
      %v1971 = vpop.f32.mrf.mxu0
      %v1972 = vpop.f32.mrf.mxu0
      %v1973 = vadd.f32 0.0, %v1972
      %v1974 = vpop.f32.mrf.mxu0
      %1975 = vmatprep.mubr.bf16.mxu0 0
      %1976 = vmatmul.mubr.bf16.gmra.mxu0 %v716
      %v1977 = vpop.f32.mrf.mxu0
      %v1978 = vadd.f32 0.0, %v1977
      %v1979 = vpop.f32.mrf.mxu0
      %v1980 = vpop.f32.mrf.mxu0
      %v1981 = vadd.f32 0.0, %v1980
      %v1982 = vpop.f32.mrf.mxu0
      %1983 = vmatprep.mubr.bf16.mxu0 0
      %1984 = vmatmul.mubr.bf16.gmra.mxu0 %v719
      %v1985 = vpop.f32.mrf.mxu0
      %v1986 = vadd.f32 0.0, %v1985
      %v1987 = vpop.f32.mrf.mxu0
      %v1988 = vpop.f32.mrf.mxu0
      %v1989 = vadd.f32 0.0, %v1988
      %v1990 = vpop.f32.mrf.mxu0
      %1991 = vmatprep.mubr.bf16.mxu0 0
      %1992 = vmatmul.mubr.bf16.gmra.mxu0 %v722
      %v1993 = vpop.f32.mrf.mxu0
      %v1994 = vadd.f32 0.0, %v1993
      %v1995 = vpop.f32.mrf.mxu0
      %v1996 = vpop.f32.mrf.mxu0
      %v1997 = vadd.f32 0.0, %v1996
      %v1998 = vpop.f32.mrf.mxu0
      %1999 = vmatprep.mubr.bf16.mxu0 0
      %2000 = vmatmul.mubr.bf16.gmra.mxu0 %v1842
      %v2001 = vpop.f32.mrf.mxu0
      %v2002 = vadd.f32 0.0, %v2001
      %v2003 = vpop.f32.mrf.mxu0
      %v2004 = vpop.f32.mrf.mxu0
      %v2005 = vadd.f32 0.0, %v2004
      %v2006 = vpop.f32.mrf.mxu0
      %2007 = vdwg.mxu0
      %v2008 = vadd.f32 %v1780, %v1882
      %v2009 = vadd.f32 %v1781, %v1885
      %v2010 = vadd.f32 %v1782, %v1890
      %v2011 = vadd.f32 %v1783, %v1893
      %v2012 = vadd.f32 %v1784, %v1898
      %v2013 = vadd.f32 %v1785, %v1901
      %v2014 = vadd.f32 %v1786, %v1906
      %v2015 = vadd.f32 %v1787, %v1909
      %v2016 = vadd.f32 %v1788, %v1914
      %v2017 = vadd.f32 %v1789, %v1917
      %v2018 = vadd.f32 %v1790, %v1922
      %v2019 = vadd.f32 %v1791, %v1925
      %v2020 = vadd.f32 %v1792, %v1930
      %v2021 = vadd.f32 %v1793, %v1933
      %v2022 = vadd.f32 %v1794, %v1938
      %v2023 = vadd.f32 %v1795, %v1941
      %v2024 = vadd.f32 %v1796, %v1946
      %v2025 = vadd.f32 %v1797, %v1949
      %v2026 = vadd.f32 %v1798, %v1954
      %v2027 = vadd.f32 %v1799, %v1957
      %v2028 = vadd.f32 %v1800, %v1962
      %v2029 = vadd.f32 %v1801, %v1965
      %v2030 = vadd.f32 %v1802, %v1970
      %v2031 = vadd.f32 %v1803, %v1973
      %v2032 = vadd.f32 %v1804, %v1978
      %v2033 = vadd.f32 %v1805, %v1981
      %v2034 = vadd.f32 %v1806, %v1986
      %v2035 = vadd.f32 %v1807, %v1989
      %v2036 = vadd.f32 %v1808, %v1994
      %v2037 = vadd.f32 %v1809, %v1997
      %v2038 = vadd.f32 %v1810, %v2002
      %v2039 = vadd.f32 %v1811, %v2005
      %v2041 = vrot.slane %v231, 5
      %v2042 = vrot.slane %v2041, 4
      %v2043 = vrot.slane %v232, 5
      %v2044 = vsel %vm1199, %v2042, %v2043
      %v2045 = vrot.slane %v2043, 4
      %v2046 = vrot.slane %v233, 5
      %v2047 = vsel %vm1199, %v2045, %v2046
      %s2048 = scalar_lea.vmem %s1, 10
      %v2049 = vld [vmem:[%s2048] sm:$0x3]
      %v2050 = vunpack.c.l.b16 %v2044
      %v2051 = vunpack.c.l.b16 %v2047
      %v2052 = vpack.c.b16 %v2051, %v2050
      %v2054 = vsel %vm675, %v2052, 0
      %v2057 = vsel %vm724, %v2049, 0
      %2059 = vmatprep.subr.bf16.mxu0 0
      %2060 = vmatpush1.bf16.msra.mxu0 0
      %2061 = vmatprep.subr.bf16.mxu0 0
      %2062 = vmatpush1.bf16.msra.mxu0 0
      %2063 = vmatprep.subr.bf16.mxu0 0
      %2064 = vmatpush1.bf16.msra.mxu0 0
      %2065 = vmatprep.subr.bf16.mxu0 0
      %2066 = vmatpush1.bf16.msra.mxu0 0
      %2067 = vmatprep.subr.bf16.mxu0 0
      %2068 = vmatpush1.bf16.msra.mxu0 0
      %2069 = vmatprep.subr.bf16.mxu0 0
      %2070 = vmatpush1.bf16.msra.mxu0 0
      %2071 = vmatprep.subr.bf16.mxu0 0
      %2072 = vmatpush1.bf16.msra.mxu0 0
      %2073 = vmatprep.subr.bf16.mxu0 0
      %2074 = vmatpush1.bf16.msra.mxu0 %v2057
      %2075 = vmatprep.subr.bf16.mxu0 0
      %2076 = vmatpush2.bf16.msra.mxu0 0
      %2077 = vmatprep.subr.bf16.mxu0 0
      %2078 = vmatpush2.bf16.msra.mxu0 0
      %2079 = vmatprep.subr.bf16.mxu0 0
      %2080 = vmatpush2.bf16.msra.mxu0 0
      %2081 = vmatprep.subr.bf16.mxu0 0
      %2082 = vmatpush2.bf16.msra.mxu0 0
      %2083 = vmatprep.subr.bf16.mxu0 0
      %2084 = vmatpush2.bf16.msra.mxu0 0
      %2085 = vmatprep.subr.bf16.mxu0 0
      %2086 = vmatpush2.bf16.msra.mxu0 0
      %2087 = vmatprep.subr.bf16.mxu0 0
      %2088 = vmatpush2.bf16.msra.mxu0 0
      %2089 = vmatprep.subr.bf16.mxu0 0
      %2090 = vmatpush2.bf16.msra.mxu0 0
      %2091 = vmatprep.mubr.bf16.mxu0 0
      %2092 = vmatmul.mubr.bf16.gmra.mxu0 %v1366
      %v2093 = vpop.f32.mrf.mxu0
      %v2094 = vadd.f32 0.0, %v2093
      %v2095 = vpop.f32.mrf.mxu0
      %v2096 = vpop.f32.mrf.mxu0
      %v2097 = vadd.f32 0.0, %v2096
      %v2098 = vpop.f32.mrf.mxu0
      %2099 = vmatprep.mubr.bf16.mxu0 0
      %2100 = vmatmul.mubr.bf16.gmra.mxu0 %v1369
      %v2101 = vpop.f32.mrf.mxu0
      %v2102 = vadd.f32 0.0, %v2101
      %v2103 = vpop.f32.mrf.mxu0
      %v2104 = vpop.f32.mrf.mxu0
      %v2105 = vadd.f32 0.0, %v2104
      %v2106 = vpop.f32.mrf.mxu0
      %2107 = vmatprep.mubr.bf16.mxu0 0
      %2108 = vmatmul.mubr.bf16.gmra.mxu0 %v1372
      %v2109 = vpop.f32.mrf.mxu0
      %v2110 = vadd.f32 0.0, %v2109
      %v2111 = vpop.f32.mrf.mxu0
      %v2112 = vpop.f32.mrf.mxu0
      %v2113 = vadd.f32 0.0, %v2112
      %v2114 = vpop.f32.mrf.mxu0
      %2115 = vmatprep.mubr.bf16.mxu0 0
      %2116 = vmatmul.mubr.bf16.gmra.mxu0 %v1375
      %v2117 = vpop.f32.mrf.mxu0
      %v2118 = vadd.f32 0.0, %v2117
      %v2119 = vpop.f32.mrf.mxu0
      %v2120 = vpop.f32.mrf.mxu0
      %v2121 = vadd.f32 0.0, %v2120
      %v2122 = vpop.f32.mrf.mxu0
      %2123 = vmatprep.mubr.bf16.mxu0 0
      %2124 = vmatmul.mubr.bf16.gmra.mxu0 %v1378
      %v2125 = vpop.f32.mrf.mxu0
      %v2126 = vadd.f32 0.0, %v2125
      %v2127 = vpop.f32.mrf.mxu0
      %v2128 = vpop.f32.mrf.mxu0
      %v2129 = vadd.f32 0.0, %v2128
      %v2130 = vpop.f32.mrf.mxu0
      %2131 = vmatprep.mubr.bf16.mxu0 0
      %2132 = vmatmul.mubr.bf16.gmra.mxu0 %v1381
      %v2133 = vpop.f32.mrf.mxu0
      %v2134 = vadd.f32 0.0, %v2133
      %v2135 = vpop.f32.mrf.mxu0
      %v2136 = vpop.f32.mrf.mxu0
      %v2137 = vadd.f32 0.0, %v2136
      %v2138 = vpop.f32.mrf.mxu0
      %2139 = vmatprep.mubr.bf16.mxu0 0
      %2140 = vmatmul.mubr.bf16.gmra.mxu0 %v1384
      %v2141 = vpop.f32.mrf.mxu0
      %v2142 = vadd.f32 0.0, %v2141
      %v2143 = vpop.f32.mrf.mxu0
      %v2144 = vpop.f32.mrf.mxu0
      %v2145 = vadd.f32 0.0, %v2144
      %v2146 = vpop.f32.mrf.mxu0
      %2147 = vmatprep.mubr.bf16.mxu0 0
      %2148 = vmatmul.mubr.bf16.gmra.mxu0 %v1387
      %v2149 = vpop.f32.mrf.mxu0
      %v2150 = vadd.f32 0.0, %v2149
      %v2151 = vpop.f32.mrf.mxu0
      %v2152 = vpop.f32.mrf.mxu0
      %v2153 = vadd.f32 0.0, %v2152
      %v2154 = vpop.f32.mrf.mxu0
      %2155 = vmatprep.mubr.bf16.mxu0 0
      %2156 = vmatmul.mubr.bf16.gmra.mxu0 %v1390
      %v2157 = vpop.f32.mrf.mxu0
      %v2158 = vadd.f32 0.0, %v2157
      %v2159 = vpop.f32.mrf.mxu0
      %v2160 = vpop.f32.mrf.mxu0
      %v2161 = vadd.f32 0.0, %v2160
      %v2162 = vpop.f32.mrf.mxu0
      %2163 = vmatprep.mubr.bf16.mxu0 0
      %2164 = vmatmul.mubr.bf16.gmra.mxu0 %v1393
      %v2165 = vpop.f32.mrf.mxu0
      %v2166 = vadd.f32 0.0, %v2165
      %v2167 = vpop.f32.mrf.mxu0
      %v2168 = vpop.f32.mrf.mxu0
      %v2169 = vadd.f32 0.0, %v2168
      %v2170 = vpop.f32.mrf.mxu0
      %2171 = vmatprep.mubr.bf16.mxu0 0
      %2172 = vmatmul.mubr.bf16.gmra.mxu0 %v1396
      %v2173 = vpop.f32.mrf.mxu0
      %v2174 = vadd.f32 0.0, %v2173
      %v2175 = vpop.f32.mrf.mxu0
      %v2176 = vpop.f32.mrf.mxu0
      %v2177 = vadd.f32 0.0, %v2176
      %v2178 = vpop.f32.mrf.mxu0
      %2179 = vmatprep.mubr.bf16.mxu0 0
      %2180 = vmatmul.mubr.bf16.gmra.mxu0 %v1399
      %v2181 = vpop.f32.mrf.mxu0
      %v2182 = vadd.f32 0.0, %v2181
      %v2183 = vpop.f32.mrf.mxu0
      %v2184 = vpop.f32.mrf.mxu0
      %v2185 = vadd.f32 0.0, %v2184
      %v2186 = vpop.f32.mrf.mxu0
      %2187 = vmatprep.mubr.bf16.mxu0 0
      %2188 = vmatmul.mubr.bf16.gmra.mxu0 %v1402
      %v2189 = vpop.f32.mrf.mxu0
      %v2190 = vadd.f32 0.0, %v2189
      %v2191 = vpop.f32.mrf.mxu0
      %v2192 = vpop.f32.mrf.mxu0
      %v2193 = vadd.f32 0.0, %v2192
      %v2194 = vpop.f32.mrf.mxu0
      %2195 = vmatprep.mubr.bf16.mxu0 0
      %2196 = vmatmul.mubr.bf16.gmra.mxu0 %v1405
      %v2197 = vpop.f32.mrf.mxu0
      %v2198 = vadd.f32 0.0, %v2197
      %v2199 = vpop.f32.mrf.mxu0
      %v2200 = vpop.f32.mrf.mxu0
      %v2201 = vadd.f32 0.0, %v2200
      %v2202 = vpop.f32.mrf.mxu0
      %2203 = vmatprep.mubr.bf16.mxu0 0
      %2204 = vmatmul.mubr.bf16.gmra.mxu0 %v1408
      %v2205 = vpop.f32.mrf.mxu0
      %v2206 = vadd.f32 0.0, %v2205
      %v2207 = vpop.f32.mrf.mxu0
      %v2208 = vpop.f32.mrf.mxu0
      %v2209 = vadd.f32 0.0, %v2208
      %v2210 = vpop.f32.mrf.mxu0
      %2211 = vmatprep.mubr.bf16.mxu0 0
      %2212 = vmatmul.mubr.bf16.gmra.mxu0 %v2054
      %v2213 = vpop.f32.mrf.mxu0
      %v2214 = vadd.f32 0.0, %v2213
      %v2215 = vpop.f32.mrf.mxu0
      %v2216 = vpop.f32.mrf.mxu0
      %v2217 = vadd.f32 0.0, %v2216
      %v2218 = vpop.f32.mrf.mxu0
      %2219 = vdwg.mxu0
      %v2220 = vadd.f32 %v2008, %v2094
      %v2221 = vadd.f32 %v2009, %v2097
      %v2222 = vadd.f32 %v2010, %v2102
      %v2223 = vadd.f32 %v2011, %v2105
      %v2224 = vadd.f32 %v2012, %v2110
      %v2225 = vadd.f32 %v2013, %v2113
      %v2226 = vadd.f32 %v2014, %v2118
      %v2227 = vadd.f32 %v2015, %v2121
      %v2228 = vadd.f32 %v2016, %v2126
      %v2229 = vadd.f32 %v2017, %v2129
      %v2230 = vadd.f32 %v2018, %v2134
      %v2231 = vadd.f32 %v2019, %v2137
      %v2232 = vadd.f32 %v2020, %v2142
      %v2233 = vadd.f32 %v2021, %v2145
      %v2234 = vadd.f32 %v2022, %v2150
      %v2235 = vadd.f32 %v2023, %v2153
      %v2236 = vadd.f32 %v2024, %v2158
      %v2237 = vadd.f32 %v2025, %v2161
      %v2238 = vadd.f32 %v2026, %v2166
      %v2239 = vadd.f32 %v2027, %v2169
      %v2240 = vadd.f32 %v2028, %v2174
      %v2241 = vadd.f32 %v2029, %v2177
      %v2242 = vadd.f32 %v2030, %v2182
      %v2243 = vadd.f32 %v2031, %v2185
      %v2244 = vadd.f32 %v2032, %v2190
      %v2245 = vadd.f32 %v2033, %v2193
      %v2246 = vadd.f32 %v2034, %v2198
      %v2247 = vadd.f32 %v2035, %v2201
      %v2248 = vadd.f32 %v2036, %v2206
      %v2249 = vadd.f32 %v2037, %v2209
      %v2250 = vadd.f32 %v2038, %v2214
      %v2251 = vadd.f32 %v2039, %v2217
      %s2252 = scalar_lea.vmem %s1, 12
      %v2253 = vld [vmem:[%s2252] sm:$0x3]
      %v2256 = vunpack.c.l.b16 %v234
      %v2257 = vunpack.c.l.b16 %v235
      %v2258 = vpack.c.b16 %v2257, %v2256
      %v2260 = vsel %vm675, %v2258, 0
      %v2263 = vsel %vm724, %v2253, 0
      %2265 = vmatprep.subr.bf16.mxu0 0
      %2266 = vmatpush1.bf16.msra.mxu0 0
      %2267 = vmatprep.subr.bf16.mxu0 0
      %2268 = vmatpush1.bf16.msra.mxu0 0
      %2269 = vmatprep.subr.bf16.mxu0 0
      %2270 = vmatpush1.bf16.msra.mxu0 0
      %2271 = vmatprep.subr.bf16.mxu0 0
      %2272 = vmatpush1.bf16.msra.mxu0 0
      %2273 = vmatprep.subr.bf16.mxu0 0
      %2274 = vmatpush1.bf16.msra.mxu0 0
      %2275 = vmatprep.subr.bf16.mxu0 0
      %2276 = vmatpush1.bf16.msra.mxu0 0
      %2277 = vmatprep.subr.bf16.mxu0 0
      %2278 = vmatpush1.bf16.msra.mxu0 0
      %2279 = vmatprep.subr.bf16.mxu0 0
      %2280 = vmatpush1.bf16.msra.mxu0 %v2263
      %2281 = vmatprep.subr.bf16.mxu0 0
      %2282 = vmatpush2.bf16.msra.mxu0 0
      %2283 = vmatprep.subr.bf16.mxu0 0
      %2284 = vmatpush2.bf16.msra.mxu0 0
      %2285 = vmatprep.subr.bf16.mxu0 0
      %2286 = vmatpush2.bf16.msra.mxu0 0
      %2287 = vmatprep.subr.bf16.mxu0 0
      %2288 = vmatpush2.bf16.msra.mxu0 0
      %2289 = vmatprep.subr.bf16.mxu0 0
      %2290 = vmatpush2.bf16.msra.mxu0 0
      %2291 = vmatprep.subr.bf16.mxu0 0
      %2292 = vmatpush2.bf16.msra.mxu0 0
      %2293 = vmatprep.subr.bf16.mxu0 0
      %2294 = vmatpush2.bf16.msra.mxu0 0
      %2295 = vmatprep.subr.bf16.mxu0 0
      %2296 = vmatpush2.bf16.msra.mxu0 0
      %2297 = vmatprep.mubr.bf16.mxu0 0
      %2298 = vmatmul.mubr.bf16.gmra.mxu0 %v976
      %v2299 = vpop.f32.mrf.mxu0
      %v2300 = vadd.f32 0.0, %v2299
      %v2301 = vpop.f32.mrf.mxu0
      %v2302 = vpop.f32.mrf.mxu0
      %v2303 = vadd.f32 0.0, %v2302
      %v2304 = vpop.f32.mrf.mxu0
      %2305 = vmatprep.mubr.bf16.mxu0 0
      %2306 = vmatmul.mubr.bf16.gmra.mxu0 %v979
      %v2307 = vpop.f32.mrf.mxu0
      %v2308 = vadd.f32 0.0, %v2307
      %v2309 = vpop.f32.mrf.mxu0
      %v2310 = vpop.f32.mrf.mxu0
      %v2311 = vadd.f32 0.0, %v2310
      %v2312 = vpop.f32.mrf.mxu0
      %2313 = vmatprep.mubr.bf16.mxu0 0
      %2314 = vmatmul.mubr.bf16.gmra.mxu0 %v982
      %v2315 = vpop.f32.mrf.mxu0
      %v2316 = vadd.f32 0.0, %v2315
      %v2317 = vpop.f32.mrf.mxu0
      %v2318 = vpop.f32.mrf.mxu0
      %v2319 = vadd.f32 0.0, %v2318
      %v2320 = vpop.f32.mrf.mxu0
      %2321 = vmatprep.mubr.bf16.mxu0 0
      %2322 = vmatmul.mubr.bf16.gmra.mxu0 %v985
      %v2323 = vpop.f32.mrf.mxu0
      %v2324 = vadd.f32 0.0, %v2323
      %v2325 = vpop.f32.mrf.mxu0
      %v2326 = vpop.f32.mrf.mxu0
      %v2327 = vadd.f32 0.0, %v2326
      %v2328 = vpop.f32.mrf.mxu0
      %2329 = vmatprep.mubr.bf16.mxu0 0
      %2330 = vmatmul.mubr.bf16.gmra.mxu0 %v988
      %v2331 = vpop.f32.mrf.mxu0
      %v2332 = vadd.f32 0.0, %v2331
      %v2333 = vpop.f32.mrf.mxu0
      %v2334 = vpop.f32.mrf.mxu0
      %v2335 = vadd.f32 0.0, %v2334
      %v2336 = vpop.f32.mrf.mxu0
      %2337 = vmatprep.mubr.bf16.mxu0 0
      %2338 = vmatmul.mubr.bf16.gmra.mxu0 %v991
      %v2339 = vpop.f32.mrf.mxu0
      %v2340 = vadd.f32 0.0, %v2339
      %v2341 = vpop.f32.mrf.mxu0
      %v2342 = vpop.f32.mrf.mxu0
      %v2343 = vadd.f32 0.0, %v2342
      %v2344 = vpop.f32.mrf.mxu0
      %2345 = vmatprep.mubr.bf16.mxu0 0
      %2346 = vmatmul.mubr.bf16.gmra.mxu0 %v994
      %v2347 = vpop.f32.mrf.mxu0
      %v2348 = vadd.f32 0.0, %v2347
      %v2349 = vpop.f32.mrf.mxu0
      %v2350 = vpop.f32.mrf.mxu0
      %v2351 = vadd.f32 0.0, %v2350
      %v2352 = vpop.f32.mrf.mxu0
      %2353 = vmatprep.mubr.bf16.mxu0 0
      %2354 = vmatmul.mubr.bf16.gmra.mxu0 %v997
      %v2355 = vpop.f32.mrf.mxu0
      %v2356 = vadd.f32 0.0, %v2355
      %v2357 = vpop.f32.mrf.mxu0
      %v2358 = vpop.f32.mrf.mxu0
      %v2359 = vadd.f32 0.0, %v2358
      %v2360 = vpop.f32.mrf.mxu0
      %2361 = vmatprep.mubr.bf16.mxu0 0
      %2362 = vmatmul.mubr.bf16.gmra.mxu0 %v1000
      %v2363 = vpop.f32.mrf.mxu0
      %v2364 = vadd.f32 0.0, %v2363
      %v2365 = vpop.f32.mrf.mxu0
      %v2366 = vpop.f32.mrf.mxu0
      %v2367 = vadd.f32 0.0, %v2366
      %v2368 = vpop.f32.mrf.mxu0
      %2369 = vmatprep.mubr.bf16.mxu0 0
      %2370 = vmatmul.mubr.bf16.gmra.mxu0 %v1003
      %v2371 = vpop.f32.mrf.mxu0
      %v2372 = vadd.f32 0.0, %v2371
      %v2373 = vpop.f32.mrf.mxu0
      %v2374 = vpop.f32.mrf.mxu0
      %v2375 = vadd.f32 0.0, %v2374
      %v2376 = vpop.f32.mrf.mxu0
      %2377 = vmatprep.mubr.bf16.mxu0 0
      %2378 = vmatmul.mubr.bf16.gmra.mxu0 %v1006
      %v2379 = vpop.f32.mrf.mxu0
      %v2380 = vadd.f32 0.0, %v2379
      %v2381 = vpop.f32.mrf.mxu0
      %v2382 = vpop.f32.mrf.mxu0
      %v2383 = vadd.f32 0.0, %v2382
      %v2384 = vpop.f32.mrf.mxu0
      %2385 = vmatprep.mubr.bf16.mxu0 0
      %2386 = vmatmul.mubr.bf16.gmra.mxu0 %v1009
      %v2387 = vpop.f32.mrf.mxu0
      %v2388 = vadd.f32 0.0, %v2387
      %v2389 = vpop.f32.mrf.mxu0
      %v2390 = vpop.f32.mrf.mxu0
      %v2391 = vadd.f32 0.0, %v2390
      %v2392 = vpop.f32.mrf.mxu0
      %2393 = vmatprep.mubr.bf16.mxu0 0
      %2394 = vmatmul.mubr.bf16.gmra.mxu0 %v1012
      %v2395 = vpop.f32.mrf.mxu0
      %v2396 = vadd.f32 0.0, %v2395
      %v2397 = vpop.f32.mrf.mxu0
      %v2398 = vpop.f32.mrf.mxu0
      %v2399 = vadd.f32 0.0, %v2398
      %v2400 = vpop.f32.mrf.mxu0
      %2401 = vmatprep.mubr.bf16.mxu0 0
      %2402 = vmatmul.mubr.bf16.gmra.mxu0 %v1015
      %v2403 = vpop.f32.mrf.mxu0
      %v2404 = vadd.f32 0.0, %v2403
      %v2405 = vpop.f32.mrf.mxu0
      %v2406 = vpop.f32.mrf.mxu0
      %v2407 = vadd.f32 0.0, %v2406
      %v2408 = vpop.f32.mrf.mxu0
      %2409 = vmatprep.mubr.bf16.mxu0 0
      %2410 = vmatmul.mubr.bf16.gmra.mxu0 %v1614
      %v2411 = vpop.f32.mrf.mxu0
      %v2412 = vadd.f32 0.0, %v2411
      %v2413 = vpop.f32.mrf.mxu0
      %v2414 = vpop.f32.mrf.mxu0
      %v2415 = vadd.f32 0.0, %v2414
      %v2416 = vpop.f32.mrf.mxu0
      %2417 = vmatprep.mubr.bf16.mxu0 0
      %2418 = vmatmul.mubr.bf16.gmra.mxu0 %v2260
      %v2419 = vpop.f32.mrf.mxu0
      %v2420 = vadd.f32 0.0, %v2419
      %v2421 = vpop.f32.mrf.mxu0
      %v2422 = vpop.f32.mrf.mxu0
      %v2423 = vadd.f32 0.0, %v2422
      %v2424 = vpop.f32.mrf.mxu0
      %2425 = vdwg.mxu0
      %v2426 = vadd.f32 %v2220, %v2300
      %v2427 = vadd.f32 %v2221, %v2303
      %v2428 = vadd.f32 %v2222, %v2308
      %v2429 = vadd.f32 %v2223, %v2311
      %v2430 = vadd.f32 %v2224, %v2316
      %v2431 = vadd.f32 %v2225, %v2319
      %v2432 = vadd.f32 %v2226, %v2324
      %v2433 = vadd.f32 %v2227, %v2327
      %v2434 = vadd.f32 %v2228, %v2332
      %v2435 = vadd.f32 %v2229, %v2335
      %v2436 = vadd.f32 %v2230, %v2340
      %v2437 = vadd.f32 %v2231, %v2343
      %v2438 = vadd.f32 %v2232, %v2348
      %v2439 = vadd.f32 %v2233, %v2351
      %v2440 = vadd.f32 %v2234, %v2356
      %v2441 = vadd.f32 %v2235, %v2359
      %v2442 = vadd.f32 %v2236, %v2364
      %v2443 = vadd.f32 %v2237, %v2367
      %v2444 = vadd.f32 %v2238, %v2372
      %v2445 = vadd.f32 %v2239, %v2375
      %v2446 = vadd.f32 %v2240, %v2380
      %v2447 = vadd.f32 %v2241, %v2383
      %v2448 = vadd.f32 %v2242, %v2388
      %v2449 = vadd.f32 %v2243, %v2391
      %v2450 = vadd.f32 %v2244, %v2396
      %v2451 = vadd.f32 %v2245, %v2399
      %v2452 = vadd.f32 %v2246, %v2404
      %v2453 = vadd.f32 %v2247, %v2407
      %v2454 = vadd.f32 %v2248, %v2412
      %v2455 = vadd.f32 %v2249, %v2415
      %v2456 = vadd.f32 %v2250, %v2420
      %v2457 = vadd.f32 %v2251, %v2423
      %v2459 = vshrl.u32 %v234, 16
      %v2461 = vrot.slane %v2459, 4
      %v2462 = vshll.u32 %v234, 16
      %v2464 = vrot.slane %v2462, 5
      %v2465 = vor.u32 %v2461, %v2464
      %v2466 = vrot.slane %v2465, 4
      %v2468 = vshll.u32 %v235, 16
      %v2470 = vrot.slane %v2468, 5
      %v2471 = vsel %vm240, %v2466, %v2470
      %v2472 = vshrl.u32 %v235, 16
      %v2474 = vrot.slane %v2472, 4
      %v2475 = vor.u32 %v2474, %v2470
      %v2476 = vrot.slane %v2475, 4
      %v2478 = vshll.u32 %v236, 16
      %v2480 = vrot.slane %v2478, 5
      %v2481 = vsel %vm240, %v2476, %v2480
      %s2482 = scalar_lea.vmem %s1, 14
      %v2483 = vld [vmem:[%s2482] sm:$0x3]
      %v2484 = vunpack.c.l.b16 %v2471
      %v2485 = vunpack.c.l.b16 %v2481
      %v2486 = vpack.c.b16 %v2485, %v2484
      %v2488 = vsel %vm675, %v2486, 0
      %v2491 = vsel %vm724, %v2483, 0
      %2493 = vmatprep.subr.bf16.mxu0 0
      %2494 = vmatpush1.bf16.msra.mxu0 0
      %2495 = vmatprep.subr.bf16.mxu0 0
      %2496 = vmatpush1.bf16.msra.mxu0 0
      %2497 = vmatprep.subr.bf16.mxu0 0
      %2498 = vmatpush1.bf16.msra.mxu0 0
      %2499 = vmatprep.subr.bf16.mxu0 0
      %2500 = vmatpush1.bf16.msra.mxu0 0
      %2501 = vmatprep.subr.bf16.mxu0 0
      %2502 = vmatpush1.bf16.msra.mxu0 0
      %2503 = vmatprep.subr.bf16.mxu0 0
      %2504 = vmatpush1.bf16.msra.mxu0 0
      %2505 = vmatprep.subr.bf16.mxu0 0
      %2506 = vmatpush1.bf16.msra.mxu0 0
      %2507 = vmatprep.subr.bf16.mxu0 0
      %2508 = vmatpush1.bf16.msra.mxu0 %v2491
      %2509 = vmatprep.subr.bf16.mxu0 0
      %2510 = vmatpush2.bf16.msra.mxu0 0
      %2511 = vmatprep.subr.bf16.mxu0 0
      %2512 = vmatpush2.bf16.msra.mxu0 0
      %2513 = vmatprep.subr.bf16.mxu0 0
      %2514 = vmatpush2.bf16.msra.mxu0 0
      %2515 = vmatprep.subr.bf16.mxu0 0
      %2516 = vmatpush2.bf16.msra.mxu0 0
      %2517 = vmatprep.subr.bf16.mxu0 0
      %2518 = vmatpush2.bf16.msra.mxu0 0
      %2519 = vmatprep.subr.bf16.mxu0 0
      %2520 = vmatpush2.bf16.msra.mxu0 0
      %2521 = vmatprep.subr.bf16.mxu0 0
      %2522 = vmatpush2.bf16.msra.mxu0 0
      %2523 = vmatprep.subr.bf16.mxu0 0
      %2524 = vmatpush2.bf16.msra.mxu0 0
      %2525 = vmatprep.mubr.bf16.mxu0 0
      %2526 = vmatmul.mubr.bf16.gmra.mxu0 %v683
      %v2527 = vpop.f32.mrf.mxu0
      %v2528 = vadd.f32 0.0, %v2527
      %v2529 = vpop.f32.mrf.mxu0
      %v2530 = vpop.f32.mrf.mxu0
      %v2531 = vadd.f32 0.0, %v2530
      %v2532 = vpop.f32.mrf.mxu0
      %2533 = vmatprep.mubr.bf16.mxu0 0
      %2534 = vmatmul.mubr.bf16.gmra.mxu0 %v686
      %v2535 = vpop.f32.mrf.mxu0
      %v2536 = vadd.f32 0.0, %v2535
      %v2537 = vpop.f32.mrf.mxu0
      %v2538 = vpop.f32.mrf.mxu0
      %v2539 = vadd.f32 0.0, %v2538
      %v2540 = vpop.f32.mrf.mxu0
      %2541 = vmatprep.mubr.bf16.mxu0 0
      %2542 = vmatmul.mubr.bf16.gmra.mxu0 %v689
      %v2543 = vpop.f32.mrf.mxu0
      %v2544 = vadd.f32 0.0, %v2543
      %v2545 = vpop.f32.mrf.mxu0
      %v2546 = vpop.f32.mrf.mxu0
      %v2547 = vadd.f32 0.0, %v2546
      %v2548 = vpop.f32.mrf.mxu0
      %2549 = vmatprep.mubr.bf16.mxu0 0
      %2550 = vmatmul.mubr.bf16.gmra.mxu0 %v692
      %v2551 = vpop.f32.mrf.mxu0
      %v2552 = vadd.f32 0.0, %v2551
      %v2553 = vpop.f32.mrf.mxu0
      %v2554 = vpop.f32.mrf.mxu0
      %v2555 = vadd.f32 0.0, %v2554
      %v2556 = vpop.f32.mrf.mxu0
      %2557 = vmatprep.mubr.bf16.mxu0 0
      %2558 = vmatmul.mubr.bf16.gmra.mxu0 %v695
      %v2559 = vpop.f32.mrf.mxu0
      %v2560 = vadd.f32 0.0, %v2559
      %v2561 = vpop.f32.mrf.mxu0
      %v2562 = vpop.f32.mrf.mxu0
      %v2563 = vadd.f32 0.0, %v2562
      %v2564 = vpop.f32.mrf.mxu0
      %2565 = vmatprep.mubr.bf16.mxu0 0
      %2566 = vmatmul.mubr.bf16.gmra.mxu0 %v698
      %v2567 = vpop.f32.mrf.mxu0
      %v2568 = vadd.f32 0.0, %v2567
      %v2569 = vpop.f32.mrf.mxu0
      %v2570 = vpop.f32.mrf.mxu0
      %v2571 = vadd.f32 0.0, %v2570
      %v2572 = vpop.f32.mrf.mxu0
      %2573 = vmatprep.mubr.bf16.mxu0 0
      %2574 = vmatmul.mubr.bf16.gmra.mxu0 %v701
      %v2575 = vpop.f32.mrf.mxu0
      %v2576 = vadd.f32 0.0, %v2575
      %v2577 = vpop.f32.mrf.mxu0
      %v2578 = vpop.f32.mrf.mxu0
      %v2579 = vadd.f32 0.0, %v2578
      %v2580 = vpop.f32.mrf.mxu0
      %2581 = vmatprep.mubr.bf16.mxu0 0
      %2582 = vmatmul.mubr.bf16.gmra.mxu0 %v704
      %v2583 = vpop.f32.mrf.mxu0
      %v2584 = vadd.f32 0.0, %v2583
      %v2585 = vpop.f32.mrf.mxu0
      %v2586 = vpop.f32.mrf.mxu0
      %v2587 = vadd.f32 0.0, %v2586
      %v2588 = vpop.f32.mrf.mxu0
      %2589 = vmatprep.mubr.bf16.mxu0 0
      %2590 = vmatmul.mubr.bf16.gmra.mxu0 %v707
      %v2591 = vpop.f32.mrf.mxu0
      %v2592 = vadd.f32 0.0, %v2591
      %v2593 = vpop.f32.mrf.mxu0
      %v2594 = vpop.f32.mrf.mxu0
      %v2595 = vadd.f32 0.0, %v2594
      %v2596 = vpop.f32.mrf.mxu0
      %2597 = vmatprep.mubr.bf16.mxu0 0
      %2598 = vmatmul.mubr.bf16.gmra.mxu0 %v710
      %v2599 = vpop.f32.mrf.mxu0
      %v2600 = vadd.f32 0.0, %v2599
      %v2601 = vpop.f32.mrf.mxu0
      %v2602 = vpop.f32.mrf.mxu0
      %v2603 = vadd.f32 0.0, %v2602
      %v2604 = vpop.f32.mrf.mxu0
      %2605 = vmatprep.mubr.bf16.mxu0 0
      %2606 = vmatmul.mubr.bf16.gmra.mxu0 %v713
      %v2607 = vpop.f32.mrf.mxu0
      %v2608 = vadd.f32 0.0, %v2607
      %v2609 = vpop.f32.mrf.mxu0
      %v2610 = vpop.f32.mrf.mxu0
      %v2611 = vadd.f32 0.0, %v2610
      %v2612 = vpop.f32.mrf.mxu0
      %2613 = vmatprep.mubr.bf16.mxu0 0
      %2614 = vmatmul.mubr.bf16.gmra.mxu0 %v716
      %v2615 = vpop.f32.mrf.mxu0
      %v2616 = vadd.f32 0.0, %v2615
      %v2617 = vpop.f32.mrf.mxu0
      %v2618 = vpop.f32.mrf.mxu0
      %v2619 = vadd.f32 0.0, %v2618
      %v2620 = vpop.f32.mrf.mxu0
      %2621 = vmatprep.mubr.bf16.mxu0 0
      %2622 = vmatmul.mubr.bf16.gmra.mxu0 %v719
      %v2623 = vpop.f32.mrf.mxu0
      %v2624 = vadd.f32 0.0, %v2623
      %v2625 = vpop.f32.mrf.mxu0
      %v2626 = vpop.f32.mrf.mxu0
      %v2627 = vadd.f32 0.0, %v2626
      %v2628 = vpop.f32.mrf.mxu0
      %2629 = vmatprep.mubr.bf16.mxu0 0
      %2630 = vmatmul.mubr.bf16.gmra.mxu0 %v722
      %v2631 = vpop.f32.mrf.mxu0
      %v2632 = vadd.f32 0.0, %v2631
      %v2633 = vpop.f32.mrf.mxu0
      %v2634 = vpop.f32.mrf.mxu0
      %v2635 = vadd.f32 0.0, %v2634
      %v2636 = vpop.f32.mrf.mxu0
      %2637 = vmatprep.mubr.bf16.mxu0 0
      %2638 = vmatmul.mubr.bf16.gmra.mxu0 %v1842
      %v2639 = vpop.f32.mrf.mxu0
      %v2640 = vadd.f32 0.0, %v2639
      %v2641 = vpop.f32.mrf.mxu0
      %v2642 = vpop.f32.mrf.mxu0
      %v2643 = vadd.f32 0.0, %v2642
      %v2644 = vpop.f32.mrf.mxu0
      %2645 = vmatprep.mubr.bf16.mxu0 0
      %2646 = vmatmul.mubr.bf16.gmra.mxu0 %v2488
      %v2647 = vpop.f32.mrf.mxu0
      %v2648 = vadd.f32 0.0, %v2647
      %v2649 = vpop.f32.mrf.mxu0
      %v2650 = vpop.f32.mrf.mxu0
      %v2651 = vadd.f32 0.0, %v2650
      %v2652 = vpop.f32.mrf.mxu0
      %2653 = vdwg.mxu0
      %v2654 = vadd.f32 %v2426, %v2528
      %v2655 = vadd.f32 %v2427, %v2531
      %v2656 = vadd.f32 %v2428, %v2536
      %v2657 = vadd.f32 %v2429, %v2539
      %v2658 = vadd.f32 %v2430, %v2544
      %v2659 = vadd.f32 %v2431, %v2547
      %v2660 = vadd.f32 %v2432, %v2552
      %v2661 = vadd.f32 %v2433, %v2555
      %v2662 = vadd.f32 %v2434, %v2560
      %v2663 = vadd.f32 %v2435, %v2563
      %v2664 = vadd.f32 %v2436, %v2568
      %v2665 = vadd.f32 %v2437, %v2571
      %v2666 = vadd.f32 %v2438, %v2576
      %v2667 = vadd.f32 %v2439, %v2579
      %v2668 = vadd.f32 %v2440, %v2584
      %v2669 = vadd.f32 %v2441, %v2587
      %v2670 = vadd.f32 %v2442, %v2592
      %v2671 = vadd.f32 %v2443, %v2595
      %v2672 = vadd.f32 %v2444, %v2600
      %v2673 = vadd.f32 %v2445, %v2603
      %v2674 = vadd.f32 %v2446, %v2608
      %v2675 = vadd.f32 %v2447, %v2611
      %v2676 = vadd.f32 %v2448, %v2616
      %v2677 = vadd.f32 %v2449, %v2619
      %v2678 = vadd.f32 %v2450, %v2624
      %v2679 = vadd.f32 %v2451, %v2627
      %v2680 = vadd.f32 %v2452, %v2632
      %v2681 = vadd.f32 %v2453, %v2635
      %v2682 = vadd.f32 %v2454, %v2640
      %v2683 = vadd.f32 %v2455, %v2643
      %v2684 = vadd.f32 %v2456, %v2648
      %v2685 = vadd.f32 %v2457, %v2651
      %v2687 = vrot.slane %v234, 5
      %v2688 = vrot.slane %v2687, 4
      %v2689 = vrot.slane %v235, 5
      %v2690 = vsel %vm1199, %v2688, %v2689
      %v2691 = vrot.slane %v2689, 4
      %v2692 = vrot.slane %v236, 5
      %v2693 = vsel %vm1199, %v2691, %v2692
      %s2694 = scalar_lea.vmem %s1, 16
      %v2695 = vld [vmem:[%s2694] sm:$0x3]
      %v2696 = vunpack.c.l.b16 %v2690
      %v2697 = vunpack.c.l.b16 %v2693
      %v2698 = vpack.c.b16 %v2697, %v2696
      %v2700 = vsel %vm675, %v2698, 0
      %v2703 = vsel %vm724, %v2695, 0
      %2705 = vmatprep.subr.bf16.mxu0 0
      %2706 = vmatpush1.bf16.msra.mxu0 0
      %2707 = vmatprep.subr.bf16.mxu0 0
      %2708 = vmatpush1.bf16.msra.mxu0 0
      %2709 = vmatprep.subr.bf16.mxu0 0
      %2710 = vmatpush1.bf16.msra.mxu0 0
      %2711 = vmatprep.subr.bf16.mxu0 0
      %2712 = vmatpush1.bf16.msra.mxu0 0
      %2713 = vmatprep.subr.bf16.mxu0 0
      %2714 = vmatpush1.bf16.msra.mxu0 0
      %2715 = vmatprep.subr.bf16.mxu0 0
      %2716 = vmatpush1.bf16.msra.mxu0 0
      %2717 = vmatprep.subr.bf16.mxu0 0
      %2718 = vmatpush1.bf16.msra.mxu0 0
      %2719 = vmatprep.subr.bf16.mxu0 0
      %2720 = vmatpush1.bf16.msra.mxu0 %v2703
      %2721 = vmatprep.subr.bf16.mxu0 0
      %2722 = vmatpush2.bf16.msra.mxu0 0
      %2723 = vmatprep.subr.bf16.mxu0 0
      %2724 = vmatpush2.bf16.msra.mxu0 0
      %2725 = vmatprep.subr.bf16.mxu0 0
      %2726 = vmatpush2.bf16.msra.mxu0 0
      %2727 = vmatprep.subr.bf16.mxu0 0
      %2728 = vmatpush2.bf16.msra.mxu0 0
      %2729 = vmatprep.subr.bf16.mxu0 0
      %2730 = vmatpush2.bf16.msra.mxu0 0
      %2731 = vmatprep.subr.bf16.mxu0 0
      %2732 = vmatpush2.bf16.msra.mxu0 0
      %2733 = vmatprep.subr.bf16.mxu0 0
      %2734 = vmatpush2.bf16.msra.mxu0 0
      %2735 = vmatprep.subr.bf16.mxu0 0
      %2736 = vmatpush2.bf16.msra.mxu0 0
      %2737 = vmatprep.mubr.bf16.mxu0 0
      %2738 = vmatmul.mubr.bf16.gmra.mxu0 %v1369
      %v2739 = vpop.f32.mrf.mxu0
      %v2740 = vadd.f32 0.0, %v2739
      %v2741 = vpop.f32.mrf.mxu0
      %v2742 = vpop.f32.mrf.mxu0
      %v2743 = vadd.f32 0.0, %v2742
      %v2744 = vpop.f32.mrf.mxu0
      %2745 = vmatprep.mubr.bf16.mxu0 0
      %2746 = vmatmul.mubr.bf16.gmra.mxu0 %v1372
      %v2747 = vpop.f32.mrf.mxu0
      %v2748 = vadd.f32 0.0, %v2747
      %v2749 = vpop.f32.mrf.mxu0
      %v2750 = vpop.f32.mrf.mxu0
      %v2751 = vadd.f32 0.0, %v2750
      %v2752 = vpop.f32.mrf.mxu0
      %2753 = vmatprep.mubr.bf16.mxu0 0
      %2754 = vmatmul.mubr.bf16.gmra.mxu0 %v1375
      %v2755 = vpop.f32.mrf.mxu0
      %v2756 = vadd.f32 0.0, %v2755
      %v2757 = vpop.f32.mrf.mxu0
      %v2758 = vpop.f32.mrf.mxu0
      %v2759 = vadd.f32 0.0, %v2758
      %v2760 = vpop.f32.mrf.mxu0
      %2761 = vmatprep.mubr.bf16.mxu0 0
      %2762 = vmatmul.mubr.bf16.gmra.mxu0 %v1378
      %v2763 = vpop.f32.mrf.mxu0
      %v2764 = vadd.f32 0.0, %v2763
      %v2765 = vpop.f32.mrf.mxu0
      %v2766 = vpop.f32.mrf.mxu0
      %v2767 = vadd.f32 0.0, %v2766
      %v2768 = vpop.f32.mrf.mxu0
      %2769 = vmatprep.mubr.bf16.mxu0 0
      %2770 = vmatmul.mubr.bf16.gmra.mxu0 %v1381
      %v2771 = vpop.f32.mrf.mxu0
      %v2772 = vadd.f32 0.0, %v2771
      %v2773 = vpop.f32.mrf.mxu0
      %v2774 = vpop.f32.mrf.mxu0
      %v2775 = vadd.f32 0.0, %v2774
      %v2776 = vpop.f32.mrf.mxu0
      %2777 = vmatprep.mubr.bf16.mxu0 0
      %2778 = vmatmul.mubr.bf16.gmra.mxu0 %v1384
      %v2779 = vpop.f32.mrf.mxu0
      %v2780 = vadd.f32 0.0, %v2779
      %v2781 = vpop.f32.mrf.mxu0
      %v2782 = vpop.f32.mrf.mxu0
      %v2783 = vadd.f32 0.0, %v2782
      %v2784 = vpop.f32.mrf.mxu0
      %2785 = vmatprep.mubr.bf16.mxu0 0
      %2786 = vmatmul.mubr.bf16.gmra.mxu0 %v1387
      %v2787 = vpop.f32.mrf.mxu0
      %v2788 = vadd.f32 0.0, %v2787
      %v2789 = vpop.f32.mrf.mxu0
      %v2790 = vpop.f32.mrf.mxu0
      %v2791 = vadd.f32 0.0, %v2790
      %v2792 = vpop.f32.mrf.mxu0
      %2793 = vmatprep.mubr.bf16.mxu0 0
      %2794 = vmatmul.mubr.bf16.gmra.mxu0 %v1390
      %v2795 = vpop.f32.mrf.mxu0
      %v2796 = vadd.f32 0.0, %v2795
      %v2797 = vpop.f32.mrf.mxu0
      %v2798 = vpop.f32.mrf.mxu0
      %v2799 = vadd.f32 0.0, %v2798
      %v2800 = vpop.f32.mrf.mxu0
      %2801 = vmatprep.mubr.bf16.mxu0 0
      %2802 = vmatmul.mubr.bf16.gmra.mxu0 %v1393
      %v2803 = vpop.f32.mrf.mxu0
      %v2804 = vadd.f32 0.0, %v2803
      %v2805 = vpop.f32.mrf.mxu0
      %v2806 = vpop.f32.mrf.mxu0
      %v2807 = vadd.f32 0.0, %v2806
      %v2808 = vpop.f32.mrf.mxu0
      %2809 = vmatprep.mubr.bf16.mxu0 0
      %2810 = vmatmul.mubr.bf16.gmra.mxu0 %v1396
      %v2811 = vpop.f32.mrf.mxu0
      %v2812 = vadd.f32 0.0, %v2811
      %v2813 = vpop.f32.mrf.mxu0
      %v2814 = vpop.f32.mrf.mxu0
      %v2815 = vadd.f32 0.0, %v2814
      %v2816 = vpop.f32.mrf.mxu0
      %2817 = vmatprep.mubr.bf16.mxu0 0
      %2818 = vmatmul.mubr.bf16.gmra.mxu0 %v1399
      %v2819 = vpop.f32.mrf.mxu0
      %v2820 = vadd.f32 0.0, %v2819
      %v2821 = vpop.f32.mrf.mxu0
      %v2822 = vpop.f32.mrf.mxu0
      %v2823 = vadd.f32 0.0, %v2822
      %v2824 = vpop.f32.mrf.mxu0
      %2825 = vmatprep.mubr.bf16.mxu0 0
      %2826 = vmatmul.mubr.bf16.gmra.mxu0 %v1402
      %v2827 = vpop.f32.mrf.mxu0
      %v2828 = vadd.f32 0.0, %v2827
      %v2829 = vpop.f32.mrf.mxu0
      %v2830 = vpop.f32.mrf.mxu0
      %v2831 = vadd.f32 0.0, %v2830
      %v2832 = vpop.f32.mrf.mxu0
      %2833 = vmatprep.mubr.bf16.mxu0 0
      %2834 = vmatmul.mubr.bf16.gmra.mxu0 %v1405
      %v2835 = vpop.f32.mrf.mxu0
      %v2836 = vadd.f32 0.0, %v2835
      %v2837 = vpop.f32.mrf.mxu0
      %v2838 = vpop.f32.mrf.mxu0
      %v2839 = vadd.f32 0.0, %v2838
      %v2840 = vpop.f32.mrf.mxu0
      %2841 = vmatprep.mubr.bf16.mxu0 0
      %2842 = vmatmul.mubr.bf16.gmra.mxu0 %v1408
      %v2843 = vpop.f32.mrf.mxu0
      %v2844 = vadd.f32 0.0, %v2843
      %v2845 = vpop.f32.mrf.mxu0
      %v2846 = vpop.f32.mrf.mxu0
      %v2847 = vadd.f32 0.0, %v2846
      %v2848 = vpop.f32.mrf.mxu0
      %2849 = vmatprep.mubr.bf16.mxu0 0
      %2850 = vmatmul.mubr.bf16.gmra.mxu0 %v2054
      %v2851 = vpop.f32.mrf.mxu0
      %v2852 = vadd.f32 0.0, %v2851
      %v2853 = vpop.f32.mrf.mxu0
      %v2854 = vpop.f32.mrf.mxu0
      %v2855 = vadd.f32 0.0, %v2854
      %v2856 = vpop.f32.mrf.mxu0
      %2857 = vmatprep.mubr.bf16.mxu0 0
      %2858 = vmatmul.mubr.bf16.gmra.mxu0 %v2700
      %v2859 = vpop.f32.mrf.mxu0
      %v2860 = vadd.f32 0.0, %v2859
      %v2861 = vpop.f32.mrf.mxu0
      %v2862 = vpop.f32.mrf.mxu0
      %v2863 = vadd.f32 0.0, %v2862
      %v2864 = vpop.f32.mrf.mxu0
      %2865 = vdwg.mxu0
      %v2866 = vadd.f32 %v2654, %v2740
      %v2867 = vadd.f32 %v2655, %v2743
      %v2868 = vadd.f32 %v2656, %v2748
      %v2869 = vadd.f32 %v2657, %v2751
      %v2870 = vadd.f32 %v2658, %v2756
      %v2871 = vadd.f32 %v2659, %v2759
      %v2872 = vadd.f32 %v2660, %v2764
      %v2873 = vadd.f32 %v2661, %v2767
      %v2874 = vadd.f32 %v2662, %v2772
      %v2875 = vadd.f32 %v2663, %v2775
      %v2876 = vadd.f32 %v2664, %v2780
      %v2877 = vadd.f32 %v2665, %v2783
      %v2878 = vadd.f32 %v2666, %v2788
      %v2879 = vadd.f32 %v2667, %v2791
      %v2880 = vadd.f32 %v2668, %v2796
      %v2881 = vadd.f32 %v2669, %v2799
      %v2882 = vadd.f32 %v2670, %v2804
      %v2883 = vadd.f32 %v2671, %v2807
      %v2884 = vadd.f32 %v2672, %v2812
      %v2885 = vadd.f32 %v2673, %v2815
      %v2886 = vadd.f32 %v2674, %v2820
      %v2887 = vadd.f32 %v2675, %v2823
      %v2888 = vadd.f32 %v2676, %v2828
      %v2889 = vadd.f32 %v2677, %v2831
      %v2890 = vadd.f32 %v2678, %v2836
      %v2891 = vadd.f32 %v2679, %v2839
      %v2892 = vadd.f32 %v2680, %v2844
      %v2893 = vadd.f32 %v2681, %v2847
      %v2894 = vadd.f32 %v2682, %v2852
      %v2895 = vadd.f32 %v2683, %v2855
      %v2896 = vadd.f32 %v2684, %v2860
      %v2897 = vadd.f32 %v2685, %v2863
      %v2898 = vpack.c.bf16 %v2867, %v2866
      %v2899 = vpack.c.bf16 %v2869, %v2868
      %v2900 = vpack.c.bf16 %v2871, %v2870
      %v2901 = vpack.c.bf16 %v2873, %v2872
      %v2902 = vpack.c.bf16 %v2875, %v2874
      %v2903 = vpack.c.bf16 %v2877, %v2876
      %v2904 = vpack.c.bf16 %v2879, %v2878
      %v2905 = vpack.c.bf16 %v2881, %v2880
      %v2906 = vpack.c.bf16 %v2883, %v2882
      %v2907 = vpack.c.bf16 %v2885, %v2884
      %v2908 = vpack.c.bf16 %v2887, %v2886
      %v2909 = vpack.c.bf16 %v2889, %v2888
      %v2910 = vpack.c.bf16 %v2891, %v2890
      %v2911 = vpack.c.bf16 %v2893, %v2892
      %v2912 = vpack.c.bf16 %v2895, %v2894
      %v2913 = vpack.c.bf16 %v2897, %v2896
      %v2930 = vunpack.c.l.b16 %v2898
      %v2931 = vunpack.c.h.b16 %v2898
      %v2932 = vunpack.c.l.b16 %v2899
      %v2933 = vunpack.c.h.b16 %v2899
      %v2934 = vunpack.c.l.b16 %v2900
      %v2935 = vunpack.c.h.b16 %v2900
      %v2936 = vunpack.c.l.b16 %v2901
      %v2937 = vunpack.c.h.b16 %v2901
      %v2938 = vunpack.c.l.b16 %v2902
      %v2939 = vunpack.c.h.b16 %v2902
      %v2940 = vunpack.c.l.b16 %v2903
      %v2941 = vunpack.c.h.b16 %v2903
      %v2942 = vunpack.c.l.b16 %v2904
      %v2943 = vunpack.c.h.b16 %v2904
      %v2944 = vunpack.c.l.b16 %v2905
      %v2945 = vunpack.c.h.b16 %v2905
      %v2946 = vunpack.c.l.b16 %v2906
      %v2947 = vunpack.c.h.b16 %v2906
      %v2948 = vunpack.c.l.b16 %v2907
      %v2949 = vunpack.c.h.b16 %v2907
      %v2950 = vunpack.c.l.b16 %v2908
      %v2951 = vunpack.c.h.b16 %v2908
      %v2952 = vunpack.c.l.b16 %v2909
      %v2953 = vunpack.c.h.b16 %v2909
      %v2954 = vunpack.c.l.b16 %v2910
      %v2955 = vunpack.c.h.b16 %v2910
      %v2956 = vunpack.c.l.b16 %v2911
      %v2957 = vunpack.c.h.b16 %v2911
      %v2958 = vunpack.c.l.b16 %v2912
      %v2959 = vunpack.c.h.b16 %v2912
      %v2960 = vunpack.c.l.b16 %v2913
      %v2961 = vunpack.c.h.b16 %v2913
      %v2962 = vpack.c.b16 %v2930, %v2930
      %v2963 = vpack.c.b16 %v2931, %v2931
      %v2964 = vpack.c.b16 %v2932, %v2932
      %v2965 = vpack.c.b16 %v2933, %v2933
      %v2966 = vpack.c.b16 %v2934, %v2934
      %v2967 = vpack.c.b16 %v2935, %v2935
      %v2968 = vpack.c.b16 %v2936, %v2936
      %v2969 = vpack.c.b16 %v2937, %v2937
      %v2970 = vpack.c.b16 %v2938, %v2938
      %v2971 = vpack.c.b16 %v2939, %v2939
      %v2972 = vpack.c.b16 %v2940, %v2940
      %v2973 = vpack.c.b16 %v2941, %v2941
      %v2974 = vpack.c.b16 %v2942, %v2942
      %v2975 = vpack.c.b16 %v2943, %v2943
      %v2976 = vpack.c.b16 %v2944, %v2944
      %v2977 = vpack.c.b16 %v2945, %v2945
      %v2978 = vpack.c.b16 %v2946, %v2946
      %v2979 = vpack.c.b16 %v2947, %v2947
      %v2980 = vpack.c.b16 %v2948, %v2948
      %v2981 = vpack.c.b16 %v2949, %v2949
      %v2982 = vpack.c.b16 %v2950, %v2950
      %v2983 = vpack.c.b16 %v2951, %v2951
      %v2984 = vpack.c.b16 %v2952, %v2952
      %v2985 = vpack.c.b16 %v2953, %v2953
      %v2986 = vpack.c.b16 %v2954, %v2954
      %v2987 = vpack.c.b16 %v2955, %v2955
      %v2988 = vpack.c.b16 %v2956, %v2956
      %v2989 = vpack.c.b16 %v2957, %v2957
      %v2990 = vpack.c.b16 %v2958, %v2958
      %v2991 = vpack.c.b16 %v2959, %v2959
      %v2992 = vpack.c.b16 %v2960, %v2960
      %v2993 = vpack.c.b16 %v2961, %v2961
      %3026 = vst [vmem:[%s177] sm:$0xf] %v2962
      %3027 = vst [vmem:[%s177 + $0x4] sm:$0xf] %v2963
      %3028 = vst [vmem:[%s177 + $0x8] sm:$0xf] %v2964
      %3029 = vst [vmem:[%s177 + $0xc] sm:$0xf] %v2965
      %3030 = vst [vmem:[%s177 + $0x10] sm:$0xf] %v2966
      %3031 = vst [vmem:[%s177 + $0x14] sm:$0xf] %v2967
      %3032 = vst [vmem:[%s177 + $0x18] sm:$0xf] %v2968
      %3033 = vst [vmem:[%s177 + $0x1c] sm:$0xf] %v2969
      %3034 = vst [vmem:[%s177 + $0x20] sm:$0xf] %v2970
      %3035 = vst [vmem:[%s177 + $0x24] sm:$0xf] %v2971
      %3036 = vst [vmem:[%s177 + $0x28] sm:$0xf] %v2972
      %3037 = vst [vmem:[%s177 + $0x2c] sm:$0xf] %v2973
      %3038 = vst [vmem:[%s177 + $0x30] sm:$0xf] %v2974
      %3039 = vst [vmem:[%s177 + $0x34] sm:$0xf] %v2975
      %3040 = vst [vmem:[%s177 + $0x38] sm:$0xf] %v2976
      %3041 = vst [vmem:[%s177 + $0x3c] sm:$0xf] %v2977
      %3042 = vst [vmem:[%s177 + $0x40] sm:$0xf] %v2978
      %3043 = vst [vmem:[%s177 + $0x44] sm:$0xf] %v2979
      %3044 = vst [vmem:[%s177 + $0x48] sm:$0xf] %v2980
      %3045 = vst [vmem:[%s177 + $0x4c] sm:$0xf] %v2981
      %3046 = vst [vmem:[%s177 + $0x50] sm:$0xf] %v2982
      %3047 = vst [vmem:[%s177 + $0x54] sm:$0xf] %v2983
      %3048 = vst [vmem:[%s177 + $0x58] sm:$0xf] %v2984
      %3049 = vst [vmem:[%s177 + $0x5c] sm:$0xf] %v2985
      %3050 = vst [vmem:[%s177 + $0x60] sm:$0xf] %v2986
      %3051 = vst [vmem:[%s177 + $0x64] sm:$0xf] %v2987
      %3052 = vst [vmem:[%s177 + $0x68] sm:$0xf] %v2988
      %3053 = vst [vmem:[%s177 + $0x6c] sm:$0xf] %v2989
      %3054 = vst [vmem:[%s177 + $0x70] sm:$0xf] %v2990
      %3055 = vst [vmem:[%s177 + $0x74] sm:$0xf] %v2991
      %3056 = vst [vmem:[%s177 + $0x78] sm:$0xf] %v2992
      %3057 = vst [vmem:[%s177 + $0x7c] sm:$0xf] %v2993
      %v3058 = vadd.f32 %v2866, %v2867
      %v3059 = vadd.f32 %v3058, %v2868
      %v3060 = vadd.f32 %v3059, %v2869
      %v3061 = vadd.f32 %v3060, %v2870
      %v3062 = vadd.f32 %v3061, %v2871
      %v3063 = vadd.f32 %v3062, %v2872
      %v3064 = vadd.f32 %v3063, %v2873
      %v3065 = vadd.f32 %v3064, %v2874
      %v3066 = vadd.f32 %v3065, %v2875
      %v3067 = vadd.f32 %v3066, %v2876
      %v3068 = vadd.f32 %v3067, %v2877
      %v3069 = vadd.f32 %v3068, %v2878
      %v3070 = vadd.f32 %v3069, %v2879
      %v3071 = vadd.f32 %v3070, %v2880
      %v3072 = vadd.f32 %v3071, %v2881
      %v3073 = vadd.f32 %v3072, %v2882
      %v3074 = vadd.f32 %v3073, %v2883
      %v3075 = vadd.f32 %v3074, %v2884
      %v3076 = vadd.f32 %v3075, %v2885
      %v3077 = vadd.f32 %v3076, %v2886
      %v3078 = vadd.f32 %v3077, %v2887
      %v3079 = vadd.f32 %v3078, %v2888
      %v3080 = vadd.f32 %v3079, %v2889
      %v3081 = vadd.f32 %v3080, %v2890
      %v3082 = vadd.f32 %v3081, %v2891
      %v3083 = vadd.f32 %v3082, %v2892
      %v3084 = vadd.f32 %v3083, %v2893
      %v3085 = vadd.f32 %v3084, %v2894
      %v3086 = vadd.f32 %v3085, %v2895
      %v3087 = vadd.f32 %v3086, %v2896
      %v3088 = vadd.f32 %v3087, %v2897
      %v3089 = vrot.slane %v3088, 4
      %v3090 = vadd.f32 %v3088, %v3089
      %v3091 = vrot.slane %v3090, 2
      %v3092 = vadd.f32 %v3090, %v3091
      %v3093 = vrot.slane %v3092, 1
      %v3094 = vadd.f32 %v3092, %v3093
      %v3095 = vmul.f32 %v3094, 0.00390625
      %v3096 = vsub.f32 %v2866, %v3095
      %v3097 = vsub.f32 %v2867, %v3095
      %v3098 = vsub.f32 %v2868, %v3095
      %v3099 = vsub.f32 %v2869, %v3095
      %v3100 = vsub.f32 %v2870, %v3095
      %v3101 = vsub.f32 %v2871, %v3095
      %v3102 = vsub.f32 %v2872, %v3095
      %v3103 = vsub.f32 %v2873, %v3095
      %v3104 = vsub.f32 %v2874, %v3095
      %v3105 = vsub.f32 %v2875, %v3095
      %v3106 = vsub.f32 %v2876, %v3095
      %v3107 = vsub.f32 %v2877, %v3095
      %v3108 = vsub.f32 %v2878, %v3095
      %v3109 = vsub.f32 %v2879, %v3095
      %v3110 = vsub.f32 %v2880, %v3095
      %v3111 = vsub.f32 %v2881, %v3095
      %v3112 = vsub.f32 %v2882, %v3095
      %v3113 = vsub.f32 %v2883, %v3095
      %v3114 = vsub.f32 %v2884, %v3095
      %v3115 = vsub.f32 %v2885, %v3095
      %v3116 = vsub.f32 %v2886, %v3095
      %v3117 = vsub.f32 %v2887, %v3095
      %v3118 = vsub.f32 %v2888, %v3095
      %v3119 = vsub.f32 %v2889, %v3095
      %v3120 = vsub.f32 %v2890, %v3095
      %v3121 = vsub.f32 %v2891, %v3095
      %v3122 = vsub.f32 %v2892, %v3095
      %v3123 = vsub.f32 %v2893, %v3095
      %v3124 = vsub.f32 %v2894, %v3095
      %v3125 = vsub.f32 %v2895, %v3095
      %v3126 = vsub.f32 %v2896, %v3095
      %v3127 = vsub.f32 %v2897, %v3095
      %v3128 = vmul.f32 %v3096, %v3096
      %v3129 = vmul.f32 %v3097, %v3097
      %v3130 = vmul.f32 %v3098, %v3098
      %v3131 = vmul.f32 %v3099, %v3099
      %v3132 = vmul.f32 %v3100, %v3100
      %v3133 = vmul.f32 %v3101, %v3101
      %v3134 = vmul.f32 %v3102, %v3102
      %v3135 = vmul.f32 %v3103, %v3103
      %v3136 = vmul.f32 %v3104, %v3104
      %v3137 = vmul.f32 %v3105, %v3105
      %v3138 = vmul.f32 %v3106, %v3106
      %v3139 = vmul.f32 %v3107, %v3107
      %v3140 = vmul.f32 %v3108, %v3108
      %v3141 = vmul.f32 %v3109, %v3109
      %v3142 = vmul.f32 %v3110, %v3110
      %v3143 = vmul.f32 %v3111, %v3111
      %v3144 = vmul.f32 %v3112, %v3112
      %v3145 = vmul.f32 %v3113, %v3113
      %v3146 = vmul.f32 %v3114, %v3114
      %v3147 = vmul.f32 %v3115, %v3115
      %v3148 = vmul.f32 %v3116, %v3116
      %v3149 = vmul.f32 %v3117, %v3117
      %v3150 = vmul.f32 %v3118, %v3118
      %v3151 = vmul.f32 %v3119, %v3119
      %v3152 = vmul.f32 %v3120, %v3120
      %v3153 = vmul.f32 %v3121, %v3121
      %v3154 = vmul.f32 %v3122, %v3122
      %v3155 = vmul.f32 %v3123, %v3123
      %v3156 = vmul.f32 %v3124, %v3124
      %v3157 = vmul.f32 %v3125, %v3125
      %v3158 = vmul.f32 %v3126, %v3126
      %v3159 = vmul.f32 %v3127, %v3127
      %v3160 = vadd.f32 %v3128, %v3129
      %v3161 = vadd.f32 %v3160, %v3130
      %v3162 = vadd.f32 %v3161, %v3131
      %v3163 = vadd.f32 %v3162, %v3132
      %v3164 = vadd.f32 %v3163, %v3133
      %v3165 = vadd.f32 %v3164, %v3134
      %v3166 = vadd.f32 %v3165, %v3135
      %v3167 = vadd.f32 %v3166, %v3136
      %v3168 = vadd.f32 %v3167, %v3137
      %v3169 = vadd.f32 %v3168, %v3138
      %v3170 = vadd.f32 %v3169, %v3139
      %v3171 = vadd.f32 %v3170, %v3140
      %v3172 = vadd.f32 %v3171, %v3141
      %v3173 = vadd.f32 %v3172, %v3142
      %v3174 = vadd.f32 %v3173, %v3143
      %v3175 = vadd.f32 %v3174, %v3144
      %v3176 = vadd.f32 %v3175, %v3145
      %v3177 = vadd.f32 %v3176, %v3146
      %v3178 = vadd.f32 %v3177, %v3147
      %v3179 = vadd.f32 %v3178, %v3148
      %v3180 = vadd.f32 %v3179, %v3149
      %v3181 = vadd.f32 %v3180, %v3150
      %v3182 = vadd.f32 %v3181, %v3151
      %v3183 = vadd.f32 %v3182, %v3152
      %v3184 = vadd.f32 %v3183, %v3153
      %v3185 = vadd.f32 %v3184, %v3154
      %v3186 = vadd.f32 %v3185, %v3155
      %v3187 = vadd.f32 %v3186, %v3156
      %v3188 = vadd.f32 %v3187, %v3157
      %v3189 = vadd.f32 %v3188, %v3158
      %v3190 = vadd.f32 %v3189, %v3159
      %v3191 = vrot.slane %v3190, 4
      %v3192 = vadd.f32 %v3190, %v3191
      %v3193 = vrot.slane %v3192, 2
      %v3194 = vadd.f32 %v3192, %v3193
      %v3195 = vrot.slane %v3194, 1
      %v3196 = vadd.f32 %v3194, %v3195
      %3197 = vst [vmem:[%s181] sm:$0x1] %v3095
      %3198 = vst [vmem:[%s181 + $0x1] sm:$0x1] %v3196
      %p3199 = scmp.lt.s32.totalorder %s15, 1
      %s3200 = scalar_select %p3199, %s15, 1
      %s3201 = smul.addr %s3200, 32
      %s3202 = smul.addr %s3201, 4
      %s3203 = scalar_lea.vmem %s2, %s3202
      %p3204 = scmp.lt.s32.totalorder %s15, 1
      %s3205 = scalar_select %p3204, %s15, 1
      %s3206 = smul.addr %s3205, 8
      %s3207 = scalar_lea.vmem %s3, %s3206
      // Predicated region
      $region29: #{conv_bn_relu.2} parent=27 // pred_check
        %p3208 = pneg %p80
      $region30: #{conv_bn_relu.2} parent=27 // pred_check_branch
        %3210 = sbr.rel (%p3208) target = $region32
      $region31: #{conv_bn_relu.2} parent=27 // pred_region
        _
      $region32: #{conv_bn_relu.2} parent=27 // pred_fallthru
        _
      // Predicated region
      $region33: #{conv_bn_relu.2} parent=27 // pred_check
        %p3211 = pneg %p106
      $region34: #{conv_bn_relu.2} parent=27 // pred_check_branch
        %3213 = sbr.rel (%p3211) target = $region36
      $region35: #{conv_bn_relu.2} parent=27 // pred_region
        _
      $region36: #{conv_bn_relu.2} parent=27 // pred_fallthru
        _
    $region28: #{conv_bn_relu.2} parent=5 // pred_fallthru
      _
    %p3214 = scmp.le.s32.totalorder 2, %s10
    // Predicated region
    $region37: #{conv_bn_relu.2} parent=5 // pred_check
      %p3215 = pneg %p3214
    $region38: #{conv_bn_relu.2} parent=5 // pred_check_branch
      %3217 = sbr.rel (%p3215) target = $region40
    $region39: #{conv_bn_relu.2} parent=5 // pred_region
      %s3218 = ssub.s32 %s10, 2
      // Predicated region
      $region41: #{conv_bn_relu.2} parent=39 // pred_check
        %p3219 = pneg %p86
      $region42: #{conv_bn_relu.2} parent=39 // pred_check_branch
        %3221 = sbr.rel (%p3219) target = $region44
      $region43: #{conv_bn_relu.2} parent=39 // pred_region
        %p3222 = scmp.lt.s32.totalorder %s16, 1
        %s3223 = scalar_select %p3222, %s16, 1
        %s3224 = smul.addr %s3223, 32
        %s3225 = smul.addr %s3224, 4
        %s3226 = scalar_lea.vmem %s2, %s3225
      $region44: #{conv_bn_relu.2} parent=39 // pred_fallthru
        _
      // Predicated region
      $region45: #{conv_bn_relu.2} parent=39 // pred_check
        %p3227 = pneg %p112
      $region46: #{conv_bn_relu.2} parent=39 // pred_check_branch
        %3229 = sbr.rel (%p3227) target = $region48
      $region47: #{conv_bn_relu.2} parent=39 // pred_region
        %p3230 = scmp.lt.s32.totalorder %s16, 1
        %s3231 = scalar_select %p3230, %s16, 1
        %s3232 = smul.addr %s3231, 8
        %s3233 = scalar_lea.vmem %s3, %s3232
      $region48: #{conv_bn_relu.2} parent=39 // pred_fallthru
        _
    $region40: #{conv_bn_relu.2} parent=5 // pred_fallthru
      _
  $region6: #{conv_bn_relu.2} parent=0 // loop_footer
    %s14 = sadd.s32 1, %s10
  $region7: #{conv_bn_relu.2} parent=0 // loop_footer_branch
    %9 = sbr.rel target = $region3
  $region8: #{conv_bn_relu.2} parent=0 // loop_exit
    _

</llo_original>
